<compile_context>
chip_gen: v7x
topology: tpu7x:2x2x1
jax: 0.10.0
libtpu: 0.0.40
codegen_flags: <defaults>
</compile_context>

<pallas_src>
import functools

import numpy as np
import jax
import jax.numpy as jnp
from jax.experimental import pallas as pl
from jax.experimental.pallas import tpu as pltpu


_VMEM_LIMIT = 32 * 1024 * 1024  # for the small subsampling matmuls


def _round_up(x, m):
    return ((x + m - 1) // m) * m


# --------------------------- tiled linear kernel ----------------------------


def _matmul_kernel(x_ref, w_ref, b_ref, o_ref, *, act):
    acc = jnp.dot(x_ref[...], w_ref[...], preferred_element_type=jnp.float32)
    acc = acc + b_ref[...]
    if act == "relu":
        acc = jnp.maximum(acc, 0.0)
    o_ref[...] = acc.astype(o_ref.dtype)


def pallas_linear(x, w, b, act="none", tm=512):
    """x: (..., K) @ w: (K, N) + b: (N,) — grid over M tiles."""
    lead = x.shape[:-1]
    K = x.shape[-1]
    N = w.shape[1]
    M = int(np.prod(lead)) if lead else 1
    x2 = x.reshape(M, K)

    tm = min(tm, _round_up(M, 8))
    Mp = _round_up(M, tm)
    if Mp != M:
        x2 = jnp.pad(x2, ((0, Mp - M), (0, 0)))

    out = pl.pallas_call(
        functools.partial(_matmul_kernel, act=act),
        out_shape=jax.ShapeDtypeStruct((Mp, N), x.dtype),
        grid=(Mp // tm,),
        in_specs=[pl.BlockSpec((tm, K), lambda i: (i, 0)),
                  pl.BlockSpec((K, N), lambda i: (0, 0)),
                  pl.BlockSpec((1, N), lambda i: (0, 0))],
        out_specs=pl.BlockSpec((tm, N), lambda i: (i, 0)),
        compiler_params=pltpu.CompilerParams(
            dimension_semantics=("parallel",),
            vmem_limit_bytes=_VMEM_LIMIT),
    )(x2, w, b.reshape(1, N))
    if Mp != M:
        out = out[:M]
    return out.reshape(lead + (N,))


# ----------------------- fully fused encoder kernel -------------------------


def _encoder_kernel(
        x_ref, mask_ref, vmask_ref, jblk_ref, smask_ref,
        f1_ln_ref, f1_w1_ref, f1_b1_ref, f1_w2_ref, f1_b2_ref,
        at_ln_ref, at_wqkv_ref, at_bqkv_ref, at_wo_ref, at_bo_ref,
        cv_ln_ref, cv_pw1w_ref, cv_pw1b_ref, cv_dww_ref, cv_bn_ref,
        cv_pw2w_ref, cv_pw2b_ref,
        f2_ln_ref, f2_w1_ref, f2_b1_ref, f2_w2_ref, f2_b2_ref,
        fin_ln_ref,
        o_ref, xs_ref,
        *, batch, seq, num_heads, kconv, eps, scale):
    """One conformer layer per grid step; x carried in VMEM scratch xs_ref."""
    l = pl.program_id(0)
    BL, D = xs_ref.shape
    L = seq
    H = num_heads
    K = kconv
    pad = (K - 1) // 2

    @pl.when(l == 0)
    def _():
        xs_ref[...] = x_ref[...].astype(jnp.float32)

    x = xs_ref[...]                                           # (B*L, D) f32

    def layer_norm(v, ln):                                    # ln: (2, D)
        g, b = ln[0:1, :], ln[1:2, :]
        mu = jnp.mean(v, axis=-1, keepdims=True)
        var = jnp.mean(jnp.square(v - mu), axis=-1, keepdims=True)
        return (v - mu) * jax.lax.rsqrt(var + eps) * g + b

    def half_ffn(v, ln, w1, b1, w2, b2):
        h = layer_norm(v, ln)
        h = jnp.dot(h, w1, preferred_element_type=jnp.float32) + b1
        h = h * jax.nn.sigmoid(h)                             # swish
        h = jnp.dot(h, w2, preferred_element_type=jnp.float32) + b2
        return v + 0.5 * h                                    # half-step residual

    # ------------------------ feed-forward module 1 -------------------------
    x = half_ffn(x, f1_ln_ref[0], f1_w1_ref[0], f1_b1_ref[0],
                 f1_w2_ref[0], f1_b2_ref[0])

    # --------------------- multi-head self-attention ------------------------
    h = layer_norm(x, at_ln_ref[0])
    qkv = jnp.dot(h, at_wqkv_ref[0],
                  preferred_element_type=jnp.float32) + at_bqkv_ref[0]
    q, k, v = qkv[:, 0:D], qkv[:, D:2 * D], qkv[:, 2 * D:3 * D]
    vmask = vmask_ref[...]          # (H*L, D)   head block-diagonal selector
    jblk = jblk_ref[...]            # (H*L, H*L) block-of-ones per head
    ctx_rows = []
    for b in range(batch):          # static unroll over the (small) batch
        rows = slice(b * L, (b + 1) * L)
        qb, kb, vb = q[rows, :], k[rows, :], v[rows, :]
        # Head-batched attention via a block-diagonal lane layout: a single
        # MXU contraction produces all heads' scores (no per-head width-8
        # lane slices, no per-head MXU push/pop).
        k_bd = jnp.concatenate([kb] * H, axis=0) * vmask          # (H*L, D)
        v_bd = jnp.concatenate([vb] * H, axis=0) * vmask          # (H*L, D)
        s = jax.lax.dot_general(qb, k_bd, (((1,), (1,)), ((), ())),
                                preferred_element_type=jnp.float32) * scale
        s = jnp.where(mask_ref[b] > 0.0, s, -1e30)   # key-padding mask (1,H*L)
        s = s - jnp.max(s, axis=-1, keepdims=True)   # row constant: softmax-safe
        p = jnp.exp(s)
        denom = jnp.dot(p, jblk, preferred_element_type=jnp.float32)
        p = p / denom                                # exact per-head softmax
        ctx_rows.append(jnp.dot(p, v_bd, preferred_element_type=jnp.float32))
    ctx = jnp.concatenate(ctx_rows, axis=0)                        # (B*L, D)
    x = x + jnp.dot(ctx, at_wo_ref[0],
                    preferred_element_type=jnp.float32) + at_bo_ref[0]

    # -------------------------- convolution module --------------------------
    h = layer_norm(x, cv_ln_ref[0])
    h = jnp.dot(h, cv_pw1w_ref[0],
                preferred_element_type=jnp.float32) + cv_pw1b_ref[0]   # (BL,2D)
    h = h[:, 0:D] * jax.nn.sigmoid(h[:, D:2 * D])                      # GLU
    dww = cv_dww_ref[0]                                                # (K, D)
    smask = smask_ref[...]                                             # (K,BL,1)
    acc = jnp.zeros_like(h)
    for kk in range(K):            # depthwise conv = K shifted adds, no scratch
        off = kk - pad
        if off == 0:
            sh = h
        elif off > 0:
            sh = jnp.concatenate(
                [h[off:, :], jnp.zeros((off, D), jnp.float32)], axis=0)
        else:
            sh = jnp.concatenate(
                [jnp.zeros((-off, D), jnp.float32), h[:off, :]], axis=0)
        term = sh * dww[kk:kk + 1, :]
        if off != 0:
            term = term * smask[kk]        # zero taps crossing seq boundaries
        acc = acc + term
    bn = cv_bn_ref[0]                                   # (2, D): scale, shift
    acc = acc * bn[0:1, :] + bn[1:2, :]     # folded conv bias + eval BatchNorm
    acc = acc * jax.nn.sigmoid(acc)                                    # swish
    x = x + jnp.dot(acc, cv_pw2w_ref[0],
                    preferred_element_type=jnp.float32) + cv_pw2b_ref[0]

    # --------------- feed-forward module 2 + block LayerNorm ----------------
    x = half_ffn(x, f2_ln_ref[0], f2_w1_ref[0], f2_b1_ref[0],
                 f2_w2_ref[0], f2_b2_ref[0])
    x = layer_norm(x, fin_ln_ref[0])

    xs_ref[...] = x                                     # carry to next layer

    @pl.when(l == pl.num_programs(0) - 1)
    def _():
        o_ref[...] = x.astype(o_ref.dtype)


def conformer_encoder(enc, x, maskf, *, num_heads, eps=1e-5):
    """Run all conformer blocks in a single pallas_call gridded over layers."""
    B, L, D = x.shape
    Ly, _, Dff = enc["f1_w1"].shape
    K = enc["cv_dww"].shape[1]
    H = num_heads
    Dh = D // H
    HL = H * L
    BL = B * L
    pad = (K - 1) // 2

    x2 = x.reshape(BL, D)
    mask_hl = jnp.concatenate([maskf] * H, axis=-1)              # (B, 1, H*L)

    # eval-mode BatchNorm1d + depthwise conv bias folded into one affine
    bn_scale = enc["cv_bng"] * jax.lax.rsqrt(enc["cv_bnrv"] + 1e-5)
    bn_shift = enc["cv_bnb"] + (enc["cv_dwb"] - enc["cv_bnrm"]) * bn_scale
    cv_bn = jnp.concatenate([bn_scale, bn_shift], axis=1)        # (Ly, 2, D)

    # static helper masks (baked as kernel constants)
    vmask = np.zeros((HL, D), np.float32)                 # head block-diagonal
    for hh in range(H):
        vmask[hh * L:(hh + 1) * L, hh * Dh:(hh + 1) * Dh] = 1.0
    jblk = np.kron(np.eye(H, dtype=np.float32),
                   np.ones((L, L), np.float32))           # per-head ones block
    tpos = np.arange(BL) % L
    smask = np.zeros((K, BL, 1), np.float32)              # depthwise edge mask
    for kk in range(K):
        off = kk - pad
        smask[kk, :, 0] = ((tpos + off >= 0) & (tpos + off < L)).astype(np.float32)

    def const_spec(shape):
        zeros = (0,) * len(shape)
        return pl.BlockSpec(shape, lambda l: zeros)

    def layer_spec(a):
        return pl.BlockSpec((1,) + a.shape[1:], lambda l: (l, 0, 0))

    stacked = dict(enc)
    stacked["cv_bn"] = cv_bn
    stacked_names = ["f1_ln", "f1_w1", "f1_b1", "f1_w2", "f1_b2",
                     "at_ln", "at_wqkv", "at_bqkv", "at_wo", "at_bo",
                     "cv_ln", "cv_pw1w", "cv_pw1b", "cv_dww", "cv_bn",
                     "cv_pw2w", "cv_pw2b",
                     "f2_ln", "f2_w1", "f2_b1", "f2_w2", "f2_b2", "fin_ln"]

    operands = [x2, mask_hl, jnp.asarray(vmask), jnp.asarray(jblk),
                jnp.asarray(smask)]
    in_specs = [const_spec((BL, D)), const_spec((B, 1, HL)),
                const_spec((HL, D)), const_spec((HL, HL)),
                const_spec((K, BL, 1))]
    blk_bytes = sum(int(np.prod(a.shape)) * 4 for a in operands)
    for name in stacked_names:
        a = stacked[name]
        operands.append(a)
        in_specs.append(layer_spec(a))
        blk_bytes += int(np.prod(a.shape[1:])) * 4       # one per-layer block

    # VMEM budget from actual block sizes (x2 for double-buffered weight
    # streams) + resident output block + carried activation scratch + margin.
    vmem_limit = int(min(64 << 20,
                         max(16 << 20,
                             2 * blk_bytes + 2 * BL * D * 4 + (2 << 20))))

    out = pl.pallas_call(
        functools.partial(_encoder_kernel, batch=B, seq=L, num_heads=H,
                          kconv=K, eps=eps, scale=1.0 / float(np.sqrt(Dh))),
        out_shape=jax.ShapeDtypeStruct((BL, D), x.dtype),
        grid=(Ly,),
        in_specs=in_specs,
        out_specs=pl.BlockSpec((BL, D), lambda l: (0, 0)),
        scratch_shapes=[pltpu.VMEM((BL, D), jnp.float32)],
        compiler_params=pltpu.CompilerParams(
            dimension_semantics=("arbitrary",),       # sequential layer carry
            vmem_limit_bytes=vmem_limit),
    )(*operands)
    return out.reshape(B, L, D)


# ----------------------------- conv subsampling ------------------------------


def _im2col(x, kh, kw, stride):
    # x: (B, H, W, C) NHWC, valid padding
    B, H, W, C = x.shape
    Ho = (H - kh) // stride + 1
    Wo = (W - kw) // stride + 1
    cols = []
    for i in range(kh):
        for j in range(kw):
            cols.append(x[:, i:i + stride * (Ho - 1) + 1:stride,
                          j:j + stride * (Wo - 1) + 1:stride, :])
    patches = jnp.stack(cols, axis=3)                        # (B,Ho,Wo,kh*kw,C)
    return patches.reshape(B, Ho, Wo, kh * kw * C), Ho, Wo


def conv2d_pallas(x, w, b, stride, act="relu"):
    kh, kw, Cin, Cout = w.shape
    patches, _, _ = _im2col(x, kh, kw, stride)
    return pallas_linear(patches, w.reshape(kh * kw * Cin, Cout), b, act=act)


def conv_subsampling(p, x, lengths):
    x = x[..., None]                                         # (B, T, D1, 1)
    x = conv2d_pallas(x, p["conv1_w"], p["conv1_b"], stride=2, act="relu")
    x = conv2d_pallas(x, p["conv2_w"], p["conv2_b"], stride=2, act="relu")
    B, T2, F2, C = x.shape
    # match PyTorch (B, C, T, F).transpose(1, 2).reshape(B, T, C*F)
    x = jnp.transpose(x, (0, 1, 3, 2)).reshape(B, T2, C * F2)
    x = pallas_linear(x, p["proj_w"], p["proj_b"])
    for _ in range(2):  # Conv(k=3, s=2, p=0) length formula, applied twice
        lengths = (lengths - 3) // 2 + 1
    return x, lengths


# --------------------------------- model ------------------------------------


def conformer_model(params, input_values, input_lengths, *, num_heads):
    h, lengths = conv_subsampling(params["subsampling"], input_values,
                                  input_lengths)
    B, L, _ = h.shape
    attention_mask = jnp.arange(L)[None, :] < lengths[:, None]
    maskf = attention_mask.astype(jnp.float32).reshape(B, 1, L)
    h = conformer_encoder(params["encoder"], h, maskf, num_heads=num_heads)
    return h, lengths


# ------------------------------- parameters ----------------------------------


def init_params(key, *, d_model, ff_mult, num_layers, conv_kernel, d_input):
    keys = iter(jax.random.split(key, 64))
    D, Dff, K, Ly = d_model, d_model * ff_mult, conv_kernel, num_layers

    def w(shape, scale=0.02):
        return jax.random.normal(next(keys), shape, jnp.float32) * scale

    def zeros(shape):
        return jnp.zeros(shape, jnp.float32)

    def ones(shape):
        return jnp.ones(shape, jnp.float32)

    def ln():  # packed (gamma, beta) per layer
        return jnp.concatenate([ones((Ly, 1, D)), zeros((Ly, 1, D))], axis=1)

    f1 = (d_input - 3) // 2 + 1
    f2 = (f1 - 3) // 2 + 1
    sub = {
        "conv1_w": w((3, 3, 1, D)), "conv1_b": zeros((D,)),
        "conv2_w": w((3, 3, D, D)), "conv2_b": zeros((D,)),
        "proj_w": w((D * f2, D)), "proj_b": zeros((D,)),
    }
    enc = {
        "f1_ln": ln(), "f1_w1": w((Ly, D, Dff)), "f1_b1": zeros((Ly, 1, Dff)),
        "f1_w2": w((Ly, Dff, D)), "f1_b2": zeros((Ly, 1, D)),
        "at_ln": ln(), "at_wqkv": w((Ly, D, 3 * D)),
        "at_bqkv": zeros((Ly, 1, 3 * D)),
        "at_wo": w((Ly, D, D)), "at_bo": zeros((Ly, 1, D)),
        "cv_ln": ln(), "cv_pw1w": w((Ly, D, 2 * D)),
        "cv_pw1b": zeros((Ly, 1, 2 * D)),
        "cv_dww": w((Ly, K, D)), "cv_dwb": zeros((Ly, 1, D)),
        "cv_bng": ones((Ly, 1, D)), "cv_bnb": zeros((Ly, 1, D)),
        "cv_bnrm": zeros((Ly, 1, D)), "cv_bnrv": ones((Ly, 1, D)),
        "cv_pw2w": w((Ly, D, D)), "cv_pw2b": zeros((Ly, 1, D)),
        "f2_ln": ln(), "f2_w1": w((Ly, D, Dff)), "f2_b1": zeros((Ly, 1, Dff)),
        "f2_w2": w((Ly, Dff, D)), "f2_b2": zeros((Ly, 1, D)),
        "fin_ln": ln(),
    }
    return {"subsampling": sub, "encoder": enc}


# ---------------------------------- main -------------------------------------


if __name__ == "__main__":
    B, T, D1 = 2, 32, 32
    d_model, num_heads, num_layers = 32, 4, 2

    key = jax.random.PRNGKey(0)
    k_in, k_par = jax.random.split(key)
    input_values = jax.random.normal(k_in, (B, T, D1), jnp.float32)
    input_lengths = jnp.array([32, 24], dtype=jnp.int32)

    params = init_params(k_par, d_model=d_model, ff_mult=4,
                         num_layers=num_layers, conv_kernel=3, d_input=D1)

    fwd = jax.jit(functools.partial(conformer_model, num_heads=num_heads))
    hidden_states, out_lengths = fwd(params, input_values, input_lengths)
    jax.block_until_ready(hidden_states)
    jax.block_until_ready(out_lengths)

    assert hidden_states.shape == (B, 7, d_model), hidden_states.shape
    assert out_lengths.shape == (B,), out_lengths.shape
    assert bool(jnp.all(jnp.isfinite(hidden_states)))
    print("KERNEL_OK")
</pallas_src>

<mosaic_0001>
module attributes {stable_mosaic.version = 11 : i64} {
  func.func @_matmul_kernel(%arg0: i32, %arg1: memref<456x9xf32, #tpu.memory_space<vmem>>, %arg2: memref<9x32xf32, #tpu.memory_space<vmem>>, %arg3: memref<1x32xf32, #tpu.memory_space<vmem>>, %arg4: memref<456x32xf32, #tpu.memory_space<vmem>>) attributes {dimension_semantics = [#tpu.dimension_semantics<parallel>], iteration_bounds = array<i64: 1>, scalar_prefetch = 0 : i64, scratch_operands = 0 : i64, tpu.core_type = #tpu.core_type<tc>, window_params = [{transform_indices = @transform_0, window_bounds = array<i64: 456, 9>}, {pipeline_mode = #tpu.pipeline_mode<synchronous>, transform_indices = @transform_1, window_bounds = array<i64: 9, 32>}, {pipeline_mode = #tpu.pipeline_mode<synchronous>, transform_indices = @transform_2, window_bounds = array<i64: 1, 32>}, {transform_indices = @transform_3, window_bounds = array<i64: 456, 32>}]} {
    %c0 = arith.constant 0 : index
    %c0_0 = arith.constant 0 : index
    %0 = vector.load %arg1[%c0, %c0_0] : memref<456x9xf32, #tpu.memory_space<vmem>>, vector<456x9xf32>
    %c0_1 = arith.constant 0 : index
    %c0_2 = arith.constant 0 : index
    %1 = vector.load %arg2[%c0_1, %c0_2] : memref<9x32xf32, #tpu.memory_space<vmem>>, vector<9x32xf32>
    %cst = arith.constant dense<0.000000e+00> : vector<456x32xf32>
    %2 = tpu.matmul %0, %1, %cst {dimension_numbers = #tpu.dot_dimension_numbers<[1], [0], [0], [1], [0, 0, 1, 1], [], []>} : vector<456x9xf32>, vector<9x32xf32>, vector<456x32xf32> -> vector<456x32xf32>
    %c0_3 = arith.constant 0 : index
    %c0_4 = arith.constant 0 : index
    %3 = vector.load %arg3[%c0_3, %c0_4] : memref<1x32xf32, #tpu.memory_space<vmem>>, vector<1x32xf32>
    %4 = vector.broadcast %3 : vector<1x32xf32> to vector<456x32xf32>
    %5 = arith.addf %2, %4 : vector<456x32xf32>
    %cst_5 = arith.constant 0.000000e+00 : f32
    %6 = vector.broadcast %cst_5 : f32 to vector<456x32xf32>
    %7 = arith.maximumf %5, %6 : vector<456x32xf32>
    %c0_6 = arith.constant 0 : index
    %c0_7 = arith.constant 0 : index
    %8 = vector.load %arg4[%c0_6, %c0_7] : memref<456x32xf32, #tpu.memory_space<vmem>>, vector<456x32xf32>
    tpu.vector_store %arg4[%c0_6, %c0_7], %7 {strides = array<i32>} : memref<456x32xf32, #tpu.memory_space<vmem>>, vector<456x32xf32>,
    return
  }
  func.func @transform_0(%arg0: i32) -> (i32, i32) {
    %c0_i32 = arith.constant 0 : i32
    %c0_i32_0 = arith.constant 0 : i32
    return %arg0, %c0_i32 : i32, i32
  }
  func.func @transform_1(%arg0: i32) -> (i32, i32) {
    %c0_i32 = arith.constant 0 : i32
    %c0_i32_0 = arith.constant 0 : i32
    %c0_i32_1 = arith.constant 0 : i32
    return %c0_i32, %c0_i32_0 : i32, i32
  }
  func.func @transform_2(%arg0: i32) -> (i32, i32) {
    %c0_i32 = arith.constant 0 : i32
    %c0_i32_0 = arith.constant 0 : i32
    %c0_i32_1 = arith.constant 0 : i32
    return %c0_i32, %c0_i32_0 : i32, i32
  }
  func.func @transform_3(%arg0: i32) -> (i32, i32) {
    %c0_i32 = arith.constant 0 : i32
    %c0_i32_0 = arith.constant 0 : i32
    return %arg0, %c0_i32 : i32, i32
  }
}

module attributes {stable_mosaic.version = 11 : i64} {
  func.func @_matmul_kernel(%arg0: i32, %arg1: memref<104x288xf32, #tpu.memory_space<vmem>>, %arg2: memref<288x32xf32, #tpu.memory_space<vmem>>, %arg3: memref<1x32xf32, #tpu.memory_space<vmem>>, %arg4: memref<104x32xf32, #tpu.memory_space<vmem>>) attributes {dimension_semantics = [#tpu.dimension_semantics<parallel>], iteration_bounds = array<i64: 1>, scalar_prefetch = 0 : i64, scratch_operands = 0 : i64, tpu.core_type = #tpu.core_type<tc>, window_params = [{transform_indices = @transform_0, window_bounds = array<i64: 104, 288>}, {pipeline_mode = #tpu.pipeline_mode<synchronous>, transform_indices = @transform_1, window_bounds = array<i64: 288, 32>}, {pipeline_mode = #tpu.pipeline_mode<synchronous>, transform_indices = @transform_2, window_bounds = array<i64: 1, 32>}, {transform_indices = @transform_3, window_bounds = array<i64: 104, 32>}]} {
    %c0 = arith.constant 0 : index
    %c0_0 = arith.constant 0 : index
    %0 = vector.load %arg1[%c0, %c0_0] : memref<104x288xf32, #tpu.memory_space<vmem>>, vector<104x288xf32>
    %c0_1 = arith.constant 0 : index
    %c0_2 = arith.constant 0 : index
    %1 = vector.load %arg2[%c0_1, %c0_2] : memref<288x32xf32, #tpu.memory_space<vmem>>, vector<288x32xf32>
    %cst = arith.constant dense<0.000000e+00> : vector<104x32xf32>
    %2 = tpu.matmul %0, %1, %cst {dimension_numbers = #tpu.dot_dimension_numbers<[1], [0], [0], [1], [0, 0, 1, 1], [], []>} : vector<104x288xf32>, vector<288x32xf32>, vector<104x32xf32> -> vector<104x32xf32>
    %c0_3 = arith.constant 0 : index
    %c0_4 = arith.constant 0 : index
    %3 = vector.load %arg3[%c0_3, %c0_4] : memref<1x32xf32, #tpu.memory_space<vmem>>, vector<1x32xf32>
    %4 = vector.broadcast %3 : vector<1x32xf32> to vector<104x32xf32>
    %5 = arith.addf %2, %4 : vector<104x32xf32>
    %cst_5 = arith.constant 0.000000e+00 : f32
    %6 = vector.broadcast %cst_5 : f32 to vector<104x32xf32>
    %7 = arith.maximumf %5, %6 : vector<104x32xf32>
    %c0_6 = arith.constant 0 : index
    %c0_7 = arith.constant 0 : index
    %8 = vector.load %arg4[%c0_6, %c0_7] : memref<104x32xf32, #tpu.memory_space<vmem>>, vector<104x32xf32>
    tpu.vector_store %arg4[%c0_6, %c0_7], %7 {strides = array<i32>} : memref<104x32xf32, #tpu.memory_space<vmem>>, vector<104x32xf32>,
    return
  }
  func.func @transform_0(%arg0: i32) -> (i32, i32) {
    %c0_i32 = arith.constant 0 : i32
    %c0_i32_0 = arith.constant 0 : i32
    return %arg0, %c0_i32 : i32, i32
  }
  func.func @transform_1(%arg0: i32) -> (i32, i32) {
    %c0_i32 = arith.constant 0 : i32
    %c0_i32_0 = arith.constant 0 : i32
    %c0_i32_1 = arith.constant 0 : i32
    return %c0_i32, %c0_i32_0 : i32, i32
  }
  func.func @transform_2(%arg0: i32) -> (i32, i32) {
    %c0_i32 = arith.constant 0 : i32
    %c0_i32_0 = arith.constant 0 : i32
    %c0_i32_1 = arith.constant 0 : i32
    return %c0_i32, %c0_i32_0 : i32, i32
  }
  func.func @transform_3(%arg0: i32) -> (i32, i32) {
    %c0_i32 = arith.constant 0 : i32
    %c0_i32_0 = arith.constant 0 : i32
    return %arg0, %c0_i32 : i32, i32
  }
}

module attributes {stable_mosaic.version = 11 : i64} {
  func.func @_matmul_kernel(%arg0: i32, %arg1: memref<16x224xf32, #tpu.memory_space<vmem>>, %arg2: memref<224x32xf32, #tpu.memory_space<vmem>>, %arg3: memref<1x32xf32, #tpu.memory_space<vmem>>, %arg4: memref<16x32xf32, #tpu.memory_space<vmem>>) attributes {dimension_semantics = [#tpu.dimension_semantics<parallel>], iteration_bounds = array<i64: 1>, scalar_prefetch = 0 : i64, scratch_operands = 0 : i64, tpu.core_type = #tpu.core_type<tc>, window_params = [{transform_indices = @transform_0, window_bounds = array<i64: 16, 224>}, {pipeline_mode = #tpu.pipeline_mode<synchronous>, transform_indices = @transform_1, window_bounds = array<i64: 224, 32>}, {pipeline_mode = #tpu.pipeline_mode<synchronous>, transform_indices = @transform_2, window_bounds = array<i64: 1, 32>}, {transform_indices = @transform_3, window_bounds = array<i64: 16, 32>}]} {
    %c0 = arith.constant 0 : index
    %c0_0 = arith.constant 0 : index
    %0 = vector.load %arg1[%c0, %c0_0] : memref<16x224xf32, #tpu.memory_space<vmem>>, vector<16x224xf32>
    %c0_1 = arith.constant 0 : index
    %c0_2 = arith.constant 0 : index
    %1 = vector.load %arg2[%c0_1, %c0_2] : memref<224x32xf32, #tpu.memory_space<vmem>>, vector<224x32xf32>
    %cst = arith.constant dense<0.000000e+00> : vector<16x32xf32>
    %2 = tpu.matmul %0, %1, %cst {dimension_numbers = #tpu.dot_dimension_numbers<[1], [0], [0], [1], [0, 0, 1, 1], [], []>} : vector<16x224xf32>, vector<224x32xf32>, vector<16x32xf32> -> vector<16x32xf32>
    %c0_3 = arith.constant 0 : index
    %c0_4 = arith.constant 0 : index
    %3 = vector.load %arg3[%c0_3, %c0_4] : memref<1x32xf32, #tpu.memory_space<vmem>>, vector<1x32xf32>
    %4 = vector.broadcast %3 : vector<1x32xf32> to vector<16x32xf32>
    %5 = arith.addf %2, %4 : vector<16x32xf32>
    %c0_5 = arith.constant 0 : index
    %c0_6 = arith.constant 0 : index
    %6 = vector.load %arg4[%c0_5, %c0_6] : memref<16x32xf32, #tpu.memory_space<vmem>>, vector<16x32xf32>
    tpu.vector_store %arg4[%c0_5, %c0_6], %5 {strides = array<i32>} : memref<16x32xf32, #tpu.memory_space<vmem>>, vector<16x32xf32>,
    return
  }
  func.func @transform_0(%arg0: i32) -> (i32, i32) {
    %c0_i32 = arith.constant 0 : i32
    %c0_i32_0 = arith.constant 0 : i32
    return %arg0, %c0_i32 : i32, i32
  }
  func.func @transform_1(%arg0: i32) -> (i32, i32) {
    %c0_i32 = arith.constant 0 : i32
    %c0_i32_0 = arith.constant 0 : i32
    %c0_i32_1 = arith.constant 0 : i32
    return %c0_i32, %c0_i32_0 : i32, i32
  }
  func.func @transform_2(%arg0: i32) -> (i32, i32) {
    %c0_i32 = arith.constant 0 : i32
    %c0_i32_0 = arith.constant 0 : i32
    %c0_i32_1 = arith.constant 0 : i32
    return %c0_i32, %c0_i32_0 : i32, i32
  }
  func.func @transform_3(%arg0: i32) -> (i32, i32) {
    %c0_i32 = arith.constant 0 : i32
    %c0_i32_0 = arith.constant 0 : i32
    return %arg0, %c0_i32 : i32, i32
  }
}

module attributes {stable_mosaic.version = 11 : i64} {
  func.func @_encoder_kernel(%arg0: i32, %arg1: memref<14x32xf32, #tpu.memory_space<vmem>>, %arg2: memref<2x1x28xf32, #tpu.memory_space<vmem>>, %arg3: memref<28x32xf32, #tpu.memory_space<vmem>>, %arg4: memref<28x28xf32, #tpu.memory_space<vmem>>, %arg5: memref<3x14x1xf32, #tpu.memory_space<vmem>>, %arg6: memref<1x2x32xf32, #tpu.memory_space<vmem>>, %arg7: memref<1x32x128xf32, #tpu.memory_space<vmem>>, %arg8: memref<1x1x128xf32, #tpu.memory_space<vmem>>, %arg9: memref<1x128x32xf32, #tpu.memory_space<vmem>>, %arg10: memref<1x1x32xf32, #tpu.memory_space<vmem>>, %arg11: memref<1x2x32xf32, #tpu.memory_space<vmem>>, %arg12: memref<1x32x96xf32, #tpu.memory_space<vmem>>, %arg13: memref<1x1x96xf32, #tpu.memory_space<vmem>>, %arg14: memref<1x32x32xf32, #tpu.memory_space<vmem>>, %arg15: memref<1x1x32xf32, #tpu.memory_space<vmem>>, %arg16: memref<1x2x32xf32, #tpu.memory_space<vmem>>, %arg17: memref<1x32x64xf32, #tpu.memory_space<vmem>>, %arg18: memref<1x1x64xf32, #tpu.memory_space<vmem>>, %arg19: memref<1x3x32xf32, #tpu.memory_space<vmem>>, %arg20: memref<1x2x32xf32, #tpu.memory_space<vmem>>, %arg21: memref<1x32x32xf32, #tpu.memory_space<vmem>>, %arg22: memref<1x1x32xf32, #tpu.memory_space<vmem>>, %arg23: memref<1x2x32xf32, #tpu.memory_space<vmem>>, %arg24: memref<1x32x128xf32, #tpu.memory_space<vmem>>, %arg25: memref<1x1x128xf32, #tpu.memory_space<vmem>>, %arg26: memref<1x128x32xf32, #tpu.memory_space<vmem>>, %arg27: memref<1x1x32xf32, #tpu.memory_space<vmem>>, %arg28: memref<1x2x32xf32, #tpu.memory_space<vmem>>, %arg29: memref<14x32xf32, #tpu.memory_space<vmem>>, %arg30: memref<14x32xf32, #tpu.memory_space<vmem>>) attributes {dimension_semantics = [#tpu.dimension_semantics<arbitrary>], iteration_bounds = array<i64: 2>, scalar_prefetch = 0 : i64, scratch_operands = 1 : i64, tpu.core_type = #tpu.core_type<tc>, window_params = [{pipeline_mode = #tpu.pipeline_mode<synchronous>, transform_indices = @transform_0, window_bounds = array<i64: 14, 32>}, {pipeline_mode = #tpu.pipeline_mode<synchronous>, transform_indices = @transform_1, window_bounds = array<i64: 2, 1, 28>}, {pipeline_mode = #tpu.pipeline_mode<synchronous>, transform_indices = @transform_2, window_bounds = array<i64: 28, 32>}, {pipeline_mode = #tpu.pipeline_mode<synchronous>, transform_indices = @transform_3, window_bounds = array<i64: 28, 28>}, {pipeline_mode = #tpu.pipeline_mode<synchronous>, transform_indices = @transform_4, window_bounds = array<i64: 3, 14, 1>}, {transform_indices = @transform_5, window_bounds = array<i64: 1, 2, 32>}, {transform_indices = @transform_6, window_bounds = array<i64: 1, 32, 128>}, {transform_indices = @transform_7, window_bounds = array<i64: 1, 1, 128>}, {transform_indices = @transform_8, window_bounds = array<i64: 1, 128, 32>}, {transform_indices = @transform_9, window_bounds = array<i64: 1, 1, 32>}, {transform_indices = @transform_10, window_bounds = array<i64: 1, 2, 32>}, {transform_indices = @transform_11, window_bounds = array<i64: 1, 32, 96>}, {transform_indices = @transform_12, window_bounds = array<i64: 1, 1, 96>}, {transform_indices = @transform_13, window_bounds = array<i64: 1, 32, 32>}, {transform_indices = @transform_14, window_bounds = array<i64: 1, 1, 32>}, {transform_indices = @transform_15, window_bounds = array<i64: 1, 2, 32>}, {transform_indices = @transform_16, window_bounds = array<i64: 1, 32, 64>}, {transform_indices = @transform_17, window_bounds = array<i64: 1, 1, 64>}, {transform_indices = @transform_18, window_bounds = array<i64: 1, 3, 32>}, {transform_indices = @transform_19, window_bounds = array<i64: 1, 2, 32>}, {transform_indices = @transform_20, window_bounds = array<i64: 1, 32, 32>}, {transform_indices = @transform_21, window_bounds = array<i64: 1, 1, 32>}, {transform_indices = @transform_22, window_bounds = array<i64: 1, 2, 32>}, {transform_indices = @transform_23, window_bounds = array<i64: 1, 32, 128>}, {transform_indices = @transform_24, window_bounds = array<i64: 1, 1, 128>}, {transform_indices = @transform_25, window_bounds = array<i64: 1, 128, 32>}, {transform_indices = @transform_26, window_bounds = array<i64: 1, 1, 32>}, {transform_indices = @transform_27, window_bounds = array<i64: 1, 2, 32>}, {pipeline_mode = #tpu.pipeline_mode<synchronous>, transform_indices = @transform_28, window_bounds = array<i64: 14, 32>}]} {
    %c0_i32 = arith.constant 0 : i32
    %0 = arith.cmpi eq, %arg0, %c0_i32 : i32
    %1 = arith.extui %0 : i1 to i32
    %c0_i32_0 = arith.constant 0 : i32
    %2 = arith.cmpi ne, %1, %c0_i32_0 : i32
    scf.if %2 {
      %c0_141 = arith.constant 0 : index
      %c0_142 = arith.constant 0 : index
      %324 = vector.load %arg1[%c0_141, %c0_142] : memref<14x32xf32, #tpu.memory_space<vmem>>, vector<14x32xf32>
      %c0_143 = arith.constant 0 : index
      %c0_144 = arith.constant 0 : index
      %325 = vector.load %arg30[%c0_143, %c0_144] : memref<14x32xf32, #tpu.memory_space<vmem>>, vector<14x32xf32>
      tpu.vector_store %arg30[%c0_143, %c0_144], %324 {strides = array<i32>} : memref<14x32xf32, #tpu.memory_space<vmem>>, vector<14x32xf32>,
    } else {
    }
    %c0 = arith.constant 0 : index
    %c0_1 = arith.constant 0 : index
    %3 = vector.load %arg30[%c0, %c0_1] : memref<14x32xf32, #tpu.memory_space<vmem>>, vector<14x32xf32>
    %c0_2 = arith.constant 0 : index
    %c0_3 = arith.constant 0 : index
    %c0_4 = arith.constant 0 : index
    %4 = vector.load %arg6[%c0_2, %c0_3, %c0_4] : memref<1x2x32xf32, #tpu.memory_space<vmem>>, vector<1x2x32xf32>
    %5 = vector.shape_cast %4 : vector<1x2x32xf32> to vector<2x32xf32>
    %c0_5 = arith.constant 0 : index
    %c0_6 = arith.constant 0 : index
    %c0_7 = arith.constant 0 : index
    %6 = vector.load %arg7[%c0_5, %c0_6, %c0_7] : memref<1x32x128xf32, #tpu.memory_space<vmem>>, vector<1x32x128xf32>
    %7 = vector.shape_cast %6 : vector<1x32x128xf32> to vector<32x128xf32>
    %c0_8 = arith.constant 0 : index
    %c0_9 = arith.constant 0 : index
    %c0_10 = arith.constant 0 : index
    %8 = vector.load %arg8[%c0_8, %c0_9, %c0_10] : memref<1x1x128xf32, #tpu.memory_space<vmem>>, vector<1x1x128xf32>
    %9 = vector.shape_cast %8 : vector<1x1x128xf32> to vector<1x128xf32>
    %c0_11 = arith.constant 0 : index
    %c0_12 = arith.constant 0 : index
    %c0_13 = arith.constant 0 : index
    %10 = vector.load %arg9[%c0_11, %c0_12, %c0_13] : memref<1x128x32xf32, #tpu.memory_space<vmem>>, vector<1x128x32xf32>
    %11 = vector.shape_cast %10 : vector<1x128x32xf32> to vector<128x32xf32>
    %c0_14 = arith.constant 0 : index
    %c0_15 = arith.constant 0 : index
    %c0_16 = arith.constant 0 : index
    %12 = vector.load %arg10[%c0_14, %c0_15, %c0_16] : memref<1x1x32xf32, #tpu.memory_space<vmem>>, vector<1x1x32xf32>
    %13 = vector.shape_cast %12 : vector<1x1x32xf32> to vector<1x32xf32>
    %14 = vector.extract_strided_slice %5 {offsets = [0, 0], sizes = [1, 32], strides = [1, 1]} : vector<2x32xf32> to vector<1x32xf32>
    %15 = vector.extract_strided_slice %5 {offsets = [1, 0], sizes = [1, 32], strides = [1, 1]} : vector<2x32xf32> to vector<1x32xf32>
    %cst = arith.constant dense<0.000000e+00> : vector<14xf32>
    %16 = vector.multi_reduction <add>, %3, %cst [1] : vector<14x32xf32> to vector<14xf32>
    %17 = vector.shape_cast %16 : vector<14xf32> to vector<14x1xf32>
    %cst_17 = arith.constant 3.200000e+01 : f32
    %18 = vector.broadcast %cst_17 : f32 to vector<14x1xf32>
    %19 = arith.divf %17, %18 : vector<14x1xf32>
    %20 = vector.broadcast %19 : vector<14x1xf32> to vector<14x32xf32>
    %21 = arith.subf %3, %20 : vector<14x32xf32>
    %22 = arith.mulf %21, %21 : vector<14x32xf32>
    %cst_18 = arith.constant dense<0.000000e+00> : vector<14xf32>
    %23 = vector.multi_reduction <add>, %22, %cst_18 [1] : vector<14x32xf32> to vector<14xf32>
    %24 = vector.shape_cast %23 : vector<14xf32> to vector<14x1xf32>
    %cst_19 = arith.constant 3.200000e+01 : f32
    %25 = vector.broadcast %cst_19 : f32 to vector<14x1xf32>
    %26 = arith.divf %24, %25 : vector<14x1xf32>
    %27 = vector.broadcast %19 : vector<14x1xf32> to vector<14x32xf32>
    %28 = arith.subf %3, %27 : vector<14x32xf32>
    %cst_20 = arith.constant 9.99999974E-6 : f32
    %29 = vector.broadcast %cst_20 : f32 to vector<14x1xf32>
    %30 = arith.addf %26, %29 : vector<14x1xf32>
    %31 = math.rsqrt %30 : vector<14x1xf32>
    %32 = vector.broadcast %31 : vector<14x1xf32> to vector<14x32xf32>
    %33 = arith.mulf %28, %32 : vector<14x32xf32>
    %34 = vector.broadcast %14 : vector<1x32xf32> to vector<14x32xf32>
    %35 = arith.mulf %33, %34 : vector<14x32xf32>
    %36 = vector.broadcast %15 : vector<1x32xf32> to vector<14x32xf32>
    %37 = arith.addf %35, %36 : vector<14x32xf32>
    %cst_21 = arith.constant dense<0.000000e+00> : vector<14x128xf32>
    %38 = tpu.matmul %37, %7, %cst_21 {dimension_numbers = #tpu.dot_dimension_numbers<[1], [0], [0], [1], [0, 0, 1, 1], [], []>} : vector<14x32xf32>, vector<32x128xf32>, vector<14x128xf32> -> vector<14x128xf32>
    %39 = vector.broadcast %9 : vector<1x128xf32> to vector<14x128xf32>
    %40 = arith.addf %38, %39 : vector<14x128xf32>
    %41 = arith.negf %40 : vector<14x128xf32>
    %42 = math.exp %41 : vector<14x128xf32>
    %cst_22 = arith.constant 1.000000e+00 : f32
    %43 = vector.broadcast %cst_22 : f32 to vector<14x128xf32>
    %44 = arith.addf %43, %42 : vector<14x128xf32>
    %45 = arith.divf %43, %44 : vector<14x128xf32>
    %46 = arith.mulf %40, %45 : vector<14x128xf32>
    %cst_23 = arith.constant dense<0.000000e+00> : vector<14x32xf32>
    %47 = tpu.matmul %46, %11, %cst_23 {dimension_numbers = #tpu.dot_dimension_numbers<[1], [0], [0], [1], [0, 0, 1, 1], [], []>} : vector<14x128xf32>, vector<128x32xf32>, vector<14x32xf32> -> vector<14x32xf32>
    %48 = vector.broadcast %13 : vector<1x32xf32> to vector<14x32xf32>
    %49 = arith.addf %47, %48 : vector<14x32xf32>
    %cst_24 = arith.constant 5.000000e-01 : f32
    %50 = vector.broadcast %cst_24 : f32 to vector<14x32xf32>
    %51 = arith.mulf %50, %49 : vector<14x32xf32>
    %52 = arith.addf %3, %51 : vector<14x32xf32>
    %c0_25 = arith.constant 0 : index
    %c0_26 = arith.constant 0 : index
    %c0_27 = arith.constant 0 : index
    %53 = vector.load %arg11[%c0_25, %c0_26, %c0_27] : memref<1x2x32xf32, #tpu.memory_space<vmem>>, vector<1x2x32xf32>
    %54 = vector.shape_cast %53 : vector<1x2x32xf32> to vector<2x32xf32>
    %55 = vector.extract_strided_slice %54 {offsets = [0, 0], sizes = [1, 32], strides = [1, 1]} : vector<2x32xf32> to vector<1x32xf32>
    %56 = vector.extract_strided_slice %54 {offsets = [1, 0], sizes = [1, 32], strides = [1, 1]} : vector<2x32xf32> to vector<1x32xf32>
    %cst_28 = arith.constant dense<0.000000e+00> : vector<14xf32>
    %57 = vector.multi_reduction <add>, %52, %cst_28 [1] : vector<14x32xf32> to vector<14xf32>
    %58 = vector.shape_cast %57 : vector<14xf32> to vector<14x1xf32>
    %cst_29 = arith.constant 3.200000e+01 : f32
    %59 = vector.broadcast %cst_29 : f32 to vector<14x1xf32>
    %60 = arith.divf %58, %59 : vector<14x1xf32>
    %61 = vector.broadcast %60 : vector<14x1xf32> to vector<14x32xf32>
    %62 = arith.subf %52, %61 : vector<14x32xf32>
    %63 = arith.mulf %62, %62 : vector<14x32xf32>
    %cst_30 = arith.constant dense<0.000000e+00> : vector<14xf32>
    %64 = vector.multi_reduction <add>, %63, %cst_30 [1] : vector<14x32xf32> to vector<14xf32>
    %65 = vector.shape_cast %64 : vector<14xf32> to vector<14x1xf32>
    %cst_31 = arith.constant 3.200000e+01 : f32
    %66 = vector.broadcast %cst_31 : f32 to vector<14x1xf32>
    %67 = arith.divf %65, %66 : vector<14x1xf32>
    %68 = vector.broadcast %60 : vector<14x1xf32> to vector<14x32xf32>
    %69 = arith.subf %52, %68 : vector<14x32xf32>
    %cst_32 = arith.constant 9.99999974E-6 : f32
    %70 = vector.broadcast %cst_32 : f32 to vector<14x1xf32>
    %71 = arith.addf %67, %70 : vector<14x1xf32>
    %72 = math.rsqrt %71 : vector<14x1xf32>
    %73 = vector.broadcast %72 : vector<14x1xf32> to vector<14x32xf32>
    %74 = arith.mulf %69, %73 : vector<14x32xf32>
    %75 = vector.broadcast %55 : vector<1x32xf32> to vector<14x32xf32>
    %76 = arith.mulf %74, %75 : vector<14x32xf32>
    %77 = vector.broadcast %56 : vector<1x32xf32> to vector<14x32xf32>
    %78 = arith.addf %76, %77 : vector<14x32xf32>
    %c0_33 = arith.constant 0 : index
    %c0_34 = arith.constant 0 : index
    %c0_35 = arith.constant 0 : index
    %79 = vector.load %arg12[%c0_33, %c0_34, %c0_35] : memref<1x32x96xf32, #tpu.memory_space<vmem>>, vector<1x32x96xf32>
    %80 = vector.shape_cast %79 : vector<1x32x96xf32> to vector<32x96xf32>
    %cst_36 = arith.constant dense<0.000000e+00> : vector<14x96xf32>
    %81 = tpu.matmul %78, %80, %cst_36 {dimension_numbers = #tpu.dot_dimension_numbers<[1], [0], [0], [1], [0, 0, 1, 1], [], []>} : vector<14x32xf32>, vector<32x96xf32>, vector<14x96xf32> -> vector<14x96xf32>
    %c0_37 = arith.constant 0 : index
    %c0_38 = arith.constant 0 : index
    %c0_39 = arith.constant 0 : index
    %82 = vector.load %arg13[%c0_37, %c0_38, %c0_39] : memref<1x1x96xf32, #tpu.memory_space<vmem>>, vector<1x1x96xf32>
    %83 = vector.shape_cast %82 : vector<1x1x96xf32> to vector<1x96xf32>
    %84 = vector.broadcast %83 : vector<1x96xf32> to vector<14x96xf32>
    %85 = arith.addf %81, %84 : vector<14x96xf32>
    %86 = vector.extract_strided_slice %85 {offsets = [0, 0], sizes = [14, 32], strides = [1, 1]} : vector<14x96xf32> to vector<14x32xf32>
    %87 = vector.extract_strided_slice %85 {offsets = [0, 32], sizes = [14, 32], strides = [1, 1]} : vector<14x96xf32> to vector<14x32xf32>
    %88 = vector.extract_strided_slice %85 {offsets = [0, 64], sizes = [14, 32], strides = [1, 1]} : vector<14x96xf32> to vector<14x32xf32>
    %c0_40 = arith.constant 0 : index
    %c0_41 = arith.constant 0 : index
    %89 = vector.load %arg3[%c0_40, %c0_41] : memref<28x32xf32, #tpu.memory_space<vmem>>, vector<28x32xf32>
    %c0_42 = arith.constant 0 : index
    %c0_43 = arith.constant 0 : index
    %90 = vector.load %arg4[%c0_42, %c0_43] : memref<28x28xf32, #tpu.memory_space<vmem>>, vector<28x28xf32>
    %91 = vector.extract_strided_slice %86 {offsets = [0, 0], sizes = [7, 32], strides = [1, 1]} : vector<14x32xf32> to vector<7x32xf32>
    %92 = vector.extract_strided_slice %87 {offsets = [0, 0], sizes = [7, 32], strides = [1, 1]} : vector<14x32xf32> to vector<7x32xf32>
    %93 = vector.extract_strided_slice %88 {offsets = [0, 0], sizes = [7, 32], strides = [1, 1]} : vector<14x32xf32> to vector<7x32xf32>
    %94 = tpu.concatenate %92, %92, %92, %92 in 0 : vector<7x32xf32>, vector<7x32xf32>, vector<7x32xf32>, vector<7x32xf32> -> vector<28x32xf32>
    %95 = arith.mulf %94, %89 : vector<28x32xf32>
    %96 = tpu.concatenate %93, %93, %93, %93 in 0 : vector<7x32xf32>, vector<7x32xf32>, vector<7x32xf32>, vector<7x32xf32> -> vector<28x32xf32>
    %97 = arith.mulf %96, %89 : vector<28x32xf32>
    %cst_44 = arith.constant dense<0.000000e+00> : vector<7x28xf32>
    %98 = tpu.matmul %91, %95, %cst_44 {dimension_numbers = #tpu.dot_dimension_numbers<[1], [1], [0], [0], [0, 0, 1, 0], [], []>} : vector<7x32xf32>, vector<28x32xf32>, vector<7x28xf32> -> vector<7x28xf32>
    %cst_45 = arith.constant 0.353553385 : f32
    %99 = vector.broadcast %cst_45 : f32 to vector<7x28xf32>
    %100 = arith.mulf %98, %99 : vector<7x28xf32>
    %c0_46 = arith.constant 0 : index
    %c0_47 = arith.constant 0 : index
    %c0_48 = arith.constant 0 : index
    %101 = vector.load %arg2[%c0_46, %c0_47, %c0_48] : memref<2x1x28xf32, #tpu.memory_space<vmem>>, vector<1x1x28xf32>
    %102 = vector.shape_cast %101 : vector<1x1x28xf32> to vector<1x28xf32>
    %cst_49 = arith.constant 0.000000e+00 : f32
    %103 = vector.broadcast %cst_49 : f32 to vector<1x28xf32>
    %104 = arith.cmpf ogt, %102, %103 : vector<1x28xf32>
    %cst_50 = arith.constant -1.000000e+30 : f32
    %105 = vector.shape_cast %104 : vector<1x28xi1> to vector<1x28xi1>
    %106 = vector.broadcast %105 : vector<1x28xi1> to vector<7x28xi1>
    %107 = vector.broadcast %cst_50 : f32 to vector<7x28xf32>
    %108 = arith.select %106, %100, %107 : vector<7x28xi1>, vector<7x28xf32>
    %cst_51 = arith.constant dense<0xFF800000> : vector<7xf32>
    %109 = vector.multi_reduction <maximumf>, %108, %cst_51 [1] : vector<7x28xf32> to vector<7xf32>
    %110 = vector.shape_cast %109 : vector<7xf32> to vector<7x1xf32>
    %111 = vector.broadcast %110 : vector<7x1xf32> to vector<7x28xf32>
    %112 = arith.subf %108, %111 : vector<7x28xf32>
    %113 = math.exp %112 : vector<7x28xf32>
    %cst_52 = arith.constant dense<0.000000e+00> : vector<7x28xf32>
    %114 = tpu.matmul %113, %90, %cst_52 {dimension_numbers = #tpu.dot_dimension_numbers<[1], [0], [0], [1], [0, 0, 1, 1], [], []>} : vector<7x28xf32>, vector<28x28xf32>, vector<7x28xf32> -> vector<7x28xf32>
    %115 = arith.divf %113, %114 : vector<7x28xf32>
    %cst_53 = arith.constant dense<0.000000e+00> : vector<7x32xf32>
    %116 = tpu.matmul %115, %97, %cst_53 {dimension_numbers = #tpu.dot_dimension_numbers<[1], [0], [0], [1], [0, 0, 1, 1], [], []>} : vector<7x28xf32>, vector<28x32xf32>, vector<7x32xf32> -> vector<7x32xf32>
    %117 = vector.extract_strided_slice %86 {offsets = [7, 0], sizes = [7, 32], strides = [1, 1]} : vector<14x32xf32> to vector<7x32xf32>
    %118 = vector.extract_strided_slice %87 {offsets = [7, 0], sizes = [7, 32], strides = [1, 1]} : vector<14x32xf32> to vector<7x32xf32>
    %119 = vector.extract_strided_slice %88 {offsets = [7, 0], sizes = [7, 32], strides = [1, 1]} : vector<14x32xf32> to vector<7x32xf32>
    %120 = tpu.concatenate %118, %118, %118, %118 in 0 : vector<7x32xf32>, vector<7x32xf32>, vector<7x32xf32>, vector<7x32xf32> -> vector<28x32xf32>
    %121 = arith.mulf %120, %89 : vector<28x32xf32>
    %122 = tpu.concatenate %119, %119, %119, %119 in 0 : vector<7x32xf32>, vector<7x32xf32>, vector<7x32xf32>, vector<7x32xf32> -> vector<28x32xf32>
    %123 = arith.mulf %122, %89 : vector<28x32xf32>
    %cst_54 = arith.constant dense<0.000000e+00> : vector<7x28xf32>
    %124 = tpu.matmul %117, %121, %cst_54 {dimension_numbers = #tpu.dot_dimension_numbers<[1], [1], [0], [0], [0, 0, 1, 0], [], []>} : vector<7x32xf32>, vector<28x32xf32>, vector<7x28xf32> -> vector<7x28xf32>
    %cst_55 = arith.constant 0.353553385 : f32
    %125 = vector.broadcast %cst_55 : f32 to vector<7x28xf32>
    %126 = arith.mulf %124, %125 : vector<7x28xf32>
    %c1 = arith.constant 1 : index
    %c0_56 = arith.constant 0 : index
    %c0_57 = arith.constant 0 : index
    %127 = vector.load %arg2[%c1, %c0_56, %c0_57] : memref<2x1x28xf32, #tpu.memory_space<vmem>>, vector<1x1x28xf32>
    %128 = vector.shape_cast %127 : vector<1x1x28xf32> to vector<1x28xf32>
    %cst_58 = arith.constant 0.000000e+00 : f32
    %129 = vector.broadcast %cst_58 : f32 to vector<1x28xf32>
    %130 = arith.cmpf ogt, %128, %129 : vector<1x28xf32>
    %cst_59 = arith.constant -1.000000e+30 : f32
    %131 = vector.shape_cast %130 : vector<1x28xi1> to vector<1x28xi1>
    %132 = vector.broadcast %131 : vector<1x28xi1> to vector<7x28xi1>
    %133 = vector.broadcast %cst_59 : f32 to vector<7x28xf32>
    %134 = arith.select %132, %126, %133 : vector<7x28xi1>, vector<7x28xf32>
    %cst_60 = arith.constant dense<0xFF800000> : vector<7xf32>
    %135 = vector.multi_reduction <maximumf>, %134, %cst_60 [1] : vector<7x28xf32> to vector<7xf32>
    %136 = vector.shape_cast %135 : vector<7xf32> to vector<7x1xf32>
    %137 = vector.broadcast %136 : vector<7x1xf32> to vector<7x28xf32>
    %138 = arith.subf %134, %137 : vector<7x28xf32>
    %139 = math.exp %138 : vector<7x28xf32>
    %cst_61 = arith.constant dense<0.000000e+00> : vector<7x28xf32>
    %140 = tpu.matmul %139, %90, %cst_61 {dimension_numbers = #tpu.dot_dimension_numbers<[1], [0], [0], [1], [0, 0, 1, 1], [], []>} : vector<7x28xf32>, vector<28x28xf32>, vector<7x28xf32> -> vector<7x28xf32>
    %141 = arith.divf %139, %140 : vector<7x28xf32>
    %cst_62 = arith.constant dense<0.000000e+00> : vector<7x32xf32>
    %142 = tpu.matmul %141, %123, %cst_62 {dimension_numbers = #tpu.dot_dimension_numbers<[1], [0], [0], [1], [0, 0, 1, 1], [], []>} : vector<7x28xf32>, vector<28x32xf32>, vector<7x32xf32> -> vector<7x32xf32>
    %143 = tpu.concatenate %116, %142 in 0 : vector<7x32xf32>, vector<7x32xf32> -> vector<14x32xf32>
    %c0_63 = arith.constant 0 : index
    %c0_64 = arith.constant 0 : index
    %c0_65 = arith.constant 0 : index
    %144 = vector.load %arg14[%c0_63, %c0_64, %c0_65] : memref<1x32x32xf32, #tpu.memory_space<vmem>>, vector<1x32x32xf32>
    %145 = vector.shape_cast %144 : vector<1x32x32xf32> to vector<32x32xf32>
    %cst_66 = arith.constant dense<0.000000e+00> : vector<14x32xf32>
    %146 = tpu.matmul %143, %145, %cst_66 {dimension_numbers = #tpu.dot_dimension_numbers<[1], [0], [0], [1], [0, 0, 1, 1], [], []>} : vector<14x32xf32>, vector<32x32xf32>, vector<14x32xf32> -> vector<14x32xf32>
    %147 = arith.addf %52, %146 : vector<14x32xf32>
    %c0_67 = arith.constant 0 : index
    %c0_68 = arith.constant 0 : index
    %c0_69 = arith.constant 0 : index
    %148 = vector.load %arg15[%c0_67, %c0_68, %c0_69] : memref<1x1x32xf32, #tpu.memory_space<vmem>>, vector<1x1x32xf32>
    %149 = vector.shape_cast %148 : vector<1x1x32xf32> to vector<1x32xf32>
    %150 = vector.broadcast %149 : vector<1x32xf32> to vector<14x32xf32>
    %151 = arith.addf %147, %150 : vector<14x32xf32>
    %c0_70 = arith.constant 0 : index
    %c0_71 = arith.constant 0 : index
    %c0_72 = arith.constant 0 : index
    %152 = vector.load %arg16[%c0_70, %c0_71, %c0_72] : memref<1x2x32xf32, #tpu.memory_space<vmem>>, vector<1x2x32xf32>
    %153 = vector.shape_cast %152 : vector<1x2x32xf32> to vector<2x32xf32>
    %154 = vector.extract_strided_slice %153 {offsets = [0, 0], sizes = [1, 32], strides = [1, 1]} : vector<2x32xf32> to vector<1x32xf32>
    %155 = vector.extract_strided_slice %153 {offsets = [1, 0], sizes = [1, 32], strides = [1, 1]} : vector<2x32xf32> to vector<1x32xf32>
    %cst_73 = arith.constant dense<0.000000e+00> : vector<14xf32>
    %156 = vector.multi_reduction <add>, %151, %cst_73 [1] : vector<14x32xf32> to vector<14xf32>
    %157 = vector.shape_cast %156 : vector<14xf32> to vector<14x1xf32>
    %cst_74 = arith.constant 3.200000e+01 : f32
    %158 = vector.broadcast %cst_74 : f32 to vector<14x1xf32>
    %159 = arith.divf %157, %158 : vector<14x1xf32>
    %160 = vector.broadcast %159 : vector<14x1xf32> to vector<14x32xf32>
    %161 = arith.subf %151, %160 : vector<14x32xf32>
    %162 = arith.mulf %161, %161 : vector<14x32xf32>
    %cst_75 = arith.constant dense<0.000000e+00> : vector<14xf32>
    %163 = vector.multi_reduction <add>, %162, %cst_75 [1] : vector<14x32xf32> to vector<14xf32>
    %164 = vector.shape_cast %163 : vector<14xf32> to vector<14x1xf32>
    %cst_76 = arith.constant 3.200000e+01 : f32
    %165 = vector.broadcast %cst_76 : f32 to vector<14x1xf32>
    %166 = arith.divf %164, %165 : vector<14x1xf32>
    %167 = vector.broadcast %159 : vector<14x1xf32> to vector<14x32xf32>
    %168 = arith.subf %151, %167 : vector<14x32xf32>
    %cst_77 = arith.constant 9.99999974E-6 : f32
    %169 = vector.broadcast %cst_77 : f32 to vector<14x1xf32>
    %170 = arith.addf %166, %169 : vector<14x1xf32>
    %171 = math.rsqrt %170 : vector<14x1xf32>
    %172 = vector.broadcast %171 : vector<14x1xf32> to vector<14x32xf32>
    %173 = arith.mulf %168, %172 : vector<14x32xf32>
    %174 = vector.broadcast %154 : vector<1x32xf32> to vector<14x32xf32>
    %175 = arith.mulf %173, %174 : vector<14x32xf32>
    %176 = vector.broadcast %155 : vector<1x32xf32> to vector<14x32xf32>
    %177 = arith.addf %175, %176 : vector<14x32xf32>
    %c0_78 = arith.constant 0 : index
    %c0_79 = arith.constant 0 : index
    %c0_80 = arith.constant 0 : index
    %178 = vector.load %arg17[%c0_78, %c0_79, %c0_80] : memref<1x32x64xf32, #tpu.memory_space<vmem>>, vector<1x32x64xf32>
    %179 = vector.shape_cast %178 : vector<1x32x64xf32> to vector<32x64xf32>
    %cst_81 = arith.constant dense<0.000000e+00> : vector<14x64xf32>
    %180 = tpu.matmul %177, %179, %cst_81 {dimension_numbers = #tpu.dot_dimension_numbers<[1], [0], [0], [1], [0, 0, 1, 1], [], []>} : vector<14x32xf32>, vector<32x64xf32>, vector<14x64xf32> -> vector<14x64xf32>
    %c0_82 = arith.constant 0 : index
    %c0_83 = arith.constant 0 : index
    %c0_84 = arith.constant 0 : index
    %181 = vector.load %arg18[%c0_82, %c0_83, %c0_84] : memref<1x1x64xf32, #tpu.memory_space<vmem>>, vector<1x1x64xf32>
    %182 = vector.shape_cast %181 : vector<1x1x64xf32> to vector<1x64xf32>
    %183 = vector.broadcast %182 : vector<1x64xf32> to vector<14x64xf32>
    %184 = arith.addf %180, %183 : vector<14x64xf32>
    %185 = vector.extract_strided_slice %184 {offsets = [0, 0], sizes = [14, 32], strides = [1, 1]} : vector<14x64xf32> to vector<14x32xf32>
    %186 = vector.extract_strided_slice %184 {offsets = [0, 32], sizes = [14, 32], strides = [1, 1]} : vector<14x64xf32> to vector<14x32xf32>
    %187 = arith.negf %186 : vector<14x32xf32>
    %188 = math.exp %187 : vector<14x32xf32>
    %cst_85 = arith.constant 1.000000e+00 : f32
    %189 = vector.broadcast %cst_85 : f32 to vector<14x32xf32>
    %190 = arith.addf %189, %188 : vector<14x32xf32>
    %191 = arith.divf %189, %190 : vector<14x32xf32>
    %192 = arith.mulf %185, %191 : vector<14x32xf32>
    %c0_86 = arith.constant 0 : index
    %c0_87 = arith.constant 0 : index
    %c0_88 = arith.constant 0 : index
    %193 = vector.load %arg19[%c0_86, %c0_87, %c0_88] : memref<1x3x32xf32, #tpu.memory_space<vmem>>, vector<1x3x32xf32>
    %194 = vector.shape_cast %193 : vector<1x3x32xf32> to vector<3x32xf32>
    %c0_89 = arith.constant 0 : index
    %c0_90 = arith.constant 0 : index
    %c0_91 = arith.constant 0 : index
    %195 = vector.load %arg5[%c0_89, %c0_90, %c0_91] : memref<3x14x1xf32, #tpu.memory_space<vmem>>, vector<3x14x1xf32>
    %cst_92 = arith.constant 0.000000e+00 : f32
    %196 = vector.broadcast %cst_92 : f32 to vector<14x32xf32>
    %cst_93 = arith.constant 0.000000e+00 : f32
    %197 = vector.broadcast %cst_93 : f32 to vector<1x32xf32>
    %198 = vector.extract_strided_slice %192 {offsets = [0, 0], sizes = [13, 32], strides = [1, 1]} : vector<14x32xf32> to vector<13x32xf32>
    %199 = tpu.concatenate %197, %198 in 0 : vector<1x32xf32>, vector<13x32xf32> -> vector<14x32xf32>
    %200 = vector.extract_strided_slice %194 {offsets = [0, 0], sizes = [1, 32], strides = [1, 1]} : vector<3x32xf32> to vector<1x32xf32>
    %201 = vector.broadcast %200 : vector<1x32xf32> to vector<14x32xf32>
    %202 = arith.mulf %199, %201 : vector<14x32xf32>
    %203 = vector.extract_strided_slice %195 {offsets = [0, 0, 0], sizes = [1, 14, 1], strides = [1, 1, 1]} : vector<3x14x1xf32> to vector<1x14x1xf32>
    %204 = vector.shape_cast %203 : vector<1x14x1xf32> to vector<14x1xf32>
    %205 = vector.broadcast %204 : vector<14x1xf32> to vector<14x32xf32>
    %206 = arith.mulf %202, %205 : vector<14x32xf32>
    %207 = arith.addf %196, %206 : vector<14x32xf32>
    %208 = vector.extract_strided_slice %194 {offsets = [1, 0], sizes = [1, 32], strides = [1, 1]} : vector<3x32xf32> to vector<1x32xf32>
    %209 = vector.broadcast %208 : vector<1x32xf32> to vector<14x32xf32>
    %210 = arith.mulf %192, %209 : vector<14x32xf32>
    %211 = arith.addf %207, %210 : vector<14x32xf32>
    %212 = vector.extract_strided_slice %192 {offsets = [1, 0], sizes = [13, 32], strides = [1, 1]} : vector<14x32xf32> to vector<13x32xf32>
    %cst_94 = arith.constant 0.000000e+00 : f32
    %213 = vector.broadcast %cst_94 : f32 to vector<1x32xf32>
    %214 = tpu.concatenate %212, %213 in 0 : vector<13x32xf32>, vector<1x32xf32> -> vector<14x32xf32>
    %215 = vector.extract_strided_slice %194 {offsets = [2, 0], sizes = [1, 32], strides = [1, 1]} : vector<3x32xf32> to vector<1x32xf32>
    %216 = vector.broadcast %215 : vector<1x32xf32> to vector<14x32xf32>
    %217 = arith.mulf %214, %216 : vector<14x32xf32>
    %218 = vector.extract_strided_slice %195 {offsets = [2, 0, 0], sizes = [1, 14, 1], strides = [1, 1, 1]} : vector<3x14x1xf32> to vector<1x14x1xf32>
    %219 = vector.shape_cast %218 : vector<1x14x1xf32> to vector<14x1xf32>
    %220 = vector.broadcast %219 : vector<14x1xf32> to vector<14x32xf32>
    %221 = arith.mulf %217, %220 : vector<14x32xf32>
    %222 = arith.addf %211, %221 : vector<14x32xf32>
    %c0_95 = arith.constant 0 : index
    %c0_96 = arith.constant 0 : index
    %c0_97 = arith.constant 0 : index
    %223 = vector.load %arg20[%c0_95, %c0_96, %c0_97] : memref<1x2x32xf32, #tpu.memory_space<vmem>>, vector<1x2x32xf32>
    %224 = vector.shape_cast %223 : vector<1x2x32xf32> to vector<2x32xf32>
    %225 = vector.extract_strided_slice %224 {offsets = [0, 0], sizes = [1, 32], strides = [1, 1]} : vector<2x32xf32> to vector<1x32xf32>
    %226 = vector.broadcast %225 : vector<1x32xf32> to vector<14x32xf32>
    %227 = arith.mulf %222, %226 : vector<14x32xf32>
    %228 = vector.extract_strided_slice %224 {offsets = [1, 0], sizes = [1, 32], strides = [1, 1]} : vector<2x32xf32> to vector<1x32xf32>
    %229 = vector.broadcast %228 : vector<1x32xf32> to vector<14x32xf32>
    %230 = arith.addf %227, %229 : vector<14x32xf32>
    %231 = arith.negf %230 : vector<14x32xf32>
    %232 = math.exp %231 : vector<14x32xf32>
    %cst_98 = arith.constant 1.000000e+00 : f32
    %233 = vector.broadcast %cst_98 : f32 to vector<14x32xf32>
    %234 = arith.addf %233, %232 : vector<14x32xf32>
    %235 = arith.divf %233, %234 : vector<14x32xf32>
    %236 = arith.mulf %230, %235 : vector<14x32xf32>
    %c0_99 = arith.constant 0 : index
    %c0_100 = arith.constant 0 : index
    %c0_101 = arith.constant 0 : index
    %237 = vector.load %arg21[%c0_99, %c0_100, %c0_101] : memref<1x32x32xf32, #tpu.memory_space<vmem>>, vector<1x32x32xf32>
    %238 = vector.shape_cast %237 : vector<1x32x32xf32> to vector<32x32xf32>
    %cst_102 = arith.constant dense<0.000000e+00> : vector<14x32xf32>
    %239 = tpu.matmul %236, %238, %cst_102 {dimension_numbers = #tpu.dot_dimension_numbers<[1], [0], [0], [1], [0, 0, 1, 1], [], []>} : vector<14x32xf32>, vector<32x32xf32>, vector<14x32xf32> -> vector<14x32xf32>
    %240 = arith.addf %151, %239 : vector<14x32xf32>
    %c0_103 = arith.constant 0 : index
    %c0_104 = arith.constant 0 : index
    %c0_105 = arith.constant 0 : index
    %241 = vector.load %arg22[%c0_103, %c0_104, %c0_105] : memref<1x1x32xf32, #tpu.memory_space<vmem>>, vector<1x1x32xf32>
    %242 = vector.shape_cast %241 : vector<1x1x32xf32> to vector<1x32xf32>
    %243 = vector.broadcast %242 : vector<1x32xf32> to vector<14x32xf32>
    %244 = arith.addf %240, %243 : vector<14x32xf32>
    %c0_106 = arith.constant 0 : index
    %c0_107 = arith.constant 0 : index
    %c0_108 = arith.constant 0 : index
    %245 = vector.load %arg23[%c0_106, %c0_107, %c0_108] : memref<1x2x32xf32, #tpu.memory_space<vmem>>, vector<1x2x32xf32>
    %246 = vector.shape_cast %245 : vector<1x2x32xf32> to vector<2x32xf32>
    %c0_109 = arith.constant 0 : index
    %c0_110 = arith.constant 0 : index
    %c0_111 = arith.constant 0 : index
    %247 = vector.load %arg24[%c0_109, %c0_110, %c0_111] : memref<1x32x128xf32, #tpu.memory_space<vmem>>, vector<1x32x128xf32>
    %248 = vector.shape_cast %247 : vector<1x32x128xf32> to vector<32x128xf32>
    %c0_112 = arith.constant 0 : index
    %c0_113 = arith.constant 0 : index
    %c0_114 = arith.constant 0 : index
    %249 = vector.load %arg25[%c0_112, %c0_113, %c0_114] : memref<1x1x128xf32, #tpu.memory_space<vmem>>, vector<1x1x128xf32>
    %250 = vector.shape_cast %249 : vector<1x1x128xf32> to vector<1x128xf32>
    %c0_115 = arith.constant 0 : index
    %c0_116 = arith.constant 0 : index
    %c0_117 = arith.constant 0 : index
    %251 = vector.load %arg26[%c0_115, %c0_116, %c0_117] : memref<1x128x32xf32, #tpu.memory_space<vmem>>, vector<1x128x32xf32>
    %252 = vector.shape_cast %251 : vector<1x128x32xf32> to vector<128x32xf32>
    %c0_118 = arith.constant 0 : index
    %c0_119 = arith.constant 0 : index
    %c0_120 = arith.constant 0 : index
    %253 = vector.load %arg27[%c0_118, %c0_119, %c0_120] : memref<1x1x32xf32, #tpu.memory_space<vmem>>, vector<1x1x32xf32>
    %254 = vector.shape_cast %253 : vector<1x1x32xf32> to vector<1x32xf32>
    %255 = vector.extract_strided_slice %246 {offsets = [0, 0], sizes = [1, 32], strides = [1, 1]} : vector<2x32xf32> to vector<1x32xf32>
    %256 = vector.extract_strided_slice %246 {offsets = [1, 0], sizes = [1, 32], strides = [1, 1]} : vector<2x32xf32> to vector<1x32xf32>
    %cst_121 = arith.constant dense<0.000000e+00> : vector<14xf32>
    %257 = vector.multi_reduction <add>, %244, %cst_121 [1] : vector<14x32xf32> to vector<14xf32>
    %258 = vector.shape_cast %257 : vector<14xf32> to vector<14x1xf32>
    %cst_122 = arith.constant 3.200000e+01 : f32
    %259 = vector.broadcast %cst_122 : f32 to vector<14x1xf32>
    %260 = arith.divf %258, %259 : vector<14x1xf32>
    %261 = vector.broadcast %260 : vector<14x1xf32> to vector<14x32xf32>
    %262 = arith.subf %244, %261 : vector<14x32xf32>
    %263 = arith.mulf %262, %262 : vector<14x32xf32>
    %cst_123 = arith.constant dense<0.000000e+00> : vector<14xf32>
    %264 = vector.multi_reduction <add>, %263, %cst_123 [1] : vector<14x32xf32> to vector<14xf32>
    %265 = vector.shape_cast %264 : vector<14xf32> to vector<14x1xf32>
    %cst_124 = arith.constant 3.200000e+01 : f32
    %266 = vector.broadcast %cst_124 : f32 to vector<14x1xf32>
    %267 = arith.divf %265, %266 : vector<14x1xf32>
    %268 = vector.broadcast %260 : vector<14x1xf32> to vector<14x32xf32>
    %269 = arith.subf %244, %268 : vector<14x32xf32>
    %cst_125 = arith.constant 9.99999974E-6 : f32
    %270 = vector.broadcast %cst_125 : f32 to vector<14x1xf32>
    %271 = arith.addf %267, %270 : vector<14x1xf32>
    %272 = math.rsqrt %271 : vector<14x1xf32>
    %273 = vector.broadcast %272 : vector<14x1xf32> to vector<14x32xf32>
    %274 = arith.mulf %269, %273 : vector<14x32xf32>
    %275 = vector.broadcast %255 : vector<1x32xf32> to vector<14x32xf32>
    %276 = arith.mulf %274, %275 : vector<14x32xf32>
    %277 = vector.broadcast %256 : vector<1x32xf32> to vector<14x32xf32>
    %278 = arith.addf %276, %277 : vector<14x32xf32>
    %cst_126 = arith.constant dense<0.000000e+00> : vector<14x128xf32>
    %279 = tpu.matmul %278, %248, %cst_126 {dimension_numbers = #tpu.dot_dimension_numbers<[1], [0], [0], [1], [0, 0, 1, 1], [], []>} : vector<14x32xf32>, vector<32x128xf32>, vector<14x128xf32> -> vector<14x128xf32>
    %280 = vector.broadcast %250 : vector<1x128xf32> to vector<14x128xf32>
    %281 = arith.addf %279, %280 : vector<14x128xf32>
    %282 = arith.negf %281 : vector<14x128xf32>
    %283 = math.exp %282 : vector<14x128xf32>
    %cst_127 = arith.constant 1.000000e+00 : f32
    %284 = vector.broadcast %cst_127 : f32 to vector<14x128xf32>
    %285 = arith.addf %284, %283 : vector<14x128xf32>
    %286 = arith.divf %284, %285 : vector<14x128xf32>
    %287 = arith.mulf %281, %286 : vector<14x128xf32>
    %cst_128 = arith.constant dense<0.000000e+00> : vector<14x32xf32>
    %288 = tpu.matmul %287, %252, %cst_128 {dimension_numbers = #tpu.dot_dimension_numbers<[1], [0], [0], [1], [0, 0, 1, 1], [], []>} : vector<14x128xf32>, vector<128x32xf32>, vector<14x32xf32> -> vector<14x32xf32>
    %289 = vector.broadcast %254 : vector<1x32xf32> to vector<14x32xf32>
    %290 = arith.addf %288, %289 : vector<14x32xf32>
    %cst_129 = arith.constant 5.000000e-01 : f32
    %291 = vector.broadcast %cst_129 : f32 to vector<14x32xf32>
    %292 = arith.mulf %291, %290 : vector<14x32xf32>
    %293 = arith.addf %244, %292 : vector<14x32xf32>
    %c0_130 = arith.constant 0 : index
    %c0_131 = arith.constant 0 : index
    %c0_132 = arith.constant 0 : index
    %294 = vector.load %arg28[%c0_130, %c0_131, %c0_132] : memref<1x2x32xf32, #tpu.memory_space<vmem>>, vector<1x2x32xf32>
    %295 = vector.shape_cast %294 : vector<1x2x32xf32> to vector<2x32xf32>
    %296 = vector.extract_strided_slice %295 {offsets = [0, 0], sizes = [1, 32], strides = [1, 1]} : vector<2x32xf32> to vector<1x32xf32>
    %297 = vector.extract_strided_slice %295 {offsets = [1, 0], sizes = [1, 32], strides = [1, 1]} : vector<2x32xf32> to vector<1x32xf32>
    %cst_133 = arith.constant dense<0.000000e+00> : vector<14xf32>
    %298 = vector.multi_reduction <add>, %293, %cst_133 [1] : vector<14x32xf32> to vector<14xf32>
    %299 = vector.shape_cast %298 : vector<14xf32> to vector<14x1xf32>
    %cst_134 = arith.constant 3.200000e+01 : f32
    %300 = vector.broadcast %cst_134 : f32 to vector<14x1xf32>
    %301 = arith.divf %299, %300 : vector<14x1xf32>
    %302 = vector.broadcast %301 : vector<14x1xf32> to vector<14x32xf32>
    %303 = arith.subf %293, %302 : vector<14x32xf32>
    %304 = arith.mulf %303, %303 : vector<14x32xf32>
    %cst_135 = arith.constant dense<0.000000e+00> : vector<14xf32>
    %305 = vector.multi_reduction <add>, %304, %cst_135 [1] : vector<14x32xf32> to vector<14xf32>
    %306 = vector.shape_cast %305 : vector<14xf32> to vector<14x1xf32>
    %cst_136 = arith.constant 3.200000e+01 : f32
    %307 = vector.broadcast %cst_136 : f32 to vector<14x1xf32>
    %308 = arith.divf %306, %307 : vector<14x1xf32>
    %309 = vector.broadcast %301 : vector<14x1xf32> to vector<14x32xf32>
    %310 = arith.subf %293, %309 : vector<14x32xf32>
    %cst_137 = arith.constant 9.99999974E-6 : f32
    %311 = vector.broadcast %cst_137 : f32 to vector<14x1xf32>
    %312 = arith.addf %308, %311 : vector<14x1xf32>
    %313 = math.rsqrt %312 : vector<14x1xf32>
    %314 = vector.broadcast %313 : vector<14x1xf32> to vector<14x32xf32>
    %315 = arith.mulf %310, %314 : vector<14x32xf32>
    %316 = vector.broadcast %296 : vector<1x32xf32> to vector<14x32xf32>
    %317 = arith.mulf %315, %316 : vector<14x32xf32>
    %318 = vector.broadcast %297 : vector<1x32xf32> to vector<14x32xf32>
    %319 = arith.addf %317, %318 : vector<14x32xf32>
    %c0_138 = arith.constant 0 : index
    %c0_139 = arith.constant 0 : index
    %320 = vector.load %arg30[%c0_138, %c0_139] : memref<14x32xf32, #tpu.memory_space<vmem>>, vector<14x32xf32>
    tpu.vector_store %arg30[%c0_138, %c0_139], %319 {strides = array<i32>} : memref<14x32xf32, #tpu.memory_space<vmem>>, vector<14x32xf32>,
    %c1_i32 = arith.constant 1 : i32
    %321 = arith.cmpi eq, %arg0, %c1_i32 : i32
    %322 = arith.extui %321 : i1 to i32
    %c0_i32_140 = arith.constant 0 : i32
    %323 = arith.cmpi ne, %322, %c0_i32_140 : i32
    scf.if %323 {
      %c0_141 = arith.constant 0 : index
      %c0_142 = arith.constant 0 : index
      %324 = vector.load %arg29[%c0_141, %c0_142] : memref<14x32xf32, #tpu.memory_space<vmem>>, vector<14x32xf32>
      tpu.vector_store %arg29[%c0_141, %c0_142], %319 {strides = array<i32>} : memref<14x32xf32, #tpu.memory_space<vmem>>, vector<14x32xf32>,
    } else {
    }
    return
  }
  func.func @transform_0(%arg0: i32) -> (i32, i32) {
    %c0_i32 = arith.constant 0 : i32
    %c0_i32_0 = arith.constant 0 : i32
    %c0_i32_1 = arith.constant 0 : i32
    return %c0_i32, %c0_i32_0 : i32, i32
  }
  func.func @transform_1(%arg0: i32) -> (i32, i32, i32) {
    %c0_i32 = arith.constant 0 : i32
    %c0_i32_0 = arith.constant 0 : i32
    %c0_i32_1 = arith.constant 0 : i32
    %c0_i32_2 = arith.constant 0 : i32
    return %c0_i32, %c0_i32_0, %c0_i32_1 : i32, i32, i32
  }
  func.func @transform_2(%arg0: i32) -> (i32, i32) {
    %c0_i32 = arith.constant 0 : i32
    %c0_i32_0 = arith.constant 0 : i32
    %c0_i32_1 = arith.constant 0 : i32
    return %c0_i32, %c0_i32_0 : i32, i32
  }
  func.func @transform_3(%arg0: i32) -> (i32, i32) {
    %c0_i32 = arith.constant 0 : i32
    %c0_i32_0 = arith.constant 0 : i32
    %c0_i32_1 = arith.constant 0 : i32
    return %c0_i32, %c0_i32_0 : i32, i32
  }
  func.func @transform_4(%arg0: i32) -> (i32, i32, i32) {
    %c0_i32 = arith.constant 0 : i32
    %c0_i32_0 = arith.constant 0 : i32
    %c0_i32_1 = arith.constant 0 : i32
    %c0_i32_2 = arith.constant 0 : i32
    return %c0_i32, %c0_i32_0, %c0_i32_1 : i32, i32, i32
  }
  func.func @transform_5(%arg0: i32) -> (i32, i32, i32) {
    %c0_i32 = arith.constant 0 : i32
    %c0_i32_0 = arith.constant 0 : i32
    %c0_i32_1 = arith.constant 0 : i32
    return %arg0, %c0_i32, %c0_i32_0 : i32, i32, i32
  }
  func.func @transform_6(%arg0: i32) -> (i32, i32, i32) {
    %c0_i32 = arith.constant 0 : i32
    %c0_i32_0 = arith.constant 0 : i32
    %c0_i32_1 = arith.constant 0 : i32
    return %arg0, %c0_i32, %c0_i32_0 : i32, i32, i32
  }
  func.func @transform_7(%arg0: i32) -> (i32, i32, i32) {
    %c0_i32 = arith.constant 0 : i32
    %c0_i32_0 = arith.constant 0 : i32
    %c0_i32_1 = arith.constant 0 : i32
    return %arg0, %c0_i32, %c0_i32_0 : i32, i32, i32
  }
  func.func @transform_8(%arg0: i32) -> (i32, i32, i32) {
    %c0_i32 = arith.constant 0 : i32
    %c0_i32_0 = arith.constant 0 : i32
    %c0_i32_1 = arith.constant 0 : i32
    return %arg0, %c0_i32, %c0_i32_0 : i32, i32, i32
  }
  func.func @transform_9(%arg0: i32) -> (i32, i32, i32) {
    %c0_i32 = arith.constant 0 : i32
    %c0_i32_0 = arith.constant 0 : i32
    %c0_i32_1 = arith.constant 0 : i32
    return %arg0, %c0_i32, %c0_i32_0 : i32, i32, i32
  }
  func.func @transform_10(%arg0: i32) -> (i32, i32, i32) {
    %c0_i32 = arith.constant 0 : i32
    %c0_i32_0 = arith.constant 0 : i32
    %c0_i32_1 = arith.constant 0 : i32
    return %arg0, %c0_i32, %c0_i32_0 : i32, i32, i32
  }
  func.func @transform_11(%arg0: i32) -> (i32, i32, i32) {
    %c0_i32 = arith.constant 0 : i32
    %c0_i32_0 = arith.constant 0 : i32
    %c0_i32_1 = arith.constant 0 : i32
    return %arg0, %c0_i32, %c0_i32_0 : i32, i32, i32
  }
  func.func @transform_12(%arg0: i32) -> (i32, i32, i32) {
    %c0_i32 = arith.constant 0 : i32
    %c0_i32_0 = arith.constant 0 : i32
    %c0_i32_1 = arith.constant 0 : i32
    return %arg0, %c0_i32, %c0_i32_0 : i32, i32, i32
  }
  func.func @transform_13(%arg0: i32) -> (i32, i32, i32) {
    %c0_i32 = arith.constant 0 : i32
    %c0_i32_0 = arith.constant 0 : i32
    %c0_i32_1 = arith.constant 0 : i32
    return %arg0, %c0_i32, %c0_i32_0 : i32, i32, i32
  }
  func.func @transform_14(%arg0: i32) -> (i32, i32, i32) {
    %c0_i32 = arith.constant 0 : i32
    %c0_i32_0 = arith.constant 0 : i32
    %c0_i32_1 = arith.constant 0 : i32
    return %arg0, %c0_i32, %c0_i32_0 : i32, i32, i32
  }
  func.func @transform_15(%arg0: i32) -> (i32, i32, i32) {
    %c0_i32 = arith.constant 0 : i32
    %c0_i32_0 = arith.constant 0 : i32
    %c0_i32_1 = arith.constant 0 : i32
    return %arg0, %c0_i32, %c0_i32_0 : i32, i32, i32
  }
  func.func @transform_16(%arg0: i32) -> (i32, i32, i32) {
    %c0_i32 = arith.constant 0 : i32
    %c0_i32_0 = arith.constant 0 : i32
    %c0_i32_1 = arith.constant 0 : i32
    return %arg0, %c0_i32, %c0_i32_0 : i32, i32, i32
  }
  func.func @transform_17(%arg0: i32) -> (i32, i32, i32) {
    %c0_i32 = arith.constant 0 : i32
    %c0_i32_0 = arith.constant 0 : i32
    %c0_i32_1 = arith.constant 0 : i32
    return %arg0, %c0_i32, %c0_i32_0 : i32, i32, i32
  }
  func.func @transform_18(%arg0: i32) -> (i32, i32, i32) {
    %c0_i32 = arith.constant 0 : i32
    %c0_i32_0 = arith.constant 0 : i32
    %c0_i32_1 = arith.constant 0 : i32
    return %arg0, %c0_i32, %c0_i32_0 : i32, i32, i32
  }
  func.func @transform_19(%arg0: i32) -> (i32, i32, i32) {
    %c0_i32 = arith.constant 0 : i32
    %c0_i32_0 = arith.constant 0 : i32
    %c0_i32_1 = arith.constant 0 : i32
    return %arg0, %c0_i32, %c0_i32_0 : i32, i32, i32
  }
  func.func @transform_20(%arg0: i32) -> (i32, i32, i32) {
    %c0_i32 = arith.constant 0 : i32
    %c0_i32_0 = arith.constant 0 : i32
    %c0_i32_1 = arith.constant 0 : i32
    return %arg0, %c0_i32, %c0_i32_0 : i32, i32, i32
  }
  func.func @transform_21(%arg0: i32) -> (i32, i32, i32) {
    %c0_i32 = arith.constant 0 : i32
    %c0_i32_0 = arith.constant 0 : i32
    %c0_i32_1 = arith.constant 0 : i32
    return %arg0, %c0_i32, %c0_i32_0 : i32, i32, i32
  }
  func.func @transform_22(%arg0: i32) -> (i32, i32, i32) {
    %c0_i32 = arith.constant 0 : i32
    %c0_i32_0 = arith.constant 0 : i32
    %c0_i32_1 = arith.constant 0 : i32
    return %arg0, %c0_i32, %c0_i32_0 : i32, i32, i32
  }
  func.func @transform_23(%arg0: i32) -> (i32, i32, i32) {
    %c0_i32 = arith.constant 0 : i32
    %c0_i32_0 = arith.constant 0 : i32
    %c0_i32_1 = arith.constant 0 : i32
    return %arg0, %c0_i32, %c0_i32_0 : i32, i32, i32
  }
  func.func @transform_24(%arg0: i32) -> (i32, i32, i32) {
    %c0_i32 = arith.constant 0 : i32
    %c0_i32_0 = arith.constant 0 : i32
    %c0_i32_1 = arith.constant 0 : i32
    return %arg0, %c0_i32, %c0_i32_0 : i32, i32, i32
  }
  func.func @transform_25(%arg0: i32) -> (i32, i32, i32) {
    %c0_i32 = arith.constant 0 : i32
    %c0_i32_0 = arith.constant 0 : i32
    %c0_i32_1 = arith.constant 0 : i32
    return %arg0, %c0_i32, %c0_i32_0 : i32, i32, i32
  }
  func.func @transform_26(%arg0: i32) -> (i32, i32, i32) {
    %c0_i32 = arith.constant 0 : i32
    %c0_i32_0 = arith.constant 0 : i32
    %c0_i32_1 = arith.constant 0 : i32
    return %arg0, %c0_i32, %c0_i32_0 : i32, i32, i32
  }
  func.func @transform_27(%arg0: i32) -> (i32, i32, i32) {
    %c0_i32 = arith.constant 0 : i32
    %c0_i32_0 = arith.constant 0 : i32
    %c0_i32_1 = arith.constant 0 : i32
    return %arg0, %c0_i32, %c0_i32_0 : i32, i32, i32
  }
  func.func @transform_28(%arg0: i32) -> (i32, i32) {
    %c0_i32 = arith.constant 0 : i32
    %c0_i32_0 = arith.constant 0 : i32
    %c0_i32_1 = arith.constant 0 : i32
    return %c0_i32, %c0_i32_0 : i32, i32
  }
}

</mosaic_0001>

<llo_original>
// kernel: conformer_model.4
$region0: #{conformer_model.4}
  #allocation0 [shape = 'u32[]', space=smem, size = 0x4, offset = 0x4, fixed_abs, tag = 'smem constant byte address 0x4 - core index']
  #allocation1 [shape = 'u32[144,128]{1,0:T(1,128)}', space=vmem, size = 0x12000, scoped, tag = 'internal scratch']
  %s0 = inlined_call_operand.vmem [shape: f32[456,9], index: 0, kind: input, shape index: {}]
  %s1 = inlined_call_operand.vmem [shape: f32[9,32], index: 1, kind: input, shape index: {}]
  %s2 = inlined_call_operand.vmem [shape: f32[1,32], index: 2, kind: input, shape index: {}]
  %s3 = inlined_call_operand.vmem [shape: f32[456,32], index: 3, kind: output, shape index: {}]
  %s4 = sld [smem:[#allocation0]]
  $region22: #{conformer_model.4} parent=0
    _
  %s6 = ssub.s32 1, %s4
  %s7 = scalar_select 0, %s6, %s4
  // Predicated region
  $region2: #{conformer_model.4} parent=0 // pred_check
    _
  $region3: #{conformer_model.4} parent=0 // pred_check_branch
    %9 = sbr.rel (0) target = $region5
  $region4: #{conformer_model.4} parent=0 // pred_region
    _
  $region5: #{conformer_model.4} parent=0 // pred_fallthru
    _
  // Predicated region
  $region6: #{conformer_model.4} parent=0 // pred_check
    _
  $region7: #{conformer_model.4} parent=0 // pred_check_branch
    %11 = sbr.rel (0) target = $region9
  $region8: #{conformer_model.4} parent=0 // pred_region
    _
  $region9: #{conformer_model.4} parent=0 // pred_fallthru
    _
  // Predicated region
  $region10: #{conformer_model.4} parent=0 // pred_check
    _
  $region11: #{conformer_model.4} parent=0 // pred_check_branch
    %13 = sbr.rel (0) target = $region13
  $region12: #{conformer_model.4} parent=0 // pred_region
    _
  $region13: #{conformer_model.4} parent=0 // pred_fallthru
    _
  %v14 = vld [vmem:[%s0] sm:$0xff]
  %v15 = vld [vmem:[%s0 + $0x8] sm:$0xff]
  %v16 = vld [vmem:[%s0 + $0x10] sm:$0xff]
  %v17 = vld [vmem:[%s0 + $0x18] sm:$0xff]
  %v18 = vld [vmem:[%s0 + $0x20] sm:$0xff]
  %v19 = vld [vmem:[%s0 + $0x28] sm:$0xff]
  %v20 = vld [vmem:[%s0 + $0x30] sm:$0xff]
  %v21 = vld [vmem:[%s0 + $0x38] sm:$0xff]
  %v22 = vld [vmem:[%s0 + $0x40] sm:$0xff]
  %v23 = vld [vmem:[%s0 + $0x48] sm:$0xff]
  %v24 = vld [vmem:[%s0 + $0x50] sm:$0xff]
  %v25 = vld [vmem:[%s0 + $0x58] sm:$0xff]
  %v26 = vld [vmem:[%s0 + $0x60] sm:$0xff]
  %v27 = vld [vmem:[%s0 + $0x68] sm:$0xff]
  %v28 = vld [vmem:[%s0 + $0x70] sm:$0xff]
  %v29 = vld [vmem:[%s0 + $0x78] sm:$0xff]
  %v30 = vld [vmem:[%s0 + $0x80] sm:$0xff]
  %v31 = vld [vmem:[%s0 + $0x88] sm:$0xff]
  %v32 = vld [vmem:[%s0 + $0x90] sm:$0xff]
  %v33 = vld [vmem:[%s0 + $0x98] sm:$0xff]
  %v34 = vld [vmem:[%s0 + $0xa0] sm:$0xff]
  %v35 = vld [vmem:[%s0 + $0xa8] sm:$0xff]
  %v36 = vld [vmem:[%s0 + $0xb0] sm:$0xff]
  %v37 = vld [vmem:[%s0 + $0xb8] sm:$0xff]
  %v38 = vld [vmem:[%s0 + $0xc0] sm:$0xff]
  %v39 = vld [vmem:[%s0 + $0xc8] sm:$0xff]
  %v40 = vld [vmem:[%s0 + $0xd0] sm:$0xff]
  %v41 = vld [vmem:[%s0 + $0xd8] sm:$0xff]
  %v42 = vld [vmem:[%s0 + $0xe0] sm:$0xff]
  %v43 = vld [vmem:[%s0 + $0xe8] sm:$0xff]
  %v44 = vld [vmem:[%s0 + $0xf0] sm:$0xff]
  %v45 = vld [vmem:[%s0 + $0xf8] sm:$0xff]
  %v46 = vld [vmem:[%s0 + $0x100] sm:$0xff]
  %v47 = vld [vmem:[%s0 + $0x108] sm:$0xff]
  %v48 = vld [vmem:[%s0 + $0x110] sm:$0xff]
  %v49 = vld [vmem:[%s0 + $0x118] sm:$0xff]
  %v50 = vld [vmem:[%s0 + $0x120] sm:$0xff]
  %v51 = vld [vmem:[%s0 + $0x128] sm:$0xff]
  %v52 = vld [vmem:[%s0 + $0x130] sm:$0xff]
  %v53 = vld [vmem:[%s0 + $0x138] sm:$0xff]
  %v54 = vld [vmem:[%s0 + $0x140] sm:$0xff]
  %v55 = vld [vmem:[%s0 + $0x148] sm:$0xff]
  %v56 = vld [vmem:[%s0 + $0x150] sm:$0xff]
  %v57 = vld [vmem:[%s0 + $0x158] sm:$0xff]
  %v58 = vld [vmem:[%s0 + $0x160] sm:$0xff]
  %v59 = vld [vmem:[%s0 + $0x168] sm:$0xff]
  %v60 = vld [vmem:[%s0 + $0x170] sm:$0xff]
  %v61 = vld [vmem:[%s0 + $0x178] sm:$0xff]
  %v62 = vld [vmem:[%s0 + $0x180] sm:$0xff]
  %v63 = vld [vmem:[%s0 + $0x188] sm:$0xff]
  %v64 = vld [vmem:[%s0 + $0x190] sm:$0xff]
  %v65 = vld [vmem:[%s0 + $0x198] sm:$0xff]
  %v66 = vld [vmem:[%s0 + $0x1a0] sm:$0xff]
  %v67 = vld [vmem:[%s0 + $0x1a8] sm:$0xff]
  %v68 = vld [vmem:[%s0 + $0x1b0] sm:$0xff]
  %v69 = vld [vmem:[%s0 + $0x1b8] sm:$0xff]
  %v70 = vld [vmem:[%s0 + $0x1c0] sm:$0xff]
  %v71 = vld [vmem:[%s1] sm:$0xff]
  %v72 = vld [vmem:[%s1 + $0x8] sm:$0x1]
  %v73 = vld [vmem:[%s2] sm:$0x1]
  %v75 = vlaneseq
  %v76 = vshrl.u32 %v75, 7
  %v77 = vsub.s32 0, %v76
  %v78 = vrot.slane %v73, %v77
  %vm80 = vcmask 72704
  %v82 = vsel %vm80, %v14, 0
  %v85 = vsel %vm80, %v15, 0
  %v88 = vsel %vm80, %v16, 0
  %v91 = vsel %vm80, %v17, 0
  %v94 = vsel %vm80, %v18, 0
  %v97 = vsel %vm80, %v19, 0
  %v100 = vsel %vm80, %v20, 0
  %v103 = vsel %vm80, %v21, 0
  %v106 = vsel %vm80, %v22, 0
  %v109 = vsel %vm80, %v23, 0
  %v112 = vsel %vm80, %v24, 0
  %v115 = vsel %vm80, %v25, 0
  %v118 = vsel %vm80, %v26, 0
  %v121 = vsel %vm80, %v27, 0
  %v124 = vsel %vm80, %v28, 0
  %v127 = vsel %vm80, %v29, 0
  %v130 = vsel %vm80, %v30, 0
  %v133 = vsel %vm80, %v31, 0
  %v136 = vsel %vm80, %v32, 0
  %v139 = vsel %vm80, %v33, 0
  %v142 = vsel %vm80, %v34, 0
  %v145 = vsel %vm80, %v35, 0
  %v148 = vsel %vm80, %v36, 0
  %v151 = vsel %vm80, %v37, 0
  %v154 = vsel %vm80, %v38, 0
  %v157 = vsel %vm80, %v39, 0
  %v160 = vsel %vm80, %v40, 0
  %v163 = vsel %vm80, %v41, 0
  %v166 = vsel %vm80, %v42, 0
  %v169 = vsel %vm80, %v43, 0
  %v172 = vsel %vm80, %v44, 0
  %v175 = vsel %vm80, %v45, 0
  %v178 = vsel %vm80, %v46, 0
  %v181 = vsel %vm80, %v47, 0
  %v184 = vsel %vm80, %v48, 0
  %v187 = vsel %vm80, %v49, 0
  %v190 = vsel %vm80, %v50, 0
  %v193 = vsel %vm80, %v51, 0
  %v196 = vsel %vm80, %v52, 0
  %v199 = vsel %vm80, %v53, 0
  %v202 = vsel %vm80, %v54, 0
  %v205 = vsel %vm80, %v55, 0
  %v208 = vsel %vm80, %v56, 0
  %v211 = vsel %vm80, %v57, 0
  %v214 = vsel %vm80, %v58, 0
  %v217 = vsel %vm80, %v59, 0
  %v220 = vsel %vm80, %v60, 0
  %v223 = vsel %vm80, %v61, 0
  %v226 = vsel %vm80, %v62, 0
  %v229 = vsel %vm80, %v63, 0
  %v232 = vsel %vm80, %v64, 0
  %v235 = vsel %vm80, %v65, 0
  %v238 = vsel %vm80, %v66, 0
  %v241 = vsel %vm80, %v67, 0
  %v244 = vsel %vm80, %v68, 0
  %v247 = vsel %vm80, %v69, 0
  %v250 = vsel %vm80, %v70, 0
  %vm252 = vcmask 1040384
  %v254 = vsel %vm252, %v72, 0
  %256 = vmatprep.subr.mxu0 0.0
  %257 = vmatpush1.msra.mxu0 %v71
  %258 = vmatprep.subr.mxu0 0.0
  %259 = vmatpush1.msra.mxu0 %v254
  %260 = vmatprep.subr.mxu0 0.0
  %261 = vmatpush1.msra.mxu0 0.0
  %262 = vmatprep.subr.mxu0 0.0
  %263 = vmatpush1.msra.mxu0 0.0
  %264 = vmatprep.subr.mxu0 0.0
  %265 = vmatpush1.msra.mxu0 0.0
  %266 = vmatprep.subr.mxu0 0.0
  %267 = vmatpush1.msra.mxu0 0.0
  %268 = vmatprep.subr.mxu0 0.0
  %269 = vmatpush1.msra.mxu0 0.0
  %270 = vmatprep.subr.mxu0 0.0
  %271 = vmatpush1.msra.mxu0 0.0
  %272 = vmatprep.subr.mxu0 0.0
  %273 = vmatpush1.msra.mxu0 0.0
  %274 = vmatprep.subr.mxu0 0.0
  %275 = vmatpush1.msra.mxu0 0.0
  %276 = vmatprep.subr.mxu0 0.0
  %277 = vmatpush1.msra.mxu0 0.0
  %278 = vmatprep.subr.mxu0 0.0
  %279 = vmatpush1.msra.mxu0 0.0
  %280 = vmatprep.subr.mxu0 0.0
  %281 = vmatpush1.msra.mxu0 0.0
  %282 = vmatprep.subr.mxu0 0.0
  %283 = vmatpush1.msra.mxu0 0.0
  %284 = vmatprep.subr.mxu0 0.0
  %285 = vmatpush1.msra.mxu0 0.0
  %286 = vmatprep.subr.mxu0 0.0
  %287 = vmatpush1.msra.mxu0 0.0
  %288 = vmatprep.subr.mxu0 0.0
  %289 = vmatpush1.msra.mxu0 0.0
  %290 = vmatprep.subr.mxu0 0.0
  %291 = vmatpush1.msra.mxu0 0.0
  %292 = vmatprep.subr.mxu0 0.0
  %293 = vmatpush1.msra.mxu0 0.0
  %294 = vmatprep.subr.mxu0 0.0
  %295 = vmatpush1.msra.mxu0 0.0
  %296 = vmatprep.subr.mxu0 0.0
  %297 = vmatpush1.msra.mxu0 0.0
  %298 = vmatprep.subr.mxu0 0.0
  %299 = vmatpush1.msra.mxu0 0.0
  %300 = vmatprep.subr.mxu0 0.0
  %301 = vmatpush1.msra.mxu0 0.0
  %302 = vmatprep.subr.mxu0 0.0
  %303 = vmatpush1.msra.mxu0 0.0
  %304 = vmatprep.subr.mxu0 0.0
  %305 = vmatpush1.msra.mxu0 0.0
  %306 = vmatprep.subr.mxu0 0.0
  %307 = vmatpush1.msra.mxu0 0.0
  %308 = vmatprep.subr.mxu0 0.0
  %309 = vmatpush1.msra.mxu0 0.0
  %310 = vmatprep.subr.mxu0 0.0
  %311 = vmatpush1.msra.mxu0 0.0
  %312 = vmatprep.subr.mxu0 0.0
  %313 = vmatpush1.msra.mxu0 0.0
  %314 = vmatprep.subr.mxu0 0.0
  %315 = vmatpush1.msra.mxu0 0.0
  %316 = vmatprep.subr.mxu0 0.0
  %317 = vmatpush1.msra.mxu0 0.0
  %318 = vmatprep.subr.mxu0 0.0
  %319 = vmatpush1.msra.mxu0 0.0
  %320 = vmatprep.mubr.f32.mxu0 0.0
  %321 = vmatmul.mubr.f32.gmra.mrb[0].mxu0 %v82
  %v322 = vpop.f32.mrb[0].mxu0
  %v323 = vadd.f32 %v78, %v322
  %v324 = vpop.f32.mrb[0].mxu0
  %325 = vmatprep.mubr.f32.mxu0 0.0
  %326 = vmatmul.mubr.f32.gmra.mrb[0].mxu0 %v85
  %v327 = vpop.f32.mrb[0].mxu0
  %v328 = vadd.f32 %v78, %v327
  %v329 = vpop.f32.mrb[0].mxu0
  %330 = vmatprep.mubr.f32.mxu0 0.0
  %331 = vmatmul.mubr.f32.gmra.mrb[0].mxu0 %v88
  %v332 = vpop.f32.mrb[0].mxu0
  %v333 = vadd.f32 %v78, %v332
  %v334 = vpop.f32.mrb[0].mxu0
  %335 = vmatprep.mubr.f32.mxu0 0.0
  %336 = vmatmul.mubr.f32.gmra.mrb[0].mxu0 %v91
  %v337 = vpop.f32.mrb[0].mxu0
  %v338 = vadd.f32 %v78, %v337
  %v339 = vpop.f32.mrb[0].mxu0
  %340 = vmatprep.mubr.f32.mxu0 0.0
  %341 = vmatmul.mubr.f32.gmra.mrb[0].mxu0 %v94
  %v342 = vpop.f32.mrb[0].mxu0
  %v343 = vadd.f32 %v78, %v342
  %v344 = vpop.f32.mrb[0].mxu0
  %345 = vmatprep.mubr.f32.mxu0 0.0
  %346 = vmatmul.mubr.f32.gmra.mrb[0].mxu0 %v97
  %v347 = vpop.f32.mrb[0].mxu0
  %v348 = vadd.f32 %v78, %v347
  %v349 = vpop.f32.mrb[0].mxu0
  %350 = vmatprep.mubr.f32.mxu0 0.0
  %351 = vmatmul.mubr.f32.gmra.mrb[0].mxu0 %v100
  %v352 = vpop.f32.mrb[0].mxu0
  %v353 = vadd.f32 %v78, %v352
  %v354 = vpop.f32.mrb[0].mxu0
  %355 = vmatprep.mubr.f32.mxu0 0.0
  %356 = vmatmul.mubr.f32.gmra.mrb[0].mxu0 %v103
  %v357 = vpop.f32.mrb[0].mxu0
  %v358 = vadd.f32 %v78, %v357
  %v359 = vpop.f32.mrb[0].mxu0
  %360 = vmatprep.mubr.f32.mxu0 0.0
  %361 = vmatmul.mubr.f32.gmra.mrb[0].mxu0 %v106
  %v362 = vpop.f32.mrb[0].mxu0
  %v363 = vadd.f32 %v78, %v362
  %v364 = vpop.f32.mrb[0].mxu0
  %365 = vmatprep.mubr.f32.mxu0 0.0
  %366 = vmatmul.mubr.f32.gmra.mrb[0].mxu0 %v109
  %v367 = vpop.f32.mrb[0].mxu0
  %v368 = vadd.f32 %v78, %v367
  %v369 = vpop.f32.mrb[0].mxu0
  %370 = vmatprep.mubr.f32.mxu0 0.0
  %371 = vmatmul.mubr.f32.gmra.mrb[0].mxu0 %v112
  %v372 = vpop.f32.mrb[0].mxu0
  %v373 = vadd.f32 %v78, %v372
  %v374 = vpop.f32.mrb[0].mxu0
  %375 = vmatprep.mubr.f32.mxu0 0.0
  %376 = vmatmul.mubr.f32.gmra.mrb[0].mxu0 %v115
  %v377 = vpop.f32.mrb[0].mxu0
  %v378 = vadd.f32 %v78, %v377
  %v379 = vpop.f32.mrb[0].mxu0
  %380 = vmatprep.mubr.f32.mxu0 0.0
  %381 = vmatmul.mubr.f32.gmra.mrb[0].mxu0 %v118
  %v382 = vpop.f32.mrb[0].mxu0
  %v383 = vadd.f32 %v78, %v382
  %v384 = vpop.f32.mrb[0].mxu0
  %385 = vmatprep.mubr.f32.mxu0 0.0
  %386 = vmatmul.mubr.f32.gmra.mrb[0].mxu0 %v121
  %v387 = vpop.f32.mrb[0].mxu0
  %v388 = vadd.f32 %v78, %v387
  %v389 = vpop.f32.mrb[0].mxu0
  %390 = vmatprep.mubr.f32.mxu0 0.0
  %391 = vmatmul.mubr.f32.gmra.mrb[0].mxu0 %v124
  %v392 = vpop.f32.mrb[0].mxu0
  %v393 = vadd.f32 %v78, %v392
  %v394 = vpop.f32.mrb[0].mxu0
  %395 = vmatprep.mubr.f32.mxu0 0.0
  %396 = vmatmul.mubr.f32.gmra.mrb[0].mxu0 %v127
  %v397 = vpop.f32.mrb[0].mxu0
  %v398 = vadd.f32 %v78, %v397
  %v399 = vpop.f32.mrb[0].mxu0
  %400 = vmatprep.mubr.f32.mxu0 0.0
  %401 = vmatmul.mubr.f32.gmra.mrb[0].mxu0 %v130
  %v402 = vpop.f32.mrb[0].mxu0
  %v403 = vadd.f32 %v78, %v402
  %v404 = vpop.f32.mrb[0].mxu0
  %405 = vmatprep.mubr.f32.mxu0 0.0
  %406 = vmatmul.mubr.f32.gmra.mrb[0].mxu0 %v133
  %v407 = vpop.f32.mrb[0].mxu0
  %v408 = vadd.f32 %v78, %v407
  %v409 = vpop.f32.mrb[0].mxu0
  %410 = vmatprep.mubr.f32.mxu0 0.0
  %411 = vmatmul.mubr.f32.gmra.mrb[0].mxu0 %v136
  %v412 = vpop.f32.mrb[0].mxu0
  %v413 = vadd.f32 %v78, %v412
  %v414 = vpop.f32.mrb[0].mxu0
  %415 = vmatprep.mubr.f32.mxu0 0.0
  %416 = vmatmul.mubr.f32.gmra.mrb[0].mxu0 %v139
  %v417 = vpop.f32.mrb[0].mxu0
  %v418 = vadd.f32 %v78, %v417
  %v419 = vpop.f32.mrb[0].mxu0
  %420 = vmatprep.mubr.f32.mxu0 0.0
  %421 = vmatmul.mubr.f32.gmra.mrb[0].mxu0 %v142
  %v422 = vpop.f32.mrb[0].mxu0
  %v423 = vadd.f32 %v78, %v422
  %v424 = vpop.f32.mrb[0].mxu0
  %425 = vmatprep.mubr.f32.mxu0 0.0
  %426 = vmatmul.mubr.f32.gmra.mrb[0].mxu0 %v145
  %v427 = vpop.f32.mrb[0].mxu0
  %v428 = vadd.f32 %v78, %v427
  %v429 = vpop.f32.mrb[0].mxu0
  %430 = vmatprep.mubr.f32.mxu0 0.0
  %431 = vmatmul.mubr.f32.gmra.mrb[0].mxu0 %v148
  %v432 = vpop.f32.mrb[0].mxu0
  %v433 = vadd.f32 %v78, %v432
  %v434 = vpop.f32.mrb[0].mxu0
  %435 = vmatprep.mubr.f32.mxu0 0.0
  %436 = vmatmul.mubr.f32.gmra.mrb[0].mxu0 %v151
  %v437 = vpop.f32.mrb[0].mxu0
  %v438 = vadd.f32 %v78, %v437
  %v439 = vpop.f32.mrb[0].mxu0
  %440 = vmatprep.mubr.f32.mxu0 0.0
  %441 = vmatmul.mubr.f32.gmra.mrb[0].mxu0 %v154
  %v442 = vpop.f32.mrb[0].mxu0
  %v443 = vadd.f32 %v78, %v442
  %v444 = vpop.f32.mrb[0].mxu0
  %445 = vmatprep.mubr.f32.mxu0 0.0
  %446 = vmatmul.mubr.f32.gmra.mrb[0].mxu0 %v157
  %v447 = vpop.f32.mrb[0].mxu0
  %v448 = vadd.f32 %v78, %v447
  %v449 = vpop.f32.mrb[0].mxu0
  %450 = vmatprep.mubr.f32.mxu0 0.0
  %451 = vmatmul.mubr.f32.gmra.mrb[0].mxu0 %v160
  %v452 = vpop.f32.mrb[0].mxu0
  %v453 = vadd.f32 %v78, %v452
  %v454 = vpop.f32.mrb[0].mxu0
  %455 = vmatprep.mubr.f32.mxu0 0.0
  %456 = vmatmul.mubr.f32.gmra.mrb[0].mxu0 %v163
  %v457 = vpop.f32.mrb[0].mxu0
  %v458 = vadd.f32 %v78, %v457
  %v459 = vpop.f32.mrb[0].mxu0
  %460 = vmatprep.mubr.f32.mxu0 0.0
  %461 = vmatmul.mubr.f32.gmra.mrb[0].mxu0 %v166
  %v462 = vpop.f32.mrb[0].mxu0
  %v463 = vadd.f32 %v78, %v462
  %v464 = vpop.f32.mrb[0].mxu0
  %465 = vmatprep.mubr.f32.mxu0 0.0
  %466 = vmatmul.mubr.f32.gmra.mrb[0].mxu0 %v169
  %v467 = vpop.f32.mrb[0].mxu0
  %v468 = vadd.f32 %v78, %v467
  %v469 = vpop.f32.mrb[0].mxu0
  %470 = vmatprep.mubr.f32.mxu0 0.0
  %471 = vmatmul.mubr.f32.gmra.mrb[0].mxu0 %v172
  %v472 = vpop.f32.mrb[0].mxu0
  %v473 = vadd.f32 %v78, %v472
  %v474 = vpop.f32.mrb[0].mxu0
  %475 = vmatprep.mubr.f32.mxu0 0.0
  %476 = vmatmul.mubr.f32.gmra.mrb[0].mxu0 %v175
  %v477 = vpop.f32.mrb[0].mxu0
  %v478 = vadd.f32 %v78, %v477
  %v479 = vpop.f32.mrb[0].mxu0
  %480 = vmatprep.mubr.f32.mxu0 0.0
  %481 = vmatmul.mubr.f32.gmra.mrb[0].mxu0 %v178
  %v482 = vpop.f32.mrb[0].mxu0
  %v483 = vadd.f32 %v78, %v482
  %v484 = vpop.f32.mrb[0].mxu0
  %485 = vmatprep.mubr.f32.mxu0 0.0
  %486 = vmatmul.mubr.f32.gmra.mrb[0].mxu0 %v181
  %v487 = vpop.f32.mrb[0].mxu0
  %v488 = vadd.f32 %v78, %v487
  %v489 = vpop.f32.mrb[0].mxu0
  %490 = vmatprep.mubr.f32.mxu0 0.0
  %491 = vmatmul.mubr.f32.gmra.mrb[0].mxu0 %v184
  %v492 = vpop.f32.mrb[0].mxu0
  %v493 = vadd.f32 %v78, %v492
  %v494 = vpop.f32.mrb[0].mxu0
  %495 = vmatprep.mubr.f32.mxu0 0.0
  %496 = vmatmul.mubr.f32.gmra.mrb[0].mxu0 %v187
  %v497 = vpop.f32.mrb[0].mxu0
  %v498 = vadd.f32 %v78, %v497
  %v499 = vpop.f32.mrb[0].mxu0
  %500 = vmatprep.mubr.f32.mxu0 0.0
  %501 = vmatmul.mubr.f32.gmra.mrb[0].mxu0 %v190
  %v502 = vpop.f32.mrb[0].mxu0
  %v503 = vadd.f32 %v78, %v502
  %v504 = vpop.f32.mrb[0].mxu0
  %505 = vmatprep.mubr.f32.mxu0 0.0
  %506 = vmatmul.mubr.f32.gmra.mrb[0].mxu0 %v193
  %v507 = vpop.f32.mrb[0].mxu0
  %v508 = vadd.f32 %v78, %v507
  %v509 = vpop.f32.mrb[0].mxu0
  %510 = vmatprep.mubr.f32.mxu0 0.0
  %511 = vmatmul.mubr.f32.gmra.mrb[0].mxu0 %v196
  %v512 = vpop.f32.mrb[0].mxu0
  %v513 = vadd.f32 %v78, %v512
  %v514 = vpop.f32.mrb[0].mxu0
  %515 = vmatprep.mubr.f32.mxu0 0.0
  %516 = vmatmul.mubr.f32.gmra.mrb[0].mxu0 %v199
  %v517 = vpop.f32.mrb[0].mxu0
  %v518 = vadd.f32 %v78, %v517
  %v519 = vpop.f32.mrb[0].mxu0
  %520 = vmatprep.mubr.f32.mxu0 0.0
  %521 = vmatmul.mubr.f32.gmra.mrb[0].mxu0 %v202
  %v522 = vpop.f32.mrb[0].mxu0
  %v523 = vadd.f32 %v78, %v522
  %v524 = vpop.f32.mrb[0].mxu0
  %525 = vmatprep.mubr.f32.mxu0 0.0
  %526 = vmatmul.mubr.f32.gmra.mrb[0].mxu0 %v205
  %v527 = vpop.f32.mrb[0].mxu0
  %v528 = vadd.f32 %v78, %v527
  %v529 = vpop.f32.mrb[0].mxu0
  %530 = vmatprep.mubr.f32.mxu0 0.0
  %531 = vmatmul.mubr.f32.gmra.mrb[0].mxu0 %v208
  %v532 = vpop.f32.mrb[0].mxu0
  %v533 = vadd.f32 %v78, %v532
  %v534 = vpop.f32.mrb[0].mxu0
  %535 = vmatprep.mubr.f32.mxu0 0.0
  %536 = vmatmul.mubr.f32.gmra.mrb[0].mxu0 %v211
  %v537 = vpop.f32.mrb[0].mxu0
  %v538 = vadd.f32 %v78, %v537
  %v539 = vpop.f32.mrb[0].mxu0
  %540 = vmatprep.mubr.f32.mxu0 0.0
  %541 = vmatmul.mubr.f32.gmra.mrb[0].mxu0 %v214
  %v542 = vpop.f32.mrb[0].mxu0
  %v543 = vadd.f32 %v78, %v542
  %v544 = vpop.f32.mrb[0].mxu0
  %545 = vmatprep.mubr.f32.mxu0 0.0
  %546 = vmatmul.mubr.f32.gmra.mrb[0].mxu0 %v217
  %v547 = vpop.f32.mrb[0].mxu0
  %v548 = vadd.f32 %v78, %v547
  %v549 = vpop.f32.mrb[0].mxu0
  %550 = vmatprep.mubr.f32.mxu0 0.0
  %551 = vmatmul.mubr.f32.gmra.mrb[0].mxu0 %v220
  %v552 = vpop.f32.mrb[0].mxu0
  %v553 = vadd.f32 %v78, %v552
  %v554 = vpop.f32.mrb[0].mxu0
  %555 = vmatprep.mubr.f32.mxu0 0.0
  %556 = vmatmul.mubr.f32.gmra.mrb[0].mxu0 %v223
  %v557 = vpop.f32.mrb[0].mxu0
  %v558 = vadd.f32 %v78, %v557
  %v559 = vpop.f32.mrb[0].mxu0
  %560 = vmatprep.mubr.f32.mxu0 0.0
  %561 = vmatmul.mubr.f32.gmra.mrb[0].mxu0 %v226
  %v562 = vpop.f32.mrb[0].mxu0
  %v563 = vadd.f32 %v78, %v562
  %v564 = vpop.f32.mrb[0].mxu0
  %565 = vmatprep.mubr.f32.mxu0 0.0
  %566 = vmatmul.mubr.f32.gmra.mrb[0].mxu0 %v229
  %v567 = vpop.f32.mrb[0].mxu0
  %v568 = vadd.f32 %v78, %v567
  %v569 = vpop.f32.mrb[0].mxu0
  %570 = vmatprep.mubr.f32.mxu0 0.0
  %571 = vmatmul.mubr.f32.gmra.mrb[0].mxu0 %v232
  %v572 = vpop.f32.mrb[0].mxu0
  %v573 = vadd.f32 %v78, %v572
  %v574 = vpop.f32.mrb[0].mxu0
  %575 = vmatprep.mubr.f32.mxu0 0.0
  %576 = vmatmul.mubr.f32.gmra.mrb[0].mxu0 %v235
  %v577 = vpop.f32.mrb[0].mxu0
  %v578 = vadd.f32 %v78, %v577
  %v579 = vpop.f32.mrb[0].mxu0
  %580 = vmatprep.mubr.f32.mxu0 0.0
  %581 = vmatmul.mubr.f32.gmra.mrb[0].mxu0 %v238
  %v582 = vpop.f32.mrb[0].mxu0
  %v583 = vadd.f32 %v78, %v582
  %v584 = vpop.f32.mrb[0].mxu0
  %585 = vmatprep.mubr.f32.mxu0 0.0
  %586 = vmatmul.mubr.f32.gmra.mrb[0].mxu0 %v241
  %v587 = vpop.f32.mrb[0].mxu0
  %v588 = vadd.f32 %v78, %v587
  %v589 = vpop.f32.mrb[0].mxu0
  %590 = vmatprep.mubr.f32.mxu0 0.0
  %591 = vmatmul.mubr.f32.gmra.mrb[0].mxu0 %v244
  %v592 = vpop.f32.mrb[0].mxu0
  %v593 = vadd.f32 %v78, %v592
  %v594 = vpop.f32.mrb[0].mxu0
  %595 = vmatprep.mubr.f32.mxu0 0.0
  %596 = vmatmul.mubr.f32.gmra.mrb[0].mxu0 %v247
  %v597 = vpop.f32.mrb[0].mxu0
  %v598 = vadd.f32 %v78, %v597
  %v599 = vpop.f32.mrb[0].mxu0
  %600 = vmatprep.mubr.f32.mxu0 0.0
  %601 = vmatmul.mubr.f32.gmra.mrb[0].mxu0 %v250
  %v602 = vpop.f32.mrb[0].mxu0
  %v603 = vadd.f32 %v78, %v602
  %v604 = vpop.f32.mrb[0].mxu0
  %605 = vdwg.mxu0
  %v606 = vmax.f32 %v323, 0.0
  %v607 = vmax.f32 %v328, 0.0
  %v608 = vmax.f32 %v333, 0.0
  %v609 = vmax.f32 %v338, 0.0
  %v610 = vmax.f32 %v343, 0.0
  %v611 = vmax.f32 %v348, 0.0
  %v612 = vmax.f32 %v353, 0.0
  %v613 = vmax.f32 %v358, 0.0
  %v614 = vmax.f32 %v363, 0.0
  %v615 = vmax.f32 %v368, 0.0
  %v616 = vmax.f32 %v373, 0.0
  %v617 = vmax.f32 %v378, 0.0
  %v618 = vmax.f32 %v383, 0.0
  %v619 = vmax.f32 %v388, 0.0
  %v620 = vmax.f32 %v393, 0.0
  %v621 = vmax.f32 %v398, 0.0
  %v622 = vmax.f32 %v403, 0.0
  %v623 = vmax.f32 %v408, 0.0
  %v624 = vmax.f32 %v413, 0.0
  %v625 = vmax.f32 %v418, 0.0
  %v626 = vmax.f32 %v423, 0.0
  %v627 = vmax.f32 %v428, 0.0
  %v628 = vmax.f32 %v433, 0.0
  %v629 = vmax.f32 %v438, 0.0
  %v630 = vmax.f32 %v443, 0.0
  %v631 = vmax.f32 %v448, 0.0
  %v632 = vmax.f32 %v453, 0.0
  %v633 = vmax.f32 %v458, 0.0
  %v634 = vmax.f32 %v463, 0.0
  %v635 = vmax.f32 %v468, 0.0
  %v636 = vmax.f32 %v473, 0.0
  %v637 = vmax.f32 %v478, 0.0
  %v638 = vmax.f32 %v483, 0.0
  %v639 = vmax.f32 %v488, 0.0
  %v640 = vmax.f32 %v493, 0.0
  %v641 = vmax.f32 %v498, 0.0
  %v642 = vmax.f32 %v503, 0.0
  %v643 = vmax.f32 %v508, 0.0
  %v644 = vmax.f32 %v513, 0.0
  %v645 = vmax.f32 %v518, 0.0
  %v646 = vmax.f32 %v523, 0.0
  %v647 = vmax.f32 %v528, 0.0
  %v648 = vmax.f32 %v533, 0.0
  %v649 = vmax.f32 %v538, 0.0
  %v650 = vmax.f32 %v543, 0.0
  %v651 = vmax.f32 %v548, 0.0
  %v652 = vmax.f32 %v553, 0.0
  %v653 = vmax.f32 %v558, 0.0
  %v654 = vmax.f32 %v563, 0.0
  %v655 = vmax.f32 %v568, 0.0
  %v656 = vmax.f32 %v573, 0.0
  %v657 = vmax.f32 %v578, 0.0
  %v658 = vmax.f32 %v583, 0.0
  %v659 = vmax.f32 %v588, 0.0
  %v660 = vmax.f32 %v593, 0.0
  %v661 = vmax.f32 %v598, 0.0
  %v662 = vmax.f32 %v603, 0.0
  %vm663 = vcmask 261120
  %664 = vst.msk [vmem:[%s3] sm:$0xff] %vm663, %v606
  %665 = vst.msk [vmem:[%s3 + $0x8] sm:$0xff] %vm663, %v607
  %666 = vst.msk [vmem:[%s3 + $0x10] sm:$0xff] %vm663, %v608
  %667 = vst.msk [vmem:[%s3 + $0x18] sm:$0xff] %vm663, %v609
  %668 = vst.msk [vmem:[%s3 + $0x20] sm:$0xff] %vm663, %v610
  %669 = vst.msk [vmem:[%s3 + $0x28] sm:$0xff] %vm663, %v611
  %670 = vst.msk [vmem:[%s3 + $0x30] sm:$0xff] %vm663, %v612
  %671 = vst.msk [vmem:[%s3 + $0x38] sm:$0xff] %vm663, %v613
  %672 = vst.msk [vmem:[%s3 + $0x40] sm:$0xff] %vm663, %v614
  %673 = vst.msk [vmem:[%s3 + $0x48] sm:$0xff] %vm663, %v615
  %674 = vst.msk [vmem:[%s3 + $0x50] sm:$0xff] %vm663, %v616
  %675 = vst.msk [vmem:[%s3 + $0x58] sm:$0xff] %vm663, %v617
  %676 = vst.msk [vmem:[%s3 + $0x60] sm:$0xff] %vm663, %v618
  %677 = vst.msk [vmem:[%s3 + $0x68] sm:$0xff] %vm663, %v619
  %678 = vst.msk [vmem:[%s3 + $0x70] sm:$0xff] %vm663, %v620
  %679 = vst.msk [vmem:[%s3 + $0x78] sm:$0xff] %vm663, %v621
  %680 = vst.msk [vmem:[%s3 + $0x80] sm:$0xff] %vm663, %v622
  %681 = vst.msk [vmem:[%s3 + $0x88] sm:$0xff] %vm663, %v623
  %682 = vst.msk [vmem:[%s3 + $0x90] sm:$0xff] %vm663, %v624
  %683 = vst.msk [vmem:[%s3 + $0x98] sm:$0xff] %vm663, %v625
  %684 = vst.msk [vmem:[%s3 + $0xa0] sm:$0xff] %vm663, %v626
  %685 = vst.msk [vmem:[%s3 + $0xa8] sm:$0xff] %vm663, %v627
  %686 = vst.msk [vmem:[%s3 + $0xb0] sm:$0xff] %vm663, %v628
  %687 = vst.msk [vmem:[%s3 + $0xb8] sm:$0xff] %vm663, %v629
  %688 = vst.msk [vmem:[%s3 + $0xc0] sm:$0xff] %vm663, %v630
  %689 = vst.msk [vmem:[%s3 + $0xc8] sm:$0xff] %vm663, %v631
  %690 = vst.msk [vmem:[%s3 + $0xd0] sm:$0xff] %vm663, %v632
  %691 = vst.msk [vmem:[%s3 + $0xd8] sm:$0xff] %vm663, %v633
  %692 = vst.msk [vmem:[%s3 + $0xe0] sm:$0xff] %vm663, %v634
  %693 = vst.msk [vmem:[%s3 + $0xe8] sm:$0xff] %vm663, %v635
  %694 = vst.msk [vmem:[%s3 + $0xf0] sm:$0xff] %vm663, %v636
  %695 = vst.msk [vmem:[%s3 + $0xf8] sm:$0xff] %vm663, %v637
  %696 = vst.msk [vmem:[%s3 + $0x100] sm:$0xff] %vm663, %v638
  %697 = vst.msk [vmem:[%s3 + $0x108] sm:$0xff] %vm663, %v639
  %698 = vst.msk [vmem:[%s3 + $0x110] sm:$0xff] %vm663, %v640
  %699 = vst.msk [vmem:[%s3 + $0x118] sm:$0xff] %vm663, %v641
  %700 = vst.msk [vmem:[%s3 + $0x120] sm:$0xff] %vm663, %v642
  %701 = vst.msk [vmem:[%s3 + $0x128] sm:$0xff] %vm663, %v643
  %702 = vst.msk [vmem:[%s3 + $0x130] sm:$0xff] %vm663, %v644
  %703 = vst.msk [vmem:[%s3 + $0x138] sm:$0xff] %vm663, %v645
  %704 = vst.msk [vmem:[%s3 + $0x140] sm:$0xff] %vm663, %v646
  %705 = vst.msk [vmem:[%s3 + $0x148] sm:$0xff] %vm663, %v647
  %706 = vst.msk [vmem:[%s3 + $0x150] sm:$0xff] %vm663, %v648
  %707 = vst.msk [vmem:[%s3 + $0x158] sm:$0xff] %vm663, %v649
  %708 = vst.msk [vmem:[%s3 + $0x160] sm:$0xff] %vm663, %v650
  %709 = vst.msk [vmem:[%s3 + $0x168] sm:$0xff] %vm663, %v651
  %710 = vst.msk [vmem:[%s3 + $0x170] sm:$0xff] %vm663, %v652
  %711 = vst.msk [vmem:[%s3 + $0x178] sm:$0xff] %vm663, %v653
  %712 = vst.msk [vmem:[%s3 + $0x180] sm:$0xff] %vm663, %v654
  %713 = vst.msk [vmem:[%s3 + $0x188] sm:$0xff] %vm663, %v655
  %714 = vst.msk [vmem:[%s3 + $0x190] sm:$0xff] %vm663, %v656
  %715 = vst.msk [vmem:[%s3 + $0x198] sm:$0xff] %vm663, %v657
  %716 = vst.msk [vmem:[%s3 + $0x1a0] sm:$0xff] %vm663, %v658
  %717 = vst.msk [vmem:[%s3 + $0x1a8] sm:$0xff] %vm663, %v659
  %718 = vst.msk [vmem:[%s3 + $0x1b0] sm:$0xff] %vm663, %v660
  %719 = vst.msk [vmem:[%s3 + $0x1b8] sm:$0xff] %vm663, %v661
  %720 = vst.msk [vmem:[%s3 + $0x1c0] sm:$0xff] %vm663, %v662
  // Predicated region
  $region14: #{conformer_model.4} parent=0 // pred_check
    _
  $region15: #{conformer_model.4} parent=0 // pred_check_branch
    %722 = sbr.rel (0) target = $region17
  $region16: #{conformer_model.4} parent=0 // pred_region
    _
  $region17: #{conformer_model.4} parent=0 // pred_fallthru
    _
  // Predicated region
  $region18: #{conformer_model.4} parent=0 // pred_check
    _
  $region19: #{conformer_model.4} parent=0 // pred_check_branch
    %724 = sbr.rel (0) target = $region21
  $region20: #{conformer_model.4} parent=0 // pred_region
    _
  $region21: #{conformer_model.4} parent=0 // pred_fallthru
    _

// kernel: conformer_model.5
$region0: #{conformer_model.5}
  #allocation0 [shape = 'u32[]', space=smem, size = 0x4, offset = 0x4, fixed_abs, tag = 'smem constant byte address 0x4 - core index']
  #allocation1 [shape = 'u32[144,128]{1,0:T(1,128)}', space=vmem, size = 0x12000, scoped, tag = 'internal scratch']
  %s0 = inlined_call_operand.vmem [shape: f32[104,288], index: 0, kind: input, shape index: {}]
  %s1 = inlined_call_operand.vmem [shape: f32[288,32], index: 1, kind: input, shape index: {}]
  %s2 = inlined_call_operand.vmem [shape: f32[1,32], index: 2, kind: input, shape index: {}]
  %s3 = inlined_call_operand.vmem [shape: f32[104,32], index: 3, kind: output, shape index: {}]
  %s4 = sld [smem:[#allocation0]]
  $region22: #{conformer_model.5} parent=0
    _
  %s6 = ssub.s32 1, %s4
  %s7 = scalar_select 0, %s6, %s4
  // Predicated region
  $region2: #{conformer_model.5} parent=0 // pred_check
    _
  $region3: #{conformer_model.5} parent=0 // pred_check_branch
    %9 = sbr.rel (0) target = $region5
  $region4: #{conformer_model.5} parent=0 // pred_region
    _
  $region5: #{conformer_model.5} parent=0 // pred_fallthru
    _
  // Predicated region
  $region6: #{conformer_model.5} parent=0 // pred_check
    _
  $region7: #{conformer_model.5} parent=0 // pred_check_branch
    %11 = sbr.rel (0) target = $region9
  $region8: #{conformer_model.5} parent=0 // pred_region
    _
  $region9: #{conformer_model.5} parent=0 // pred_fallthru
    _
  // Predicated region
  $region10: #{conformer_model.5} parent=0 // pred_check
    _
  $region11: #{conformer_model.5} parent=0 // pred_check_branch
    %13 = sbr.rel (0) target = $region13
  $region12: #{conformer_model.5} parent=0 // pred_region
    _
  $region13: #{conformer_model.5} parent=0 // pred_fallthru
    _
  %v14 = vld [vmem:[%s0] sm:$0xff]
  %v15 = vld [vmem:[%s0 + $0x8] sm:$0xff]
  %v16 = vld [vmem:[%s0 + $0x10] sm:$0xff]
  %v17 = vld [vmem:[%s0 + $0x18] sm:$0xff]
  %v18 = vld [vmem:[%s0 + $0x20] sm:$0xff]
  %v19 = vld [vmem:[%s0 + $0x28] sm:$0xff]
  %v20 = vld [vmem:[%s0 + $0x30] sm:$0xff]
  %v21 = vld [vmem:[%s0 + $0x38] sm:$0xff]
  %v22 = vld [vmem:[%s0 + $0x40] sm:$0xff]
  %v23 = vld [vmem:[%s0 + $0x48] sm:$0xff]
  %v24 = vld [vmem:[%s0 + $0x50] sm:$0xff]
  %v25 = vld [vmem:[%s0 + $0x58] sm:$0xff]
  %v26 = vld [vmem:[%s0 + $0x60] sm:$0xff]
  %v27 = vld [vmem:[%s0 + $0x68] sm:$0xff]
  %v28 = vld [vmem:[%s0 + $0x70] sm:$0xff]
  %v29 = vld [vmem:[%s0 + $0x78] sm:$0xff]
  %v30 = vld [vmem:[%s0 + $0x80] sm:$0xff]
  %v31 = vld [vmem:[%s0 + $0x88] sm:$0xff]
  %v32 = vld [vmem:[%s0 + $0x90] sm:$0xff]
  %v33 = vld [vmem:[%s0 + $0x98] sm:$0xff]
  %v34 = vld [vmem:[%s0 + $0xa0] sm:$0xff]
  %v35 = vld [vmem:[%s0 + $0xa8] sm:$0xff]
  %v36 = vld [vmem:[%s0 + $0xb0] sm:$0xff]
  %v37 = vld [vmem:[%s0 + $0xb8] sm:$0xff]
  %v38 = vld [vmem:[%s0 + $0xc0] sm:$0xff]
  %v39 = vld [vmem:[%s0 + $0xc8] sm:$0xff]
  %v40 = vld [vmem:[%s0 + $0xd0] sm:$0xff]
  %v41 = vld [vmem:[%s0 + $0xd8] sm:$0xff]
  %v42 = vld [vmem:[%s0 + $0xe0] sm:$0xff]
  %v43 = vld [vmem:[%s0 + $0xe8] sm:$0xff]
  %v44 = vld [vmem:[%s0 + $0xf0] sm:$0xff]
  %v45 = vld [vmem:[%s0 + $0xf8] sm:$0xff]
  %v46 = vld [vmem:[%s0 + $0x100] sm:$0xff]
  %v47 = vld [vmem:[%s0 + $0x108] sm:$0xff]
  %v48 = vld [vmem:[%s0 + $0x110] sm:$0xff]
  %v49 = vld [vmem:[%s0 + $0x118] sm:$0xff]
  %v50 = vld [vmem:[%s0 + $0x120] sm:$0xff]
  %v51 = vld [vmem:[%s0 + $0x128] sm:$0xff]
  %v52 = vld [vmem:[%s0 + $0x130] sm:$0xff]
  %v53 = vld [vmem:[%s1] sm:$0xff]
  %v54 = vld [vmem:[%s1 + $0x8] sm:$0xff]
  %v55 = vld [vmem:[%s1 + $0x10] sm:$0xff]
  %v56 = vld [vmem:[%s1 + $0x18] sm:$0xff]
  %v57 = vld [vmem:[%s1 + $0x20] sm:$0xff]
  %v58 = vld [vmem:[%s1 + $0x28] sm:$0xff]
  %v59 = vld [vmem:[%s1 + $0x30] sm:$0xff]
  %v60 = vld [vmem:[%s1 + $0x38] sm:$0xff]
  %v61 = vld [vmem:[%s1 + $0x40] sm:$0xff]
  %v62 = vld [vmem:[%s1 + $0x48] sm:$0xff]
  %v63 = vld [vmem:[%s1 + $0x50] sm:$0xff]
  %v64 = vld [vmem:[%s1 + $0x58] sm:$0xff]
  %v65 = vld [vmem:[%s1 + $0x60] sm:$0xff]
  %v66 = vld [vmem:[%s1 + $0x68] sm:$0xff]
  %v67 = vld [vmem:[%s1 + $0x70] sm:$0xff]
  %v68 = vld [vmem:[%s1 + $0x78] sm:$0xff]
  %v69 = vld [vmem:[%s1 + $0x80] sm:$0xff]
  %v70 = vld [vmem:[%s1 + $0x88] sm:$0xff]
  %v71 = vld [vmem:[%s1 + $0x90] sm:$0xff]
  %v72 = vld [vmem:[%s1 + $0x98] sm:$0xff]
  %v73 = vld [vmem:[%s1 + $0xa0] sm:$0xff]
  %v74 = vld [vmem:[%s1 + $0xa8] sm:$0xff]
  %v75 = vld [vmem:[%s1 + $0xb0] sm:$0xff]
  %v76 = vld [vmem:[%s1 + $0xb8] sm:$0xff]
  %v77 = vld [vmem:[%s1 + $0xc0] sm:$0xff]
  %v78 = vld [vmem:[%s1 + $0xc8] sm:$0xff]
  %v79 = vld [vmem:[%s1 + $0xd0] sm:$0xff]
  %v80 = vld [vmem:[%s1 + $0xd8] sm:$0xff]
  %v81 = vld [vmem:[%s1 + $0xe0] sm:$0xff]
  %v82 = vld [vmem:[%s1 + $0xe8] sm:$0xff]
  %v83 = vld [vmem:[%s1 + $0xf0] sm:$0xff]
  %v84 = vld [vmem:[%s1 + $0xf8] sm:$0xff]
  %v85 = vld [vmem:[%s1 + $0x100] sm:$0xff]
  %v86 = vld [vmem:[%s1 + $0x108] sm:$0xff]
  %v87 = vld [vmem:[%s1 + $0x110] sm:$0xff]
  %v88 = vld [vmem:[%s1 + $0x118] sm:$0xff]
  %v89 = vld [vmem:[%s2] sm:$0x1]
  %v91 = vlaneseq
  %v92 = vshrl.u32 %v91, 7
  %v93 = vsub.s32 0, %v92
  %v94 = vrot.slane %v89, %v93
  %vm96 = vcmask 261120
  %v98 = vsel %vm96, %v16, 0
  %v101 = vsel %vm96, %v19, 0
  %v104 = vsel %vm96, %v22, 0
  %v107 = vsel %vm96, %v25, 0
  %v110 = vsel %vm96, %v28, 0
  %v113 = vsel %vm96, %v31, 0
  %v116 = vsel %vm96, %v34, 0
  %v119 = vsel %vm96, %v37, 0
  %v122 = vsel %vm96, %v40, 0
  %v125 = vsel %vm96, %v43, 0
  %v128 = vsel %vm96, %v46, 0
  %v131 = vsel %vm96, %v49, 0
  %v134 = vsel %vm96, %v52, 0
  %136 = vmatprep.subr.mxu0 0.0
  %137 = vmatpush1.msra.mxu0 %v53
  %138 = vmatprep.subr.mxu0 0.0
  %139 = vmatpush1.msra.mxu0 %v54
  %140 = vmatprep.subr.mxu0 0.0
  %141 = vmatpush1.msra.mxu0 %v55
  %142 = vmatprep.subr.mxu0 0.0
  %143 = vmatpush1.msra.mxu0 %v56
  %144 = vmatprep.subr.mxu0 0.0
  %145 = vmatpush1.msra.mxu0 %v57
  %146 = vmatprep.subr.mxu0 0.0
  %147 = vmatpush1.msra.mxu0 %v58
  %148 = vmatprep.subr.mxu0 0.0
  %149 = vmatpush1.msra.mxu0 %v59
  %150 = vmatprep.subr.mxu0 0.0
  %151 = vmatpush1.msra.mxu0 %v60
  %152 = vmatprep.subr.mxu0 0.0
  %153 = vmatpush1.msra.mxu0 %v61
  %154 = vmatprep.subr.mxu0 0.0
  %155 = vmatpush1.msra.mxu0 %v62
  %156 = vmatprep.subr.mxu0 0.0
  %157 = vmatpush1.msra.mxu0 %v63
  %158 = vmatprep.subr.mxu0 0.0
  %159 = vmatpush1.msra.mxu0 %v64
  %160 = vmatprep.subr.mxu0 0.0
  %161 = vmatpush1.msra.mxu0 %v65
  %162 = vmatprep.subr.mxu0 0.0
  %163 = vmatpush1.msra.mxu0 %v66
  %164 = vmatprep.subr.mxu0 0.0
  %165 = vmatpush1.msra.mxu0 %v67
  %166 = vmatprep.subr.mxu0 0.0
  %167 = vmatpush1.msra.mxu0 %v68
  %168 = vmatprep.subr.mxu0 0.0
  %169 = vmatpush1.msra.mxu0 %v69
  %170 = vmatprep.subr.mxu0 0.0
  %171 = vmatpush1.msra.mxu0 %v70
  %172 = vmatprep.subr.mxu0 0.0
  %173 = vmatpush1.msra.mxu0 %v71
  %174 = vmatprep.subr.mxu0 0.0
  %175 = vmatpush1.msra.mxu0 %v72
  %176 = vmatprep.subr.mxu0 0.0
  %177 = vmatpush1.msra.mxu0 %v73
  %178 = vmatprep.subr.mxu0 0.0
  %179 = vmatpush1.msra.mxu0 %v74
  %180 = vmatprep.subr.mxu0 0.0
  %181 = vmatpush1.msra.mxu0 %v75
  %182 = vmatprep.subr.mxu0 0.0
  %183 = vmatpush1.msra.mxu0 %v76
  %184 = vmatprep.subr.mxu0 0.0
  %185 = vmatpush1.msra.mxu0 %v77
  %186 = vmatprep.subr.mxu0 0.0
  %187 = vmatpush1.msra.mxu0 %v78
  %188 = vmatprep.subr.mxu0 0.0
  %189 = vmatpush1.msra.mxu0 %v79
  %190 = vmatprep.subr.mxu0 0.0
  %191 = vmatpush1.msra.mxu0 %v80
  %192 = vmatprep.subr.mxu0 0.0
  %193 = vmatpush1.msra.mxu0 %v81
  %194 = vmatprep.subr.mxu0 0.0
  %195 = vmatpush1.msra.mxu0 %v82
  %196 = vmatprep.subr.mxu0 0.0
  %197 = vmatpush1.msra.mxu0 %v83
  %198 = vmatprep.subr.mxu0 0.0
  %199 = vmatpush1.msra.mxu0 %v84
  %200 = vmatprep.mubr.f32.mxu0 %v15
  %201 = vmatmul.mubr.f32.gmra.mrb[0].mxu0 %v14
  %v202 = vpop.f32.mrb[0].mxu0
  %v203 = vadd.f32 %v94, %v202
  %v204 = vpop.f32.mrb[0].mxu0
  %205 = vmatprep.mubr.f32.mxu0 %v18
  %206 = vmatmul.mubr.f32.gmra.mrb[0].mxu0 %v17
  %v207 = vpop.f32.mrb[0].mxu0
  %v208 = vadd.f32 %v94, %v207
  %v209 = vpop.f32.mrb[0].mxu0
  %210 = vmatprep.mubr.f32.mxu0 %v21
  %211 = vmatmul.mubr.f32.gmra.mrb[0].mxu0 %v20
  %v212 = vpop.f32.mrb[0].mxu0
  %v213 = vadd.f32 %v94, %v212
  %v214 = vpop.f32.mrb[0].mxu0
  %215 = vmatprep.mubr.f32.mxu0 %v24
  %216 = vmatmul.mubr.f32.gmra.mrb[0].mxu0 %v23
  %v217 = vpop.f32.mrb[0].mxu0
  %v218 = vadd.f32 %v94, %v217
  %v219 = vpop.f32.mrb[0].mxu0
  %220 = vmatprep.mubr.f32.mxu0 %v27
  %221 = vmatmul.mubr.f32.gmra.mrb[0].mxu0 %v26
  %v222 = vpop.f32.mrb[0].mxu0
  %v223 = vadd.f32 %v94, %v222
  %v224 = vpop.f32.mrb[0].mxu0
  %225 = vmatprep.mubr.f32.mxu0 %v30
  %226 = vmatmul.mubr.f32.gmra.mrb[0].mxu0 %v29
  %v227 = vpop.f32.mrb[0].mxu0
  %v228 = vadd.f32 %v94, %v227
  %v229 = vpop.f32.mrb[0].mxu0
  %230 = vmatprep.mubr.f32.mxu0 %v33
  %231 = vmatmul.mubr.f32.gmra.mrb[0].mxu0 %v32
  %v232 = vpop.f32.mrb[0].mxu0
  %v233 = vadd.f32 %v94, %v232
  %v234 = vpop.f32.mrb[0].mxu0
  %235 = vmatprep.mubr.f32.mxu0 %v36
  %236 = vmatmul.mubr.f32.gmra.mrb[0].mxu0 %v35
  %v237 = vpop.f32.mrb[0].mxu0
  %v238 = vadd.f32 %v94, %v237
  %v239 = vpop.f32.mrb[0].mxu0
  %240 = vmatprep.mubr.f32.mxu0 %v39
  %241 = vmatmul.mubr.f32.gmra.mrb[0].mxu0 %v38
  %v242 = vpop.f32.mrb[0].mxu0
  %v243 = vadd.f32 %v94, %v242
  %v244 = vpop.f32.mrb[0].mxu0
  %245 = vmatprep.mubr.f32.mxu0 %v42
  %246 = vmatmul.mubr.f32.gmra.mrb[0].mxu0 %v41
  %v247 = vpop.f32.mrb[0].mxu0
  %v248 = vadd.f32 %v94, %v247
  %v249 = vpop.f32.mrb[0].mxu0
  %250 = vmatprep.mubr.f32.mxu0 %v45
  %251 = vmatmul.mubr.f32.gmra.mrb[0].mxu0 %v44
  %v252 = vpop.f32.mrb[0].mxu0
  %v253 = vadd.f32 %v94, %v252
  %v254 = vpop.f32.mrb[0].mxu0
  %255 = vmatprep.mubr.f32.mxu0 %v48
  %256 = vmatmul.mubr.f32.gmra.mrb[0].mxu0 %v47
  %v257 = vpop.f32.mrb[0].mxu0
  %v258 = vadd.f32 %v94, %v257
  %v259 = vpop.f32.mrb[0].mxu0
  %260 = vmatprep.mubr.f32.mxu0 %v51
  %261 = vmatmul.mubr.f32.gmra.mrb[0].mxu0 %v50
  %v262 = vpop.f32.mrb[0].mxu0
  %v263 = vadd.f32 %v94, %v262
  %v264 = vpop.f32.mrb[0].mxu0
  %265 = vdwg.mxu0
  %266 = vmatprep.subr.mxu0 0.0
  %267 = vmatpush1.msra.mxu0 %v85
  %268 = vmatprep.subr.mxu0 0.0
  %269 = vmatpush1.msra.mxu0 %v86
  %270 = vmatprep.subr.mxu0 0.0
  %271 = vmatpush1.msra.mxu0 %v87
  %272 = vmatprep.subr.mxu0 0.0
  %273 = vmatpush1.msra.mxu0 %v88
  %274 = vmatprep.subr.mxu0 0.0
  %275 = vmatpush1.msra.mxu0 0.0
  %276 = vmatprep.subr.mxu0 0.0
  %277 = vmatpush1.msra.mxu0 0.0
  %278 = vmatprep.subr.mxu0 0.0
  %279 = vmatpush1.msra.mxu0 0.0
  %280 = vmatprep.subr.mxu0 0.0
  %281 = vmatpush1.msra.mxu0 0.0
  %282 = vmatprep.subr.mxu0 0.0
  %283 = vmatpush1.msra.mxu0 0.0
  %284 = vmatprep.subr.mxu0 0.0
  %285 = vmatpush1.msra.mxu0 0.0
  %286 = vmatprep.subr.mxu0 0.0
  %287 = vmatpush1.msra.mxu0 0.0
  %288 = vmatprep.subr.mxu0 0.0
  %289 = vmatpush1.msra.mxu0 0.0
  %290 = vmatprep.subr.mxu0 0.0
  %291 = vmatpush1.msra.mxu0 0.0
  %292 = vmatprep.subr.mxu0 0.0
  %293 = vmatpush1.msra.mxu0 0.0
  %294 = vmatprep.subr.mxu0 0.0
  %295 = vmatpush1.msra.mxu0 0.0
  %296 = vmatprep.subr.mxu0 0.0
  %297 = vmatpush1.msra.mxu0 0.0
  %298 = vmatprep.subr.mxu0 0.0
  %299 = vmatpush1.msra.mxu0 0.0
  %300 = vmatprep.subr.mxu0 0.0
  %301 = vmatpush1.msra.mxu0 0.0
  %302 = vmatprep.subr.mxu0 0.0
  %303 = vmatpush1.msra.mxu0 0.0
  %304 = vmatprep.subr.mxu0 0.0
  %305 = vmatpush1.msra.mxu0 0.0
  %306 = vmatprep.subr.mxu0 0.0
  %307 = vmatpush1.msra.mxu0 0.0
  %308 = vmatprep.subr.mxu0 0.0
  %309 = vmatpush1.msra.mxu0 0.0
  %310 = vmatprep.subr.mxu0 0.0
  %311 = vmatpush1.msra.mxu0 0.0
  %312 = vmatprep.subr.mxu0 0.0
  %313 = vmatpush1.msra.mxu0 0.0
  %314 = vmatprep.subr.mxu0 0.0
  %315 = vmatpush1.msra.mxu0 0.0
  %316 = vmatprep.subr.mxu0 0.0
  %317 = vmatpush1.msra.mxu0 0.0
  %318 = vmatprep.subr.mxu0 0.0
  %319 = vmatpush1.msra.mxu0 0.0
  %320 = vmatprep.subr.mxu0 0.0
  %321 = vmatpush1.msra.mxu0 0.0
  %322 = vmatprep.subr.mxu0 0.0
  %323 = vmatpush1.msra.mxu0 0.0
  %324 = vmatprep.subr.mxu0 0.0
  %325 = vmatpush1.msra.mxu0 0.0
  %326 = vmatprep.subr.mxu0 0.0
  %327 = vmatpush1.msra.mxu0 0.0
  %328 = vmatprep.subr.mxu0 0.0
  %329 = vmatpush1.msra.mxu0 0.0
  %330 = vmatprep.mubr.f32.mxu0 0.0
  %331 = vmatmul.mubr.f32.gmra.mrb[0].mxu0 %v98
  %v332 = vpop.f32.mrb[0].mxu0
  %v333 = vadd.f32 %v203, %v332
  %v334 = vpop.f32.mrb[0].mxu0
  %335 = vmatprep.mubr.f32.mxu0 0.0
  %336 = vmatmul.mubr.f32.gmra.mrb[0].mxu0 %v101
  %v337 = vpop.f32.mrb[0].mxu0
  %v338 = vadd.f32 %v208, %v337
  %v339 = vpop.f32.mrb[0].mxu0
  %340 = vmatprep.mubr.f32.mxu0 0.0
  %341 = vmatmul.mubr.f32.gmra.mrb[0].mxu0 %v104
  %v342 = vpop.f32.mrb[0].mxu0
  %v343 = vadd.f32 %v213, %v342
  %v344 = vpop.f32.mrb[0].mxu0
  %345 = vmatprep.mubr.f32.mxu0 0.0
  %346 = vmatmul.mubr.f32.gmra.mrb[0].mxu0 %v107
  %v347 = vpop.f32.mrb[0].mxu0
  %v348 = vadd.f32 %v218, %v347
  %v349 = vpop.f32.mrb[0].mxu0
  %350 = vmatprep.mubr.f32.mxu0 0.0
  %351 = vmatmul.mubr.f32.gmra.mrb[0].mxu0 %v110
  %v352 = vpop.f32.mrb[0].mxu0
  %v353 = vadd.f32 %v223, %v352
  %v354 = vpop.f32.mrb[0].mxu0
  %355 = vmatprep.mubr.f32.mxu0 0.0
  %356 = vmatmul.mubr.f32.gmra.mrb[0].mxu0 %v113
  %v357 = vpop.f32.mrb[0].mxu0
  %v358 = vadd.f32 %v228, %v357
  %v359 = vpop.f32.mrb[0].mxu0
  %360 = vmatprep.mubr.f32.mxu0 0.0
  %361 = vmatmul.mubr.f32.gmra.mrb[0].mxu0 %v116
  %v362 = vpop.f32.mrb[0].mxu0
  %v363 = vadd.f32 %v233, %v362
  %v364 = vpop.f32.mrb[0].mxu0
  %365 = vmatprep.mubr.f32.mxu0 0.0
  %366 = vmatmul.mubr.f32.gmra.mrb[0].mxu0 %v119
  %v367 = vpop.f32.mrb[0].mxu0
  %v368 = vadd.f32 %v238, %v367
  %v369 = vpop.f32.mrb[0].mxu0
  %370 = vmatprep.mubr.f32.mxu0 0.0
  %371 = vmatmul.mubr.f32.gmra.mrb[0].mxu0 %v122
  %v372 = vpop.f32.mrb[0].mxu0
  %v373 = vadd.f32 %v243, %v372
  %v374 = vpop.f32.mrb[0].mxu0
  %375 = vmatprep.mubr.f32.mxu0 0.0
  %376 = vmatmul.mubr.f32.gmra.mrb[0].mxu0 %v125
  %v377 = vpop.f32.mrb[0].mxu0
  %v378 = vadd.f32 %v248, %v377
  %v379 = vpop.f32.mrb[0].mxu0
  %380 = vmatprep.mubr.f32.mxu0 0.0
  %381 = vmatmul.mubr.f32.gmra.mrb[0].mxu0 %v128
  %v382 = vpop.f32.mrb[0].mxu0
  %v383 = vadd.f32 %v253, %v382
  %v384 = vpop.f32.mrb[0].mxu0
  %385 = vmatprep.mubr.f32.mxu0 0.0
  %386 = vmatmul.mubr.f32.gmra.mrb[0].mxu0 %v131
  %v387 = vpop.f32.mrb[0].mxu0
  %v388 = vadd.f32 %v258, %v387
  %v389 = vpop.f32.mrb[0].mxu0
  %390 = vmatprep.mubr.f32.mxu0 0.0
  %391 = vmatmul.mubr.f32.gmra.mrb[0].mxu0 %v134
  %v392 = vpop.f32.mrb[0].mxu0
  %v393 = vadd.f32 %v263, %v392
  %v394 = vpop.f32.mrb[0].mxu0
  %395 = vdwg.mxu0
  %v396 = vmax.f32 %v333, 0.0
  %v397 = vmax.f32 %v338, 0.0
  %v398 = vmax.f32 %v343, 0.0
  %v399 = vmax.f32 %v348, 0.0
  %v400 = vmax.f32 %v353, 0.0
  %v401 = vmax.f32 %v358, 0.0
  %v402 = vmax.f32 %v363, 0.0
  %v403 = vmax.f32 %v368, 0.0
  %v404 = vmax.f32 %v373, 0.0
  %v405 = vmax.f32 %v378, 0.0
  %v406 = vmax.f32 %v383, 0.0
  %v407 = vmax.f32 %v388, 0.0
  %v408 = vmax.f32 %v393, 0.0
  %409 = vst.msk [vmem:[%s3] sm:$0xff] %vm96, %v396
  %410 = vst.msk [vmem:[%s3 + $0x8] sm:$0xff] %vm96, %v397
  %411 = vst.msk [vmem:[%s3 + $0x10] sm:$0xff] %vm96, %v398
  %412 = vst.msk [vmem:[%s3 + $0x18] sm:$0xff] %vm96, %v399
  %413 = vst.msk [vmem:[%s3 + $0x20] sm:$0xff] %vm96, %v400
  %414 = vst.msk [vmem:[%s3 + $0x28] sm:$0xff] %vm96, %v401
  %415 = vst.msk [vmem:[%s3 + $0x30] sm:$0xff] %vm96, %v402
  %416 = vst.msk [vmem:[%s3 + $0x38] sm:$0xff] %vm96, %v403
  %417 = vst.msk [vmem:[%s3 + $0x40] sm:$0xff] %vm96, %v404
  %418 = vst.msk [vmem:[%s3 + $0x48] sm:$0xff] %vm96, %v405
  %419 = vst.msk [vmem:[%s3 + $0x50] sm:$0xff] %vm96, %v406
  %420 = vst.msk [vmem:[%s3 + $0x58] sm:$0xff] %vm96, %v407
  %421 = vst.msk [vmem:[%s3 + $0x60] sm:$0xff] %vm96, %v408
  // Predicated region
  $region14: #{conformer_model.5} parent=0 // pred_check
    _
  $region15: #{conformer_model.5} parent=0 // pred_check_branch
    %423 = sbr.rel (0) target = $region17
  $region16: #{conformer_model.5} parent=0 // pred_region
    _
  $region17: #{conformer_model.5} parent=0 // pred_fallthru
    _
  // Predicated region
  $region18: #{conformer_model.5} parent=0 // pred_check
    _
  $region19: #{conformer_model.5} parent=0 // pred_check_branch
    %425 = sbr.rel (0) target = $region21
  $region20: #{conformer_model.5} parent=0 // pred_region
    _
  $region21: #{conformer_model.5} parent=0 // pred_fallthru
    _

// kernel: conformer_model.6
$region0: #{conformer_model.6}
  #allocation0 [shape = 'u32[]', space=smem, size = 0x4, offset = 0x4, fixed_abs, tag = 'smem constant byte address 0x4 - core index']
  #allocation1 [shape = 'u32[144,128]{1,0:T(1,128)}', space=vmem, size = 0x12000, scoped, tag = 'internal scratch']
  %s0 = inlined_call_operand.vmem [shape: f32[16,224], index: 0, kind: input, shape index: {}]
  %s1 = inlined_call_operand.vmem [shape: f32[224,32], index: 1, kind: input, shape index: {}]
  %s2 = inlined_call_operand.vmem [shape: f32[1,32], index: 2, kind: input, shape index: {}]
  %s3 = inlined_call_operand.vmem [shape: f32[16,32], index: 3, kind: output, shape index: {}]
  %s4 = sld [smem:[#allocation0]]
  $region22: #{conformer_model.6} parent=0
    _
  %s6 = ssub.s32 1, %s4
  %s7 = scalar_select 0, %s6, %s4
  // Predicated region
  $region2: #{conformer_model.6} parent=0 // pred_check
    _
  $region3: #{conformer_model.6} parent=0 // pred_check_branch
    %9 = sbr.rel (0) target = $region5
  $region4: #{conformer_model.6} parent=0 // pred_region
    _
  $region5: #{conformer_model.6} parent=0 // pred_fallthru
    _
  // Predicated region
  $region6: #{conformer_model.6} parent=0 // pred_check
    _
  $region7: #{conformer_model.6} parent=0 // pred_check_branch
    %11 = sbr.rel (0) target = $region9
  $region8: #{conformer_model.6} parent=0 // pred_region
    _
  $region9: #{conformer_model.6} parent=0 // pred_fallthru
    _
  // Predicated region
  $region10: #{conformer_model.6} parent=0 // pred_check
    _
  $region11: #{conformer_model.6} parent=0 // pred_check_branch
    %13 = sbr.rel (0) target = $region13
  $region12: #{conformer_model.6} parent=0 // pred_region
    _
  $region13: #{conformer_model.6} parent=0 // pred_fallthru
    _
  %v14 = vld [vmem:[%s0] sm:$0xff]
  %v15 = vld [vmem:[%s0 + $0x8] sm:$0xff]
  %v16 = vld [vmem:[%s0 + $0x10] sm:$0xff]
  %v17 = vld [vmem:[%s0 + $0x18] sm:$0xff]
  %v18 = vld [vmem:[%s1] sm:$0xff]
  %v19 = vld [vmem:[%s1 + $0x8] sm:$0xff]
  %v20 = vld [vmem:[%s1 + $0x10] sm:$0xff]
  %v21 = vld [vmem:[%s1 + $0x18] sm:$0xff]
  %v22 = vld [vmem:[%s1 + $0x20] sm:$0xff]
  %v23 = vld [vmem:[%s1 + $0x28] sm:$0xff]
  %v24 = vld [vmem:[%s1 + $0x30] sm:$0xff]
  %v25 = vld [vmem:[%s1 + $0x38] sm:$0xff]
  %v26 = vld [vmem:[%s1 + $0x40] sm:$0xff]
  %v27 = vld [vmem:[%s1 + $0x48] sm:$0xff]
  %v28 = vld [vmem:[%s1 + $0x50] sm:$0xff]
  %v29 = vld [vmem:[%s1 + $0x58] sm:$0xff]
  %v30 = vld [vmem:[%s1 + $0x60] sm:$0xff]
  %v31 = vld [vmem:[%s1 + $0x68] sm:$0xff]
  %v32 = vld [vmem:[%s1 + $0x70] sm:$0xff]
  %v33 = vld [vmem:[%s1 + $0x78] sm:$0xff]
  %v34 = vld [vmem:[%s1 + $0x80] sm:$0xff]
  %v35 = vld [vmem:[%s1 + $0x88] sm:$0xff]
  %v36 = vld [vmem:[%s1 + $0x90] sm:$0xff]
  %v37 = vld [vmem:[%s1 + $0x98] sm:$0xff]
  %v38 = vld [vmem:[%s1 + $0xa0] sm:$0xff]
  %v39 = vld [vmem:[%s1 + $0xa8] sm:$0xff]
  %v40 = vld [vmem:[%s1 + $0xb0] sm:$0xff]
  %v41 = vld [vmem:[%s1 + $0xb8] sm:$0xff]
  %v42 = vld [vmem:[%s1 + $0xc0] sm:$0xff]
  %v43 = vld [vmem:[%s1 + $0xc8] sm:$0xff]
  %v44 = vld [vmem:[%s1 + $0xd0] sm:$0xff]
  %v45 = vld [vmem:[%s1 + $0xd8] sm:$0xff]
  %v46 = vld [vmem:[%s2] sm:$0x1]
  %v48 = vlaneseq
  %v49 = vshrl.u32 %v48, 7
  %v50 = vsub.s32 0, %v49
  %v51 = vrot.slane %v46, %v50
  %vm53 = vcmask 785408
  %v55 = vsel %vm53, %v15, 0
  %v58 = vsel %vm53, %v17, 0
  %60 = vmatprep.subr.mxu0 0.0
  %61 = vmatpush1.msra.mxu0 %v18
  %62 = vmatprep.subr.mxu0 0.0
  %63 = vmatpush1.msra.mxu0 %v19
  %64 = vmatprep.subr.mxu0 0.0
  %65 = vmatpush1.msra.mxu0 %v20
  %66 = vmatprep.subr.mxu0 0.0
  %67 = vmatpush1.msra.mxu0 %v21
  %68 = vmatprep.subr.mxu0 0.0
  %69 = vmatpush1.msra.mxu0 %v22
  %70 = vmatprep.subr.mxu0 0.0
  %71 = vmatpush1.msra.mxu0 %v23
  %72 = vmatprep.subr.mxu0 0.0
  %73 = vmatpush1.msra.mxu0 %v24
  %74 = vmatprep.subr.mxu0 0.0
  %75 = vmatpush1.msra.mxu0 %v25
  %76 = vmatprep.subr.mxu0 0.0
  %77 = vmatpush1.msra.mxu0 %v26
  %78 = vmatprep.subr.mxu0 0.0
  %79 = vmatpush1.msra.mxu0 %v27
  %80 = vmatprep.subr.mxu0 0.0
  %81 = vmatpush1.msra.mxu0 %v28
  %82 = vmatprep.subr.mxu0 0.0
  %83 = vmatpush1.msra.mxu0 %v29
  %84 = vmatprep.subr.mxu0 0.0
  %85 = vmatpush1.msra.mxu0 %v30
  %86 = vmatprep.subr.mxu0 0.0
  %87 = vmatpush1.msra.mxu0 %v31
  %88 = vmatprep.subr.mxu0 0.0
  %89 = vmatpush1.msra.mxu0 %v32
  %90 = vmatprep.subr.mxu0 0.0
  %91 = vmatpush1.msra.mxu0 %v33
  %92 = vmatprep.subr.mxu0 0.0
  %93 = vmatpush1.msra.mxu0 %v34
  %94 = vmatprep.subr.mxu0 0.0
  %95 = vmatpush1.msra.mxu0 %v35
  %96 = vmatprep.subr.mxu0 0.0
  %97 = vmatpush1.msra.mxu0 %v36
  %98 = vmatprep.subr.mxu0 0.0
  %99 = vmatpush1.msra.mxu0 %v37
  %100 = vmatprep.subr.mxu0 0.0
  %101 = vmatpush1.msra.mxu0 %v38
  %102 = vmatprep.subr.mxu0 0.0
  %103 = vmatpush1.msra.mxu0 %v39
  %104 = vmatprep.subr.mxu0 0.0
  %105 = vmatpush1.msra.mxu0 %v40
  %106 = vmatprep.subr.mxu0 0.0
  %107 = vmatpush1.msra.mxu0 %v41
  %108 = vmatprep.subr.mxu0 0.0
  %109 = vmatpush1.msra.mxu0 %v42
  %110 = vmatprep.subr.mxu0 0.0
  %111 = vmatpush1.msra.mxu0 %v43
  %112 = vmatprep.subr.mxu0 0.0
  %113 = vmatpush1.msra.mxu0 %v44
  %114 = vmatprep.subr.mxu0 0.0
  %115 = vmatpush1.msra.mxu0 %v45
  %116 = vmatprep.subr.mxu0 0.0
  %117 = vmatpush1.msra.mxu0 0.0
  %118 = vmatprep.subr.mxu0 0.0
  %119 = vmatpush1.msra.mxu0 0.0
  %120 = vmatprep.subr.mxu0 0.0
  %121 = vmatpush1.msra.mxu0 0.0
  %122 = vmatprep.subr.mxu0 0.0
  %123 = vmatpush1.msra.mxu0 0.0
  %124 = vmatprep.mubr.f32.mxu0 %v55
  %125 = vmatmul.mubr.f32.gmra.mrb[0].mxu0 %v14
  %v126 = vpop.f32.mrb[0].mxu0
  %v127 = vadd.f32 %v51, %v126
  %v128 = vpop.f32.mrb[0].mxu0
  %129 = vmatprep.mubr.f32.mxu0 %v58
  %130 = vmatmul.mubr.f32.gmra.mrb[0].mxu0 %v16
  %v131 = vpop.f32.mrb[0].mxu0
  %v132 = vadd.f32 %v51, %v131
  %v133 = vpop.f32.mrb[0].mxu0
  %134 = vdwg.mxu0
  %vm135 = vcmask 261120
  %136 = vst.msk [vmem:[%s3] sm:$0xff] %vm135, %v127
  %137 = vst.msk [vmem:[%s3 + $0x8] sm:$0xff] %vm135, %v132
  // Predicated region
  $region14: #{conformer_model.6} parent=0 // pred_check
    _
  $region15: #{conformer_model.6} parent=0 // pred_check_branch
    %139 = sbr.rel (0) target = $region17
  $region16: #{conformer_model.6} parent=0 // pred_region
    _
  $region17: #{conformer_model.6} parent=0 // pred_fallthru
    _
  // Predicated region
  $region18: #{conformer_model.6} parent=0 // pred_check
    _
  $region19: #{conformer_model.6} parent=0 // pred_check_branch
    %141 = sbr.rel (0) target = $region21
  $region20: #{conformer_model.6} parent=0 // pred_region
    _
  $region21: #{conformer_model.6} parent=0 // pred_fallthru
    _

// kernel: conformer_model.7
$region0: #{conformer_model.7}
  #allocation0 [shape = 'u32[]', space=smem, size = 0x4, offset = 0x4, fixed_abs, tag = 'smem constant byte address 0x4 - core index']
  #allocation1 [shape = 'u32[144,128]{1,0:T(1,128)}', space=vmem, size = 0x12000, scoped, tag = 'internal scratch']
  #allocation2 [shape = 'f32[14,32]{1,0:T(8,128)}', space=vmem, size = 0x2000, scoped, tag = 'scratch operand']
  %s0 = inlined_call_operand.vmem [shape: f32[14,32], index: 0, kind: input, shape index: {}]
  %s1 = inlined_call_operand.vmem [shape: f32[2,1,28], index: 1, kind: input, shape index: {}]
  %s2 = inlined_call_operand.vmem [shape: f32[28,32], index: 2, kind: input, shape index: {}]
  %s3 = inlined_call_operand.vmem [shape: f32[28,28], index: 3, kind: input, shape index: {}]
  %s4 = inlined_call_operand.vmem [shape: f32[3,14,1], index: 4, kind: input, shape index: {}]
  %s5 = inlined_call_operand.vmem [shape: f32[2,2,32], index: 5, kind: input, shape index: {}]
  %s6 = inlined_call_operand.vmem [shape: f32[2,32,128], index: 6, kind: input, shape index: {}]
  %s7 = inlined_call_operand.vmem [shape: f32[2,1,128], index: 7, kind: input, shape index: {}]
  %s8 = inlined_call_operand.vmem [shape: f32[2,128,32], index: 8, kind: input, shape index: {}]
  %s9 = inlined_call_operand.vmem [shape: f32[2,1,32], index: 9, kind: input, shape index: {}]
  %s10 = inlined_call_operand.vmem [shape: f32[2,2,32], index: 10, kind: input, shape index: {}]
  %s11 = inlined_call_operand.vmem [shape: f32[2,32,96], index: 11, kind: input, shape index: {}]
  %s12 = inlined_call_operand.vmem [shape: f32[2,1,96], index: 12, kind: input, shape index: {}]
  %s13 = inlined_call_operand.vmem [shape: f32[2,32,32], index: 13, kind: input, shape index: {}]
  %s14 = inlined_call_operand.vmem [shape: f32[2,1,32], index: 14, kind: input, shape index: {}]
  %s15 = inlined_call_operand.vmem [shape: f32[2,2,32], index: 15, kind: input, shape index: {}]
  %s16 = inlined_call_operand.vmem [shape: f32[2,32,64], index: 16, kind: input, shape index: {}]
  %s17 = inlined_call_operand.vmem [shape: f32[2,1,64], index: 17, kind: input, shape index: {}]
  %s18 = inlined_call_operand.vmem [shape: f32[2,3,32], index: 18, kind: input, shape index: {}]
  %s19 = inlined_call_operand.vmem [shape: f32[2,2,32], index: 19, kind: input, shape index: {}]
  %s20 = inlined_call_operand.vmem [shape: f32[2,32,32], index: 20, kind: input, shape index: {}]
  %s21 = inlined_call_operand.vmem [shape: f32[2,1,32], index: 21, kind: input, shape index: {}]
  %s22 = inlined_call_operand.vmem [shape: f32[2,2,32], index: 22, kind: input, shape index: {}]
  %s23 = inlined_call_operand.vmem [shape: f32[2,32,128], index: 23, kind: input, shape index: {}]
  %s24 = inlined_call_operand.vmem [shape: f32[2,1,128], index: 24, kind: input, shape index: {}]
  %s25 = inlined_call_operand.vmem [shape: f32[2,128,32], index: 25, kind: input, shape index: {}]
  %s26 = inlined_call_operand.vmem [shape: f32[2,1,32], index: 26, kind: input, shape index: {}]
  %s27 = inlined_call_operand.vmem [shape: f32[2,2,32], index: 27, kind: input, shape index: {}]
  %s28 = inlined_call_operand.vmem [shape: f32[14,32], index: 28, kind: output, shape index: {}]
  %s29 = sld [smem:[#allocation0]]
  $region153: #{conformer_model.7} parent=0
    _
  %s31 = ssub.s32 1, %s29
  %s32 = scalar_select 0, %s31, %s29
  loop: start=0, step=1, limit=4
  $region2: #{conformer_model.7} parent=0 // loop_pre_header
    _
  $region3: #{conformer_model.7} parent=0 // loop_header
    %s34 = sphi 0, %s38
    %p35 = scmp.ge.s32.totalorder %s34, 4
    %s42 = sphi 0, %s42
    %s44 = sphi 0, %s42
    %s45 = sphi 0, %s44
    %s59 = sphi 0, %s45
    %s63 = sphi 0, %s63
    %s65 = sphi 0, %s63
    %s66 = sphi 0, %s65
    %s80 = sphi 0, %s66
    %s84 = sphi 0, %s84
    %s86 = sphi 0, %s84
    %s87 = sphi 0, %s86
    %s101 = sphi 0, %s87
    %s105 = sphi 0, %s105
    %s107 = sphi 0, %s105
    %s108 = sphi 0, %s107
    %s122 = sphi 0, %s108
    %s126 = sphi 0, %s126
    %s128 = sphi 0, %s126
    %s129 = sphi 0, %s128
    %s143 = sphi 0, %s129
    %s149 = sphi 0, %s151
    %s152 = sphi 0, %s149
    %s153 = sphi 0, %s152
    %s169 = sphi 0, %s153
    %s175 = sphi 0, %s177
    %s178 = sphi 0, %s175
    %s179 = sphi 0, %s178
    %s195 = sphi 0, %s179
    %s201 = sphi 0, %s203
    %s204 = sphi 0, %s201
    %s205 = sphi 0, %s204
    %s221 = sphi 0, %s205
    %s227 = sphi 0, %s229
    %s230 = sphi 0, %s227
    %s231 = sphi 0, %s230
    %s247 = sphi 0, %s231
    %s253 = sphi 0, %s255
    %s256 = sphi 0, %s253
    %s257 = sphi 0, %s256
    %s273 = sphi 0, %s257
    %s279 = sphi 0, %s281
    %s282 = sphi 0, %s279
    %s283 = sphi 0, %s282
    %s299 = sphi 0, %s283
    %s305 = sphi 0, %s307
    %s308 = sphi 0, %s305
    %s309 = sphi 0, %s308
    %s325 = sphi 0, %s309
    %s331 = sphi 0, %s333
    %s334 = sphi 0, %s331
    %s335 = sphi 0, %s334
    %s351 = sphi 0, %s335
    %s357 = sphi 0, %s359
    %s360 = sphi 0, %s357
    %s361 = sphi 0, %s360
    %s377 = sphi 0, %s361
    %s383 = sphi 0, %s385
    %s386 = sphi 0, %s383
    %s387 = sphi 0, %s386
    %s403 = sphi 0, %s387
    %s409 = sphi 0, %s411
    %s412 = sphi 0, %s409
    %s413 = sphi 0, %s412
    %s429 = sphi 0, %s413
    %s435 = sphi 0, %s437
    %s438 = sphi 0, %s435
    %s439 = sphi 0, %s438
    %s455 = sphi 0, %s439
    %s461 = sphi 0, %s463
    %s464 = sphi 0, %s461
    %s465 = sphi 0, %s464
    %s481 = sphi 0, %s465
    %s487 = sphi 0, %s489
    %s490 = sphi 0, %s487
    %s491 = sphi 0, %s490
    %s507 = sphi 0, %s491
    %s513 = sphi 0, %s515
    %s516 = sphi 0, %s513
    %s517 = sphi 0, %s516
    %s533 = sphi 0, %s517
    %s539 = sphi 0, %s541
    %s542 = sphi 0, %s539
    %s543 = sphi 0, %s542
    %s559 = sphi 0, %s543
    %s565 = sphi 0, %s567
    %s568 = sphi 0, %s565
    %s569 = sphi 0, %s568
    %s585 = sphi 0, %s569
    %s591 = sphi 0, %s593
    %s594 = sphi 0, %s591
    %s595 = sphi 0, %s594
    %s611 = sphi 0, %s595
    %s617 = sphi 0, %s619
    %s620 = sphi 0, %s617
    %s621 = sphi 0, %s620
    %s637 = sphi 0, %s621
    %s643 = sphi 0, %s645
    %s646 = sphi 0, %s643
    %s647 = sphi 0, %s646
    %s663 = sphi 0, %s647
    %s669 = sphi 0, %s671
    %s672 = sphi 0, %s669
    %s673 = sphi 0, %s672
    %s689 = sphi 0, %s673
    %s695 = sphi 0, %s697
    %s698 = sphi 0, %s695
    %s699 = sphi 0, %s698
    %s715 = sphi 0, %s699
    %s721 = sphi 0, %s723
    %s724 = sphi 0, %s721
    %s725 = sphi 0, %s724
    %s741 = sphi 0, %s725
    %s745 = sphi 0, %s745
    %s747 = sphi 0, %s745
    %s748 = sphi 0, %s747
    %s762 = sphi 0, %s748
  $region4: #{conformer_model.7} parent=0 // loop_header_branch
    %37 = sbr.rel (%p35) target = $region8
  $region5: #{conformer_model.7} parent=0 // loop_body
    %s39 = ssub.s32 %s34, 1
    %s40 = ssub.s32 %s34, 2
    %s41 = sadd.s32 %s34, 1
    %s43 = sadd.s32 %s42, 1
    %p46 = scmp.eq.s32.totalorder %s34, 1
    %p47 = scmp.ne.s32.totalorder %s42, %s44
    %p48 = scmp.eq.s32.totalorder %s34, 0
    %p49 = por %p47, %p48
    %p50 = scmp.ne.s32.totalorder %s42, %s44
    %p51 = scmp.eq.s32.totalorder %s39, 1
    %p52 = por %p50, %p51
    %p53 = scmp.ne.s32.totalorder %s44, %s45
    %p54 = scmp.eq.s32.totalorder %s39, 0
    %p55 = por %p53, %p54
    %p56 = scmp.ne.s32.totalorder %s44, %s45
    %p57 = scmp.eq.s32.totalorder %s40, 1
    %p58 = por %p56, %p57
    %p60 = scmp.ne.s32.totalorder %s45, %s59
    %p61 = scmp.eq.s32.totalorder %s40, 0
    %p62 = por %p60, %p61
    %s64 = sadd.s32 %s63, 1
    %p67 = scmp.eq.s32.totalorder %s34, 1
    %p68 = scmp.ne.s32.totalorder %s63, %s65
    %p69 = scmp.eq.s32.totalorder %s34, 0
    %p70 = por %p68, %p69
    %p71 = scmp.ne.s32.totalorder %s63, %s65
    %p72 = scmp.eq.s32.totalorder %s39, 1
    %p73 = por %p71, %p72
    %p74 = scmp.ne.s32.totalorder %s65, %s66
    %p75 = scmp.eq.s32.totalorder %s39, 0
    %p76 = por %p74, %p75
    %p77 = scmp.ne.s32.totalorder %s65, %s66
    %p78 = scmp.eq.s32.totalorder %s40, 1
    %p79 = por %p77, %p78
    %p81 = scmp.ne.s32.totalorder %s66, %s80
    %p82 = scmp.eq.s32.totalorder %s40, 0
    %p83 = por %p81, %p82
    %s85 = sadd.s32 %s84, 1
    %p88 = scmp.eq.s32.totalorder %s34, 1
    %p89 = scmp.ne.s32.totalorder %s84, %s86
    %p90 = scmp.eq.s32.totalorder %s34, 0
    %p91 = por %p89, %p90
    %p92 = scmp.ne.s32.totalorder %s84, %s86
    %p93 = scmp.eq.s32.totalorder %s39, 1
    %p94 = por %p92, %p93
    %p95 = scmp.ne.s32.totalorder %s86, %s87
    %p96 = scmp.eq.s32.totalorder %s39, 0
    %p97 = por %p95, %p96
    %p98 = scmp.ne.s32.totalorder %s86, %s87
    %p99 = scmp.eq.s32.totalorder %s40, 1
    %p100 = por %p98, %p99
    %p102 = scmp.ne.s32.totalorder %s87, %s101
    %p103 = scmp.eq.s32.totalorder %s40, 0
    %p104 = por %p102, %p103
    %s106 = sadd.s32 %s105, 1
    %p109 = scmp.eq.s32.totalorder %s34, 1
    %p110 = scmp.ne.s32.totalorder %s105, %s107
    %p111 = scmp.eq.s32.totalorder %s34, 0
    %p112 = por %p110, %p111
    %p113 = scmp.ne.s32.totalorder %s105, %s107
    %p114 = scmp.eq.s32.totalorder %s39, 1
    %p115 = por %p113, %p114
    %p116 = scmp.ne.s32.totalorder %s107, %s108
    %p117 = scmp.eq.s32.totalorder %s39, 0
    %p118 = por %p116, %p117
    %p119 = scmp.ne.s32.totalorder %s107, %s108
    %p120 = scmp.eq.s32.totalorder %s40, 1
    %p121 = por %p119, %p120
    %p123 = scmp.ne.s32.totalorder %s108, %s122
    %p124 = scmp.eq.s32.totalorder %s40, 0
    %p125 = por %p123, %p124
    %s127 = sadd.s32 %s126, 1
    %p130 = scmp.eq.s32.totalorder %s34, 1
    %p131 = scmp.ne.s32.totalorder %s126, %s128
    %p132 = scmp.eq.s32.totalorder %s34, 0
    %p133 = por %p131, %p132
    %p134 = scmp.ne.s32.totalorder %s126, %s128
    %p135 = scmp.eq.s32.totalorder %s39, 1
    %p136 = por %p134, %p135
    %p137 = scmp.ne.s32.totalorder %s128, %s129
    %p138 = scmp.eq.s32.totalorder %s39, 0
    %p139 = por %p137, %p138
    %p140 = scmp.ne.s32.totalorder %s128, %s129
    %p141 = scmp.eq.s32.totalorder %s40, 1
    %p142 = por %p140, %p141
    %p144 = scmp.ne.s32.totalorder %s129, %s143
    %p145 = scmp.eq.s32.totalorder %s40, 0
    %p146 = por %p144, %p145
    %s147 = ssub.s32 %s34, %s41
    %p148 = scmp.eq.s32.totalorder %s147, 0
    %s150 = sadd.s32 %s149, 1
    %s151 = scalar_select %p148, %s149, %s150
    %p154 = pneg %p148
    %p155 = scmp.eq.s32.totalorder %s34, 1
    %p156 = por %p154, %p155
    %p157 = scmp.ne.s32.totalorder %s149, %s152
    %p158 = scmp.eq.s32.totalorder %s34, 0
    %p159 = por %p157, %p158
    %p160 = scmp.ne.s32.totalorder %s149, %s152
    %p161 = scmp.eq.s32.totalorder %s39, 1
    %p162 = por %p160, %p161
    %p163 = scmp.ne.s32.totalorder %s152, %s153
    %p164 = scmp.eq.s32.totalorder %s39, 0
    %p165 = por %p163, %p164
    %p166 = scmp.ne.s32.totalorder %s152, %s153
    %p167 = scmp.eq.s32.totalorder %s40, 1
    %p168 = por %p166, %p167
    %p170 = scmp.ne.s32.totalorder %s153, %s169
    %p171 = scmp.eq.s32.totalorder %s40, 0
    %p172 = por %p170, %p171
    %s173 = ssub.s32 %s34, %s41
    %p174 = scmp.eq.s32.totalorder %s173, 0
    %s176 = sadd.s32 %s175, 1
    %s177 = scalar_select %p174, %s175, %s176
    %p180 = pneg %p174
    %p181 = scmp.eq.s32.totalorder %s34, 1
    %p182 = por %p180, %p181
    %p183 = scmp.ne.s32.totalorder %s175, %s178
    %p184 = scmp.eq.s32.totalorder %s34, 0
    %p185 = por %p183, %p184
    %p186 = scmp.ne.s32.totalorder %s175, %s178
    %p187 = scmp.eq.s32.totalorder %s39, 1
    %p188 = por %p186, %p187
    %p189 = scmp.ne.s32.totalorder %s178, %s179
    %p190 = scmp.eq.s32.totalorder %s39, 0
    %p191 = por %p189, %p190
    %p192 = scmp.ne.s32.totalorder %s178, %s179
    %p193 = scmp.eq.s32.totalorder %s40, 1
    %p194 = por %p192, %p193
    %p196 = scmp.ne.s32.totalorder %s179, %s195
    %p197 = scmp.eq.s32.totalorder %s40, 0
    %p198 = por %p196, %p197
    %s199 = ssub.s32 %s34, %s41
    %p200 = scmp.eq.s32.totalorder %s199, 0
    %s202 = sadd.s32 %s201, 1
    %s203 = scalar_select %p200, %s201, %s202
    %p206 = pneg %p200
    %p207 = scmp.eq.s32.totalorder %s34, 1
    %p208 = por %p206, %p207
    %p209 = scmp.ne.s32.totalorder %s201, %s204
    %p210 = scmp.eq.s32.totalorder %s34, 0
    %p211 = por %p209, %p210
    %p212 = scmp.ne.s32.totalorder %s201, %s204
    %p213 = scmp.eq.s32.totalorder %s39, 1
    %p214 = por %p212, %p213
    %p215 = scmp.ne.s32.totalorder %s204, %s205
    %p216 = scmp.eq.s32.totalorder %s39, 0
    %p217 = por %p215, %p216
    %p218 = scmp.ne.s32.totalorder %s204, %s205
    %p219 = scmp.eq.s32.totalorder %s40, 1
    %p220 = por %p218, %p219
    %p222 = scmp.ne.s32.totalorder %s205, %s221
    %p223 = scmp.eq.s32.totalorder %s40, 0
    %p224 = por %p222, %p223
    %s225 = ssub.s32 %s34, %s41
    %p226 = scmp.eq.s32.totalorder %s225, 0
    %s228 = sadd.s32 %s227, 1
    %s229 = scalar_select %p226, %s227, %s228
    %p232 = pneg %p226
    %p233 = scmp.eq.s32.totalorder %s34, 1
    %p234 = por %p232, %p233
    %p235 = scmp.ne.s32.totalorder %s227, %s230
    %p236 = scmp.eq.s32.totalorder %s34, 0
    %p237 = por %p235, %p236
    %p238 = scmp.ne.s32.totalorder %s227, %s230
    %p239 = scmp.eq.s32.totalorder %s39, 1
    %p240 = por %p238, %p239
    %p241 = scmp.ne.s32.totalorder %s230, %s231
    %p242 = scmp.eq.s32.totalorder %s39, 0
    %p243 = por %p241, %p242
    %p244 = scmp.ne.s32.totalorder %s230, %s231
    %p245 = scmp.eq.s32.totalorder %s40, 1
    %p246 = por %p244, %p245
    %p248 = scmp.ne.s32.totalorder %s231, %s247
    %p249 = scmp.eq.s32.totalorder %s40, 0
    %p250 = por %p248, %p249
    %s251 = ssub.s32 %s34, %s41
    %p252 = scmp.eq.s32.totalorder %s251, 0
    %s254 = sadd.s32 %s253, 1
    %s255 = scalar_select %p252, %s253, %s254
    %p258 = pneg %p252
    %p259 = scmp.eq.s32.totalorder %s34, 1
    %p260 = por %p258, %p259
    %p261 = scmp.ne.s32.totalorder %s253, %s256
    %p262 = scmp.eq.s32.totalorder %s34, 0
    %p263 = por %p261, %p262
    %p264 = scmp.ne.s32.totalorder %s253, %s256
    %p265 = scmp.eq.s32.totalorder %s39, 1
    %p266 = por %p264, %p265
    %p267 = scmp.ne.s32.totalorder %s256, %s257
    %p268 = scmp.eq.s32.totalorder %s39, 0
    %p269 = por %p267, %p268
    %p270 = scmp.ne.s32.totalorder %s256, %s257
    %p271 = scmp.eq.s32.totalorder %s40, 1
    %p272 = por %p270, %p271
    %p274 = scmp.ne.s32.totalorder %s257, %s273
    %p275 = scmp.eq.s32.totalorder %s40, 0
    %p276 = por %p274, %p275
    %s277 = ssub.s32 %s34, %s41
    %p278 = scmp.eq.s32.totalorder %s277, 0
    %s280 = sadd.s32 %s279, 1
    %s281 = scalar_select %p278, %s279, %s280
    %p284 = pneg %p278
    %p285 = scmp.eq.s32.totalorder %s34, 1
    %p286 = por %p284, %p285
    %p287 = scmp.ne.s32.totalorder %s279, %s282
    %p288 = scmp.eq.s32.totalorder %s34, 0
    %p289 = por %p287, %p288
    %p290 = scmp.ne.s32.totalorder %s279, %s282
    %p291 = scmp.eq.s32.totalorder %s39, 1
    %p292 = por %p290, %p291
    %p293 = scmp.ne.s32.totalorder %s282, %s283
    %p294 = scmp.eq.s32.totalorder %s39, 0
    %p295 = por %p293, %p294
    %p296 = scmp.ne.s32.totalorder %s282, %s283
    %p297 = scmp.eq.s32.totalorder %s40, 1
    %p298 = por %p296, %p297
    %p300 = scmp.ne.s32.totalorder %s283, %s299
    %p301 = scmp.eq.s32.totalorder %s40, 0
    %p302 = por %p300, %p301
    %s303 = ssub.s32 %s34, %s41
    %p304 = scmp.eq.s32.totalorder %s303, 0
    %s306 = sadd.s32 %s305, 1
    %s307 = scalar_select %p304, %s305, %s306
    %p310 = pneg %p304
    %p311 = scmp.eq.s32.totalorder %s34, 1
    %p312 = por %p310, %p311
    %p313 = scmp.ne.s32.totalorder %s305, %s308
    %p314 = scmp.eq.s32.totalorder %s34, 0
    %p315 = por %p313, %p314
    %p316 = scmp.ne.s32.totalorder %s305, %s308
    %p317 = scmp.eq.s32.totalorder %s39, 1
    %p318 = por %p316, %p317
    %p319 = scmp.ne.s32.totalorder %s308, %s309
    %p320 = scmp.eq.s32.totalorder %s39, 0
    %p321 = por %p319, %p320
    %p322 = scmp.ne.s32.totalorder %s308, %s309
    %p323 = scmp.eq.s32.totalorder %s40, 1
    %p324 = por %p322, %p323
    %p326 = scmp.ne.s32.totalorder %s309, %s325
    %p327 = scmp.eq.s32.totalorder %s40, 0
    %p328 = por %p326, %p327
    %s329 = ssub.s32 %s34, %s41
    %p330 = scmp.eq.s32.totalorder %s329, 0
    %s332 = sadd.s32 %s331, 1
    %s333 = scalar_select %p330, %s331, %s332
    %p336 = pneg %p330
    %p337 = scmp.eq.s32.totalorder %s34, 1
    %p338 = por %p336, %p337
    %p339 = scmp.ne.s32.totalorder %s331, %s334
    %p340 = scmp.eq.s32.totalorder %s34, 0
    %p341 = por %p339, %p340
    %p342 = scmp.ne.s32.totalorder %s331, %s334
    %p343 = scmp.eq.s32.totalorder %s39, 1
    %p344 = por %p342, %p343
    %p345 = scmp.ne.s32.totalorder %s334, %s335
    %p346 = scmp.eq.s32.totalorder %s39, 0
    %p347 = por %p345, %p346
    %p348 = scmp.ne.s32.totalorder %s334, %s335
    %p349 = scmp.eq.s32.totalorder %s40, 1
    %p350 = por %p348, %p349
    %p352 = scmp.ne.s32.totalorder %s335, %s351
    %p353 = scmp.eq.s32.totalorder %s40, 0
    %p354 = por %p352, %p353
    %s355 = ssub.s32 %s34, %s41
    %p356 = scmp.eq.s32.totalorder %s355, 0
    %s358 = sadd.s32 %s357, 1
    %s359 = scalar_select %p356, %s357, %s358
    %p362 = pneg %p356
    %p363 = scmp.eq.s32.totalorder %s34, 1
    %p364 = por %p362, %p363
    %p365 = scmp.ne.s32.totalorder %s357, %s360
    %p366 = scmp.eq.s32.totalorder %s34, 0
    %p367 = por %p365, %p366
    %p368 = scmp.ne.s32.totalorder %s357, %s360
    %p369 = scmp.eq.s32.totalorder %s39, 1
    %p370 = por %p368, %p369
    %p371 = scmp.ne.s32.totalorder %s360, %s361
    %p372 = scmp.eq.s32.totalorder %s39, 0
    %p373 = por %p371, %p372
    %p374 = scmp.ne.s32.totalorder %s360, %s361
    %p375 = scmp.eq.s32.totalorder %s40, 1
    %p376 = por %p374, %p375
    %p378 = scmp.ne.s32.totalorder %s361, %s377
    %p379 = scmp.eq.s32.totalorder %s40, 0
    %p380 = por %p378, %p379
    %s381 = ssub.s32 %s34, %s41
    %p382 = scmp.eq.s32.totalorder %s381, 0
    %s384 = sadd.s32 %s383, 1
    %s385 = scalar_select %p382, %s383, %s384
    %p388 = pneg %p382
    %p389 = scmp.eq.s32.totalorder %s34, 1
    %p390 = por %p388, %p389
    %p391 = scmp.ne.s32.totalorder %s383, %s386
    %p392 = scmp.eq.s32.totalorder %s34, 0
    %p393 = por %p391, %p392
    %p394 = scmp.ne.s32.totalorder %s383, %s386
    %p395 = scmp.eq.s32.totalorder %s39, 1
    %p396 = por %p394, %p395
    %p397 = scmp.ne.s32.totalorder %s386, %s387
    %p398 = scmp.eq.s32.totalorder %s39, 0
    %p399 = por %p397, %p398
    %p400 = scmp.ne.s32.totalorder %s386, %s387
    %p401 = scmp.eq.s32.totalorder %s40, 1
    %p402 = por %p400, %p401
    %p404 = scmp.ne.s32.totalorder %s387, %s403
    %p405 = scmp.eq.s32.totalorder %s40, 0
    %p406 = por %p404, %p405
    %s407 = ssub.s32 %s34, %s41
    %p408 = scmp.eq.s32.totalorder %s407, 0
    %s410 = sadd.s32 %s409, 1
    %s411 = scalar_select %p408, %s409, %s410
    %p414 = pneg %p408
    %p415 = scmp.eq.s32.totalorder %s34, 1
    %p416 = por %p414, %p415
    %p417 = scmp.ne.s32.totalorder %s409, %s412
    %p418 = scmp.eq.s32.totalorder %s34, 0
    %p419 = por %p417, %p418
    %p420 = scmp.ne.s32.totalorder %s409, %s412
    %p421 = scmp.eq.s32.totalorder %s39, 1
    %p422 = por %p420, %p421
    %p423 = scmp.ne.s32.totalorder %s412, %s413
    %p424 = scmp.eq.s32.totalorder %s39, 0
    %p425 = por %p423, %p424
    %p426 = scmp.ne.s32.totalorder %s412, %s413
    %p427 = scmp.eq.s32.totalorder %s40, 1
    %p428 = por %p426, %p427
    %p430 = scmp.ne.s32.totalorder %s413, %s429
    %p431 = scmp.eq.s32.totalorder %s40, 0
    %p432 = por %p430, %p431
    %s433 = ssub.s32 %s34, %s41
    %p434 = scmp.eq.s32.totalorder %s433, 0
    %s436 = sadd.s32 %s435, 1
    %s437 = scalar_select %p434, %s435, %s436
    %p440 = pneg %p434
    %p441 = scmp.eq.s32.totalorder %s34, 1
    %p442 = por %p440, %p441
    %p443 = scmp.ne.s32.totalorder %s435, %s438
    %p444 = scmp.eq.s32.totalorder %s34, 0
    %p445 = por %p443, %p444
    %p446 = scmp.ne.s32.totalorder %s435, %s438
    %p447 = scmp.eq.s32.totalorder %s39, 1
    %p448 = por %p446, %p447
    %p449 = scmp.ne.s32.totalorder %s438, %s439
    %p450 = scmp.eq.s32.totalorder %s39, 0
    %p451 = por %p449, %p450
    %p452 = scmp.ne.s32.totalorder %s438, %s439
    %p453 = scmp.eq.s32.totalorder %s40, 1
    %p454 = por %p452, %p453
    %p456 = scmp.ne.s32.totalorder %s439, %s455
    %p457 = scmp.eq.s32.totalorder %s40, 0
    %p458 = por %p456, %p457
    %s459 = ssub.s32 %s34, %s41
    %p460 = scmp.eq.s32.totalorder %s459, 0
    %s462 = sadd.s32 %s461, 1
    %s463 = scalar_select %p460, %s461, %s462
    %p466 = pneg %p460
    %p467 = scmp.eq.s32.totalorder %s34, 1
    %p468 = por %p466, %p467
    %p469 = scmp.ne.s32.totalorder %s461, %s464
    %p470 = scmp.eq.s32.totalorder %s34, 0
    %p471 = por %p469, %p470
    %p472 = scmp.ne.s32.totalorder %s461, %s464
    %p473 = scmp.eq.s32.totalorder %s39, 1
    %p474 = por %p472, %p473
    %p475 = scmp.ne.s32.totalorder %s464, %s465
    %p476 = scmp.eq.s32.totalorder %s39, 0
    %p477 = por %p475, %p476
    %p478 = scmp.ne.s32.totalorder %s464, %s465
    %p479 = scmp.eq.s32.totalorder %s40, 1
    %p480 = por %p478, %p479
    %p482 = scmp.ne.s32.totalorder %s465, %s481
    %p483 = scmp.eq.s32.totalorder %s40, 0
    %p484 = por %p482, %p483
    %s485 = ssub.s32 %s34, %s41
    %p486 = scmp.eq.s32.totalorder %s485, 0
    %s488 = sadd.s32 %s487, 1
    %s489 = scalar_select %p486, %s487, %s488
    %p492 = pneg %p486
    %p493 = scmp.eq.s32.totalorder %s34, 1
    %p494 = por %p492, %p493
    %p495 = scmp.ne.s32.totalorder %s487, %s490
    %p496 = scmp.eq.s32.totalorder %s34, 0
    %p497 = por %p495, %p496
    %p498 = scmp.ne.s32.totalorder %s487, %s490
    %p499 = scmp.eq.s32.totalorder %s39, 1
    %p500 = por %p498, %p499
    %p501 = scmp.ne.s32.totalorder %s490, %s491
    %p502 = scmp.eq.s32.totalorder %s39, 0
    %p503 = por %p501, %p502
    %p504 = scmp.ne.s32.totalorder %s490, %s491
    %p505 = scmp.eq.s32.totalorder %s40, 1
    %p506 = por %p504, %p505
    %p508 = scmp.ne.s32.totalorder %s491, %s507
    %p509 = scmp.eq.s32.totalorder %s40, 0
    %p510 = por %p508, %p509
    %s511 = ssub.s32 %s34, %s41
    %p512 = scmp.eq.s32.totalorder %s511, 0
    %s514 = sadd.s32 %s513, 1
    %s515 = scalar_select %p512, %s513, %s514
    %p518 = pneg %p512
    %p519 = scmp.eq.s32.totalorder %s34, 1
    %p520 = por %p518, %p519
    %p521 = scmp.ne.s32.totalorder %s513, %s516
    %p522 = scmp.eq.s32.totalorder %s34, 0
    %p523 = por %p521, %p522
    %p524 = scmp.ne.s32.totalorder %s513, %s516
    %p525 = scmp.eq.s32.totalorder %s39, 1
    %p526 = por %p524, %p525
    %p527 = scmp.ne.s32.totalorder %s516, %s517
    %p528 = scmp.eq.s32.totalorder %s39, 0
    %p529 = por %p527, %p528
    %p530 = scmp.ne.s32.totalorder %s516, %s517
    %p531 = scmp.eq.s32.totalorder %s40, 1
    %p532 = por %p530, %p531
    %p534 = scmp.ne.s32.totalorder %s517, %s533
    %p535 = scmp.eq.s32.totalorder %s40, 0
    %p536 = por %p534, %p535
    %s537 = ssub.s32 %s34, %s41
    %p538 = scmp.eq.s32.totalorder %s537, 0
    %s540 = sadd.s32 %s539, 1
    %s541 = scalar_select %p538, %s539, %s540
    %p544 = pneg %p538
    %p545 = scmp.eq.s32.totalorder %s34, 1
    %p546 = por %p544, %p545
    %p547 = scmp.ne.s32.totalorder %s539, %s542
    %p548 = scmp.eq.s32.totalorder %s34, 0
    %p549 = por %p547, %p548
    %p550 = scmp.ne.s32.totalorder %s539, %s542
    %p551 = scmp.eq.s32.totalorder %s39, 1
    %p552 = por %p550, %p551
    %p553 = scmp.ne.s32.totalorder %s542, %s543
    %p554 = scmp.eq.s32.totalorder %s39, 0
    %p555 = por %p553, %p554
    %p556 = scmp.ne.s32.totalorder %s542, %s543
    %p557 = scmp.eq.s32.totalorder %s40, 1
    %p558 = por %p556, %p557
    %p560 = scmp.ne.s32.totalorder %s543, %s559
    %p561 = scmp.eq.s32.totalorder %s40, 0
    %p562 = por %p560, %p561
    %s563 = ssub.s32 %s34, %s41
    %p564 = scmp.eq.s32.totalorder %s563, 0
    %s566 = sadd.s32 %s565, 1
    %s567 = scalar_select %p564, %s565, %s566
    %p570 = pneg %p564
    %p571 = scmp.eq.s32.totalorder %s34, 1
    %p572 = por %p570, %p571
    %p573 = scmp.ne.s32.totalorder %s565, %s568
    %p574 = scmp.eq.s32.totalorder %s34, 0
    %p575 = por %p573, %p574
    %p576 = scmp.ne.s32.totalorder %s565, %s568
    %p577 = scmp.eq.s32.totalorder %s39, 1
    %p578 = por %p576, %p577
    %p579 = scmp.ne.s32.totalorder %s568, %s569
    %p580 = scmp.eq.s32.totalorder %s39, 0
    %p581 = por %p579, %p580
    %p582 = scmp.ne.s32.totalorder %s568, %s569
    %p583 = scmp.eq.s32.totalorder %s40, 1
    %p584 = por %p582, %p583
    %p586 = scmp.ne.s32.totalorder %s569, %s585
    %p587 = scmp.eq.s32.totalorder %s40, 0
    %p588 = por %p586, %p587
    %s589 = ssub.s32 %s34, %s41
    %p590 = scmp.eq.s32.totalorder %s589, 0
    %s592 = sadd.s32 %s591, 1
    %s593 = scalar_select %p590, %s591, %s592
    %p596 = pneg %p590
    %p597 = scmp.eq.s32.totalorder %s34, 1
    %p598 = por %p596, %p597
    %p599 = scmp.ne.s32.totalorder %s591, %s594
    %p600 = scmp.eq.s32.totalorder %s34, 0
    %p601 = por %p599, %p600
    %p602 = scmp.ne.s32.totalorder %s591, %s594
    %p603 = scmp.eq.s32.totalorder %s39, 1
    %p604 = por %p602, %p603
    %p605 = scmp.ne.s32.totalorder %s594, %s595
    %p606 = scmp.eq.s32.totalorder %s39, 0
    %p607 = por %p605, %p606
    %p608 = scmp.ne.s32.totalorder %s594, %s595
    %p609 = scmp.eq.s32.totalorder %s40, 1
    %p610 = por %p608, %p609
    %p612 = scmp.ne.s32.totalorder %s595, %s611
    %p613 = scmp.eq.s32.totalorder %s40, 0
    %p614 = por %p612, %p613
    %s615 = ssub.s32 %s34, %s41
    %p616 = scmp.eq.s32.totalorder %s615, 0
    %s618 = sadd.s32 %s617, 1
    %s619 = scalar_select %p616, %s617, %s618
    %p622 = pneg %p616
    %p623 = scmp.eq.s32.totalorder %s34, 1
    %p624 = por %p622, %p623
    %p625 = scmp.ne.s32.totalorder %s617, %s620
    %p626 = scmp.eq.s32.totalorder %s34, 0
    %p627 = por %p625, %p626
    %p628 = scmp.ne.s32.totalorder %s617, %s620
    %p629 = scmp.eq.s32.totalorder %s39, 1
    %p630 = por %p628, %p629
    %p631 = scmp.ne.s32.totalorder %s620, %s621
    %p632 = scmp.eq.s32.totalorder %s39, 0
    %p633 = por %p631, %p632
    %p634 = scmp.ne.s32.totalorder %s620, %s621
    %p635 = scmp.eq.s32.totalorder %s40, 1
    %p636 = por %p634, %p635
    %p638 = scmp.ne.s32.totalorder %s621, %s637
    %p639 = scmp.eq.s32.totalorder %s40, 0
    %p640 = por %p638, %p639
    %s641 = ssub.s32 %s34, %s41
    %p642 = scmp.eq.s32.totalorder %s641, 0
    %s644 = sadd.s32 %s643, 1
    %s645 = scalar_select %p642, %s643, %s644
    %p648 = pneg %p642
    %p649 = scmp.eq.s32.totalorder %s34, 1
    %p650 = por %p648, %p649
    %p651 = scmp.ne.s32.totalorder %s643, %s646
    %p652 = scmp.eq.s32.totalorder %s34, 0
    %p653 = por %p651, %p652
    %p654 = scmp.ne.s32.totalorder %s643, %s646
    %p655 = scmp.eq.s32.totalorder %s39, 1
    %p656 = por %p654, %p655
    %p657 = scmp.ne.s32.totalorder %s646, %s647
    %p658 = scmp.eq.s32.totalorder %s39, 0
    %p659 = por %p657, %p658
    %p660 = scmp.ne.s32.totalorder %s646, %s647
    %p661 = scmp.eq.s32.totalorder %s40, 1
    %p662 = por %p660, %p661
    %p664 = scmp.ne.s32.totalorder %s647, %s663
    %p665 = scmp.eq.s32.totalorder %s40, 0
    %p666 = por %p664, %p665
    %s667 = ssub.s32 %s34, %s41
    %p668 = scmp.eq.s32.totalorder %s667, 0
    %s670 = sadd.s32 %s669, 1
    %s671 = scalar_select %p668, %s669, %s670
    %p674 = pneg %p668
    %p675 = scmp.eq.s32.totalorder %s34, 1
    %p676 = por %p674, %p675
    %p677 = scmp.ne.s32.totalorder %s669, %s672
    %p678 = scmp.eq.s32.totalorder %s34, 0
    %p679 = por %p677, %p678
    %p680 = scmp.ne.s32.totalorder %s669, %s672
    %p681 = scmp.eq.s32.totalorder %s39, 1
    %p682 = por %p680, %p681
    %p683 = scmp.ne.s32.totalorder %s672, %s673
    %p684 = scmp.eq.s32.totalorder %s39, 0
    %p685 = por %p683, %p684
    %p686 = scmp.ne.s32.totalorder %s672, %s673
    %p687 = scmp.eq.s32.totalorder %s40, 1
    %p688 = por %p686, %p687
    %p690 = scmp.ne.s32.totalorder %s673, %s689
    %p691 = scmp.eq.s32.totalorder %s40, 0
    %p692 = por %p690, %p691
    %s693 = ssub.s32 %s34, %s41
    %p694 = scmp.eq.s32.totalorder %s693, 0
    %s696 = sadd.s32 %s695, 1
    %s697 = scalar_select %p694, %s695, %s696
    %p700 = pneg %p694
    %p701 = scmp.eq.s32.totalorder %s34, 1
    %p702 = por %p700, %p701
    %p703 = scmp.ne.s32.totalorder %s695, %s698
    %p704 = scmp.eq.s32.totalorder %s34, 0
    %p705 = por %p703, %p704
    %p706 = scmp.ne.s32.totalorder %s695, %s698
    %p707 = scmp.eq.s32.totalorder %s39, 1
    %p708 = por %p706, %p707
    %p709 = scmp.ne.s32.totalorder %s698, %s699
    %p710 = scmp.eq.s32.totalorder %s39, 0
    %p711 = por %p709, %p710
    %p712 = scmp.ne.s32.totalorder %s698, %s699
    %p713 = scmp.eq.s32.totalorder %s40, 1
    %p714 = por %p712, %p713
    %p716 = scmp.ne.s32.totalorder %s699, %s715
    %p717 = scmp.eq.s32.totalorder %s40, 0
    %p718 = por %p716, %p717
    %s719 = ssub.s32 %s34, %s41
    %p720 = scmp.eq.s32.totalorder %s719, 0
    %s722 = sadd.s32 %s721, 1
    %s723 = scalar_select %p720, %s721, %s722
    %p726 = pneg %p720
    %p727 = scmp.eq.s32.totalorder %s34, 1
    %p728 = por %p726, %p727
    %p729 = scmp.ne.s32.totalorder %s721, %s724
    %p730 = scmp.eq.s32.totalorder %s34, 0
    %p731 = por %p729, %p730
    %p732 = scmp.ne.s32.totalorder %s721, %s724
    %p733 = scmp.eq.s32.totalorder %s39, 1
    %p734 = por %p732, %p733
    %p735 = scmp.ne.s32.totalorder %s724, %s725
    %p736 = scmp.eq.s32.totalorder %s39, 0
    %p737 = por %p735, %p736
    %p738 = scmp.ne.s32.totalorder %s724, %s725
    %p739 = scmp.eq.s32.totalorder %s40, 1
    %p740 = por %p738, %p739
    %p742 = scmp.ne.s32.totalorder %s725, %s741
    %p743 = scmp.eq.s32.totalorder %s40, 0
    %p744 = por %p742, %p743
    %s746 = sadd.s32 %s745, 1
    %p749 = scmp.eq.s32.totalorder %s34, 1
    %p750 = scmp.ne.s32.totalorder %s745, %s747
    %p751 = scmp.eq.s32.totalorder %s34, 0
    %p752 = por %p750, %p751
    %p753 = scmp.ne.s32.totalorder %s745, %s747
    %p754 = scmp.eq.s32.totalorder %s39, 1
    %p755 = por %p753, %p754
    %p756 = scmp.ne.s32.totalorder %s747, %s748
    %p757 = scmp.eq.s32.totalorder %s39, 0
    %p758 = por %p756, %p757
    %p759 = scmp.ne.s32.totalorder %s747, %s748
    %p760 = scmp.eq.s32.totalorder %s40, 1
    %p761 = por %p759, %p760
    %p763 = scmp.ne.s32.totalorder %s748, %s762
    %p764 = scmp.eq.s32.totalorder %s40, 0
    %p765 = por %p763, %p764
    %p766 = scmp.le.s32.totalorder 1, %s34
    %p767 = scmp.lt.s32.totalorder %s34, 3
    %p768 = pnand %p766, %p767
    %p769 = pneg %p768
    // Predicated region
    $region9: #{conformer_model.7} parent=5 // pred_check
      _
    $region10: #{conformer_model.7} parent=5 // pred_check_branch
      %771 = sbr.rel (%p768) target = $region12
    $region11: #{conformer_model.7} parent=5 // pred_region
      %s772 = ssub.s32 %s34, 1
      // Predicated region
      $region13: #{conformer_model.7} parent=11 // pred_check
        %p773 = pneg %p55
      $region14: #{conformer_model.7} parent=11 // pred_check_branch
        %775 = sbr.rel (%p773) target = $region16
      $region15: #{conformer_model.7} parent=11 // pred_region
        _
      $region16: #{conformer_model.7} parent=11 // pred_fallthru
        _
      // Predicated region
      $region17: #{conformer_model.7} parent=11 // pred_check
        %p776 = pneg %p76
      $region18: #{conformer_model.7} parent=11 // pred_check_branch
        %778 = sbr.rel (%p776) target = $region20
      $region19: #{conformer_model.7} parent=11 // pred_region
        _
      $region20: #{conformer_model.7} parent=11 // pred_fallthru
        _
      // Predicated region
      $region21: #{conformer_model.7} parent=11 // pred_check
        %p779 = pneg %p97
      $region22: #{conformer_model.7} parent=11 // pred_check_branch
        %781 = sbr.rel (%p779) target = $region24
      $region23: #{conformer_model.7} parent=11 // pred_region
        _
      $region24: #{conformer_model.7} parent=11 // pred_fallthru
        _
      // Predicated region
      $region25: #{conformer_model.7} parent=11 // pred_check
        %p782 = pneg %p118
      $region26: #{conformer_model.7} parent=11 // pred_check_branch
        %784 = sbr.rel (%p782) target = $region28
      $region27: #{conformer_model.7} parent=11 // pred_region
        _
      $region28: #{conformer_model.7} parent=11 // pred_fallthru
        _
      // Predicated region
      $region29: #{conformer_model.7} parent=11 // pred_check
        %p785 = pneg %p139
      $region30: #{conformer_model.7} parent=11 // pred_check_branch
        %787 = sbr.rel (%p785) target = $region32
      $region31: #{conformer_model.7} parent=11 // pred_region
        _
      $region32: #{conformer_model.7} parent=11 // pred_fallthru
        _
    $region12: #{conformer_model.7} parent=5 // pred_fallthru
      _
    %p788 = scmp.lt.s32.totalorder %s34, 2
    // Predicated region
    $region33: #{conformer_model.7} parent=5 // pred_check
      %p789 = pneg %p788
    $region34: #{conformer_model.7} parent=5 // pred_check_branch
      %791 = sbr.rel (%p789) target = $region36
    $region35: #{conformer_model.7} parent=5 // pred_region
      // Predicated region
      $region37: #{conformer_model.7} parent=35 // pred_check
        %p792 = pneg %p159
      $region38: #{conformer_model.7} parent=35 // pred_check_branch
        %794 = sbr.rel (%p792) target = $region40
      $region39: #{conformer_model.7} parent=35 // pred_region
        %p795 = scmp.lt.s32.totalorder %s34, 1
        %s796 = scalar_select %p795, %s34, 1
        %s797 = smul.addr %s796, 2
        %s798 = scalar_lea.vmem %s5, %s797
      $region40: #{conformer_model.7} parent=35 // pred_fallthru
        _
      // Predicated region
      $region41: #{conformer_model.7} parent=35 // pred_check
        %p799 = pneg %p185
      $region42: #{conformer_model.7} parent=35 // pred_check_branch
        %801 = sbr.rel (%p799) target = $region44
      $region43: #{conformer_model.7} parent=35 // pred_region
        %p802 = scmp.lt.s32.totalorder %s34, 1
        %s803 = scalar_select %p802, %s34, 1
        %s804 = smul.addr %s803, 4
        %s805 = smul.addr %s804, 8
        %s806 = scalar_lea.vmem %s6, %s805
      $region44: #{conformer_model.7} parent=35 // pred_fallthru
        _
      // Predicated region
      $region45: #{conformer_model.7} parent=35 // pred_check
        %p807 = pneg %p211
      $region46: #{conformer_model.7} parent=35 // pred_check_branch
        %809 = sbr.rel (%p807) target = $region48
      $region47: #{conformer_model.7} parent=35 // pred_region
        %p810 = scmp.lt.s32.totalorder %s34, 1
        %s811 = scalar_select %p810, %s34, 1
        %s812 = scalar_lea.vmem %s7, %s811
      $region48: #{conformer_model.7} parent=35 // pred_fallthru
        _
      // Predicated region
      $region49: #{conformer_model.7} parent=35 // pred_check
        %p813 = pneg %p237
      $region50: #{conformer_model.7} parent=35 // pred_check_branch
        %815 = sbr.rel (%p813) target = $region52
      $region51: #{conformer_model.7} parent=35 // pred_region
        %p816 = scmp.lt.s32.totalorder %s34, 1
        %s817 = scalar_select %p816, %s34, 1
        %s818 = smul.addr %s817, 16
        %s819 = smul.addr %s818, 8
        %s820 = scalar_lea.vmem %s8, %s819
      $region52: #{conformer_model.7} parent=35 // pred_fallthru
        _
      // Predicated region
      $region53: #{conformer_model.7} parent=35 // pred_check
        %p821 = pneg %p263
      $region54: #{conformer_model.7} parent=35 // pred_check_branch
        %823 = sbr.rel (%p821) target = $region56
      $region55: #{conformer_model.7} parent=35 // pred_region
        %p824 = scmp.lt.s32.totalorder %s34, 1
        %s825 = scalar_select %p824, %s34, 1
        %s826 = scalar_lea.vmem %s9, %s825
      $region56: #{conformer_model.7} parent=35 // pred_fallthru
        _
      // Predicated region
      $region57: #{conformer_model.7} parent=35 // pred_check
        %p827 = pneg %p289
      $region58: #{conformer_model.7} parent=35 // pred_check_branch
        %829 = sbr.rel (%p827) target = $region60
      $region59: #{conformer_model.7} parent=35 // pred_region
        %p830 = scmp.lt.s32.totalorder %s34, 1
        %s831 = scalar_select %p830, %s34, 1
        %s832 = smul.addr %s831, 2
        %s833 = scalar_lea.vmem %s10, %s832
      $region60: #{conformer_model.7} parent=35 // pred_fallthru
        _
      // Predicated region
      $region61: #{conformer_model.7} parent=35 // pred_check
        %p834 = pneg %p315
      $region62: #{conformer_model.7} parent=35 // pred_check_branch
        %836 = sbr.rel (%p834) target = $region64
      $region63: #{conformer_model.7} parent=35 // pred_region
        %p837 = scmp.lt.s32.totalorder %s34, 1
        %s838 = scalar_select %p837, %s34, 1
        %s839 = smul.addr %s838, 4
        %s840 = smul.addr %s839, 8
        %s841 = scalar_lea.vmem %s11, %s840
      $region64: #{conformer_model.7} parent=35 // pred_fallthru
        _
      // Predicated region
      $region65: #{conformer_model.7} parent=35 // pred_check
        %p842 = pneg %p341
      $region66: #{conformer_model.7} parent=35 // pred_check_branch
        %844 = sbr.rel (%p842) target = $region68
      $region67: #{conformer_model.7} parent=35 // pred_region
        %p845 = scmp.lt.s32.totalorder %s34, 1
        %s846 = scalar_select %p845, %s34, 1
        %s847 = scalar_lea.vmem %s12, %s846
      $region68: #{conformer_model.7} parent=35 // pred_fallthru
        _
      // Predicated region
      $region69: #{conformer_model.7} parent=35 // pred_check
        %p848 = pneg %p367
      $region70: #{conformer_model.7} parent=35 // pred_check_branch
        %850 = sbr.rel (%p848) target = $region72
      $region71: #{conformer_model.7} parent=35 // pred_region
        %p851 = scmp.lt.s32.totalorder %s34, 1
        %s852 = scalar_select %p851, %s34, 1
        %s853 = smul.addr %s852, 4
        %s854 = smul.addr %s853, 8
        %s855 = scalar_lea.vmem %s13, %s854
      $region72: #{conformer_model.7} parent=35 // pred_fallthru
        _
      // Predicated region
      $region73: #{conformer_model.7} parent=35 // pred_check
        %p856 = pneg %p393
      $region74: #{conformer_model.7} parent=35 // pred_check_branch
        %858 = sbr.rel (%p856) target = $region76
      $region75: #{conformer_model.7} parent=35 // pred_region
        %p859 = scmp.lt.s32.totalorder %s34, 1
        %s860 = scalar_select %p859, %s34, 1
        %s861 = scalar_lea.vmem %s14, %s860
      $region76: #{conformer_model.7} parent=35 // pred_fallthru
        _
      // Predicated region
      $region77: #{conformer_model.7} parent=35 // pred_check
        %p862 = pneg %p419
      $region78: #{conformer_model.7} parent=35 // pred_check_branch
        %864 = sbr.rel (%p862) target = $region80
      $region79: #{conformer_model.7} parent=35 // pred_region
        %p865 = scmp.lt.s32.totalorder %s34, 1
        %s866 = scalar_select %p865, %s34, 1
        %s867 = smul.addr %s866, 2
        %s868 = scalar_lea.vmem %s15, %s867
      $region80: #{conformer_model.7} parent=35 // pred_fallthru
        _
      // Predicated region
      $region81: #{conformer_model.7} parent=35 // pred_check
        %p869 = pneg %p445
      $region82: #{conformer_model.7} parent=35 // pred_check_branch
        %871 = sbr.rel (%p869) target = $region84
      $region83: #{conformer_model.7} parent=35 // pred_region
        %p872 = scmp.lt.s32.totalorder %s34, 1
        %s873 = scalar_select %p872, %s34, 1
        %s874 = smul.addr %s873, 4
        %s875 = smul.addr %s874, 8
        %s876 = scalar_lea.vmem %s16, %s875
      $region84: #{conformer_model.7} parent=35 // pred_fallthru
        _
      // Predicated region
      $region85: #{conformer_model.7} parent=35 // pred_check
        %p877 = pneg %p471
      $region86: #{conformer_model.7} parent=35 // pred_check_branch
        %879 = sbr.rel (%p877) target = $region88
      $region87: #{conformer_model.7} parent=35 // pred_region
        %p880 = scmp.lt.s32.totalorder %s34, 1
        %s881 = scalar_select %p880, %s34, 1
        %s882 = scalar_lea.vmem %s17, %s881
      $region88: #{conformer_model.7} parent=35 // pred_fallthru
        _
      // Predicated region
      $region89: #{conformer_model.7} parent=35 // pred_check
        %p883 = pneg %p497
      $region90: #{conformer_model.7} parent=35 // pred_check_branch
        %885 = sbr.rel (%p883) target = $region92
      $region91: #{conformer_model.7} parent=35 // pred_region
        %p886 = scmp.lt.s32.totalorder %s34, 1
        %s887 = scalar_select %p886, %s34, 1
        %s888 = smul.addr %s887, 4
        %s889 = scalar_lea.vmem %s18, %s888
      $region92: #{conformer_model.7} parent=35 // pred_fallthru
        _
      // Predicated region
      $region93: #{conformer_model.7} parent=35 // pred_check
        %p890 = pneg %p523
      $region94: #{conformer_model.7} parent=35 // pred_check_branch
        %892 = sbr.rel (%p890) target = $region96
      $region95: #{conformer_model.7} parent=35 // pred_region
        %p893 = scmp.lt.s32.totalorder %s34, 1
        %s894 = scalar_select %p893, %s34, 1
        %s895 = smul.addr %s894, 2
        %s896 = scalar_lea.vmem %s19, %s895
      $region96: #{conformer_model.7} parent=35 // pred_fallthru
        _
      // Predicated region
      $region97: #{conformer_model.7} parent=35 // pred_check
        %p897 = pneg %p549
      $region98: #{conformer_model.7} parent=35 // pred_check_branch
        %899 = sbr.rel (%p897) target = $region100
      $region99: #{conformer_model.7} parent=35 // pred_region
        %p900 = scmp.lt.s32.totalorder %s34, 1
        %s901 = scalar_select %p900, %s34, 1
        %s902 = smul.addr %s901, 4
        %s903 = smul.addr %s902, 8
        %s904 = scalar_lea.vmem %s20, %s903
      $region100: #{conformer_model.7} parent=35 // pred_fallthru
        _
      // Predicated region
      $region101: #{conformer_model.7} parent=35 // pred_check
        %p905 = pneg %p575
      $region102: #{conformer_model.7} parent=35 // pred_check_branch
        %907 = sbr.rel (%p905) target = $region104
      $region103: #{conformer_model.7} parent=35 // pred_region
        %p908 = scmp.lt.s32.totalorder %s34, 1
        %s909 = scalar_select %p908, %s34, 1
        %s910 = scalar_lea.vmem %s21, %s909
      $region104: #{conformer_model.7} parent=35 // pred_fallthru
        _
      // Predicated region
      $region105: #{conformer_model.7} parent=35 // pred_check
        %p911 = pneg %p601
      $region106: #{conformer_model.7} parent=35 // pred_check_branch
        %913 = sbr.rel (%p911) target = $region108
      $region107: #{conformer_model.7} parent=35 // pred_region
        %p914 = scmp.lt.s32.totalorder %s34, 1
        %s915 = scalar_select %p914, %s34, 1
        %s916 = smul.addr %s915, 2
        %s917 = scalar_lea.vmem %s22, %s916
      $region108: #{conformer_model.7} parent=35 // pred_fallthru
        _
      // Predicated region
      $region109: #{conformer_model.7} parent=35 // pred_check
        %p918 = pneg %p627
      $region110: #{conformer_model.7} parent=35 // pred_check_branch
        %920 = sbr.rel (%p918) target = $region112
      $region111: #{conformer_model.7} parent=35 // pred_region
        %p921 = scmp.lt.s32.totalorder %s34, 1
        %s922 = scalar_select %p921, %s34, 1
        %s923 = smul.addr %s922, 4
        %s924 = smul.addr %s923, 8
        %s925 = scalar_lea.vmem %s23, %s924
      $region112: #{conformer_model.7} parent=35 // pred_fallthru
        _
      // Predicated region
      $region113: #{conformer_model.7} parent=35 // pred_check
        %p926 = pneg %p653
      $region114: #{conformer_model.7} parent=35 // pred_check_branch
        %928 = sbr.rel (%p926) target = $region116
      $region115: #{conformer_model.7} parent=35 // pred_region
        %p929 = scmp.lt.s32.totalorder %s34, 1
        %s930 = scalar_select %p929, %s34, 1
        %s931 = scalar_lea.vmem %s24, %s930
      $region116: #{conformer_model.7} parent=35 // pred_fallthru
        _
      // Predicated region
      $region117: #{conformer_model.7} parent=35 // pred_check
        %p932 = pneg %p679
      $region118: #{conformer_model.7} parent=35 // pred_check_branch
        %934 = sbr.rel (%p932) target = $region120
      $region119: #{conformer_model.7} parent=35 // pred_region
        %p935 = scmp.lt.s32.totalorder %s34, 1
        %s936 = scalar_select %p935, %s34, 1
        %s937 = smul.addr %s936, 16
        %s938 = smul.addr %s937, 8
        %s939 = scalar_lea.vmem %s25, %s938
      $region120: #{conformer_model.7} parent=35 // pred_fallthru
        _
      // Predicated region
      $region121: #{conformer_model.7} parent=35 // pred_check
        %p940 = pneg %p705
      $region122: #{conformer_model.7} parent=35 // pred_check_branch
        %942 = sbr.rel (%p940) target = $region124
      $region123: #{conformer_model.7} parent=35 // pred_region
        %p943 = scmp.lt.s32.totalorder %s34, 1
        %s944 = scalar_select %p943, %s34, 1
        %s945 = scalar_lea.vmem %s26, %s944
      $region124: #{conformer_model.7} parent=35 // pred_fallthru
        _
      // Predicated region
      $region125: #{conformer_model.7} parent=35 // pred_check
        %p946 = pneg %p731
      $region126: #{conformer_model.7} parent=35 // pred_check_branch
        %948 = sbr.rel (%p946) target = $region128
      $region127: #{conformer_model.7} parent=35 // pred_region
        %p949 = scmp.lt.s32.totalorder %s34, 1
        %s950 = scalar_select %p949, %s34, 1
        %s951 = smul.addr %s950, 2
        %s952 = scalar_lea.vmem %s27, %s951
      $region128: #{conformer_model.7} parent=35 // pred_fallthru
        _
    $region36: #{conformer_model.7} parent=5 // pred_fallthru
      _
    %p953 = scmp.le.s32.totalorder 1, %s34
    %p954 = scmp.lt.s32.totalorder %s34, 3
    %p955 = pnand %p953, %p954
    %p956 = pneg %p955
    // Predicated region
    $region129: #{conformer_model.7} parent=5 // pred_check
      _
    $region130: #{conformer_model.7} parent=5 // pred_check_branch
      %958 = sbr.rel (%p955) target = $region132
    $region131: #{conformer_model.7} parent=5 // pred_region
      %s959 = ssub.s32 %s34, 1
      %p960 = pneg %p55
      %p961 = pneg %p52
      %p962 = pneg %p76
      %p963 = pneg %p73
      %p964 = pneg %p97
      %p965 = pneg %p94
      %p966 = pneg %p118
      %p967 = pneg %p115
      %p968 = pneg %p139
      %p969 = pneg %p136
      %p970 = scmp.lt.s32.totalorder %s39, 1
      %s971 = scalar_select %p970, %s39, 1
      %s972 = smul.addr %s971, 2
      %s973 = scalar_lea.vmem %s5, %s972
      %p974 = pneg %p165
      %p975 = pneg %p162
      %p976 = scmp.lt.s32.totalorder %s39, 1
      %s977 = scalar_select %p976, %s39, 1
      %s978 = smul.addr %s977, 4
      %s979 = smul.addr %s978, 8
      %s980 = scalar_lea.vmem %s6, %s979
      %p981 = pneg %p191
      %p982 = pneg %p188
      %p983 = scmp.lt.s32.totalorder %s39, 1
      %s984 = scalar_select %p983, %s39, 1
      %s985 = scalar_lea.vmem %s7, %s984
      %p986 = pneg %p217
      %p987 = pneg %p214
      %p988 = scmp.lt.s32.totalorder %s39, 1
      %s989 = scalar_select %p988, %s39, 1
      %s990 = smul.addr %s989, 16
      %s991 = smul.addr %s990, 8
      %s992 = scalar_lea.vmem %s8, %s991
      %p993 = pneg %p243
      %p994 = pneg %p240
      %p995 = scmp.lt.s32.totalorder %s39, 1
      %s996 = scalar_select %p995, %s39, 1
      %s997 = scalar_lea.vmem %s9, %s996
      %p998 = pneg %p269
      %p999 = pneg %p266
      %p1000 = scmp.lt.s32.totalorder %s39, 1
      %s1001 = scalar_select %p1000, %s39, 1
      %s1002 = smul.addr %s1001, 2
      %s1003 = scalar_lea.vmem %s10, %s1002
      %p1004 = pneg %p295
      %p1005 = pneg %p292
      %p1006 = scmp.lt.s32.totalorder %s39, 1
      %s1007 = scalar_select %p1006, %s39, 1
      %s1008 = smul.addr %s1007, 4
      %s1009 = smul.addr %s1008, 8
      %s1010 = scalar_lea.vmem %s11, %s1009
      %p1011 = pneg %p321
      %p1012 = pneg %p318
      %p1013 = scmp.lt.s32.totalorder %s39, 1
      %s1014 = scalar_select %p1013, %s39, 1
      %s1015 = scalar_lea.vmem %s12, %s1014
      %p1016 = pneg %p347
      %p1017 = pneg %p344
      %p1018 = scmp.lt.s32.totalorder %s39, 1
      %s1019 = scalar_select %p1018, %s39, 1
      %s1020 = smul.addr %s1019, 4
      %s1021 = smul.addr %s1020, 8
      %s1022 = scalar_lea.vmem %s13, %s1021
      %p1023 = pneg %p373
      %p1024 = pneg %p370
      %p1025 = scmp.lt.s32.totalorder %s39, 1
      %s1026 = scalar_select %p1025, %s39, 1
      %s1027 = scalar_lea.vmem %s14, %s1026
      %p1028 = pneg %p399
      %p1029 = pneg %p396
      %p1030 = scmp.lt.s32.totalorder %s39, 1
      %s1031 = scalar_select %p1030, %s39, 1
      %s1032 = smul.addr %s1031, 2
      %s1033 = scalar_lea.vmem %s15, %s1032
      %p1034 = pneg %p425
      %p1035 = pneg %p422
      %p1036 = scmp.lt.s32.totalorder %s39, 1
      %s1037 = scalar_select %p1036, %s39, 1
      %s1038 = smul.addr %s1037, 4
      %s1039 = smul.addr %s1038, 8
      %s1040 = scalar_lea.vmem %s16, %s1039
      %p1041 = pneg %p451
      %p1042 = pneg %p448
      %p1043 = scmp.lt.s32.totalorder %s39, 1
      %s1044 = scalar_select %p1043, %s39, 1
      %s1045 = scalar_lea.vmem %s17, %s1044
      %p1046 = pneg %p477
      %p1047 = pneg %p474
      %p1048 = scmp.lt.s32.totalorder %s39, 1
      %s1049 = scalar_select %p1048, %s39, 1
      %s1050 = smul.addr %s1049, 4
      %s1051 = scalar_lea.vmem %s18, %s1050
      %p1052 = pneg %p503
      %p1053 = pneg %p500
      %p1054 = scmp.lt.s32.totalorder %s39, 1
      %s1055 = scalar_select %p1054, %s39, 1
      %s1056 = smul.addr %s1055, 2
      %s1057 = scalar_lea.vmem %s19, %s1056
      %p1058 = pneg %p529
      %p1059 = pneg %p526
      %p1060 = scmp.lt.s32.totalorder %s39, 1
      %s1061 = scalar_select %p1060, %s39, 1
      %s1062 = smul.addr %s1061, 4
      %s1063 = smul.addr %s1062, 8
      %s1064 = scalar_lea.vmem %s20, %s1063
      %p1065 = pneg %p555
      %p1066 = pneg %p552
      %p1067 = scmp.lt.s32.totalorder %s39, 1
      %s1068 = scalar_select %p1067, %s39, 1
      %s1069 = scalar_lea.vmem %s21, %s1068
      %p1070 = pneg %p581
      %p1071 = pneg %p578
      %p1072 = scmp.lt.s32.totalorder %s39, 1
      %s1073 = scalar_select %p1072, %s39, 1
      %s1074 = smul.addr %s1073, 2
      %s1075 = scalar_lea.vmem %s22, %s1074
      %p1076 = pneg %p607
      %p1077 = pneg %p604
      %p1078 = scmp.lt.s32.totalorder %s39, 1
      %s1079 = scalar_select %p1078, %s39, 1
      %s1080 = smul.addr %s1079, 4
      %s1081 = smul.addr %s1080, 8
      %s1082 = scalar_lea.vmem %s23, %s1081
      %p1083 = pneg %p633
      %p1084 = pneg %p630
      %p1085 = scmp.lt.s32.totalorder %s39, 1
      %s1086 = scalar_select %p1085, %s39, 1
      %s1087 = scalar_lea.vmem %s24, %s1086
      %p1088 = pneg %p659
      %p1089 = pneg %p656
      %p1090 = scmp.lt.s32.totalorder %s39, 1
      %s1091 = scalar_select %p1090, %s39, 1
      %s1092 = smul.addr %s1091, 16
      %s1093 = smul.addr %s1092, 8
      %s1094 = scalar_lea.vmem %s25, %s1093
      %p1095 = pneg %p685
      %p1096 = pneg %p682
      %p1097 = scmp.lt.s32.totalorder %s39, 1
      %s1098 = scalar_select %p1097, %s39, 1
      %s1099 = scalar_lea.vmem %s26, %s1098
      %p1100 = pneg %p711
      %p1101 = pneg %p708
      %p1102 = scmp.lt.s32.totalorder %s39, 1
      %s1103 = scalar_select %p1102, %s39, 1
      %s1104 = smul.addr %s1103, 2
      %s1105 = scalar_lea.vmem %s27, %s1104
      %p1106 = pneg %p737
      %p1107 = pneg %p734
      %p1108 = pneg %p758
      %p1109 = pneg %p755
      %p1110 = scmp.lt.s32.totalorder %s39, 1
      %s1111 = scalar_select %p1110, %s39, 1
      %s1112 = smul.addr %s1111, 2
      %s1113 = scalar_lea.vmem %s5, %s1112
      %p1114 = scmp.lt.s32.totalorder %s39, 1
      %s1115 = scalar_select %p1114, %s39, 1
      %s1116 = smul.addr %s1115, 4
      %s1117 = smul.addr %s1116, 8
      %s1118 = scalar_lea.vmem %s6, %s1117
      %p1119 = scmp.lt.s32.totalorder %s39, 1
      %s1120 = scalar_select %p1119, %s39, 1
      %s1121 = scalar_lea.vmem %s7, %s1120
      %p1122 = scmp.lt.s32.totalorder %s39, 1
      %s1123 = scalar_select %p1122, %s39, 1
      %s1124 = smul.addr %s1123, 16
      %s1125 = smul.addr %s1124, 8
      %s1126 = scalar_lea.vmem %s8, %s1125
      %p1127 = scmp.lt.s32.totalorder %s39, 1
      %s1128 = scalar_select %p1127, %s39, 1
      %s1129 = scalar_lea.vmem %s9, %s1128
      %p1130 = scmp.lt.s32.totalorder %s39, 1
      %s1131 = scalar_select %p1130, %s39, 1
      %s1132 = smul.addr %s1131, 2
      %s1133 = scalar_lea.vmem %s10, %s1132
      %p1134 = scmp.lt.s32.totalorder %s39, 1
      %s1135 = scalar_select %p1134, %s39, 1
      %s1136 = smul.addr %s1135, 4
      %s1137 = smul.addr %s1136, 8
      %s1138 = scalar_lea.vmem %s11, %s1137
      %p1139 = scmp.lt.s32.totalorder %s39, 1
      %s1140 = scalar_select %p1139, %s39, 1
      %s1141 = scalar_lea.vmem %s12, %s1140
      %p1142 = scmp.lt.s32.totalorder %s39, 1
      %s1143 = scalar_select %p1142, %s39, 1
      %s1144 = smul.addr %s1143, 4
      %s1145 = smul.addr %s1144, 8
      %s1146 = scalar_lea.vmem %s13, %s1145
      %p1147 = scmp.lt.s32.totalorder %s39, 1
      %s1148 = scalar_select %p1147, %s39, 1
      %s1149 = scalar_lea.vmem %s14, %s1148
      %p1150 = scmp.lt.s32.totalorder %s39, 1
      %s1151 = scalar_select %p1150, %s39, 1
      %s1152 = smul.addr %s1151, 2
      %s1153 = scalar_lea.vmem %s15, %s1152
      %p1154 = scmp.lt.s32.totalorder %s39, 1
      %s1155 = scalar_select %p1154, %s39, 1
      %s1156 = smul.addr %s1155, 4
      %s1157 = smul.addr %s1156, 8
      %s1158 = scalar_lea.vmem %s16, %s1157
      %p1159 = scmp.lt.s32.totalorder %s39, 1
      %s1160 = scalar_select %p1159, %s39, 1
      %s1161 = scalar_lea.vmem %s17, %s1160
      %p1162 = scmp.lt.s32.totalorder %s39, 1
      %s1163 = scalar_select %p1162, %s39, 1
      %s1164 = smul.addr %s1163, 4
      %s1165 = scalar_lea.vmem %s18, %s1164
      %p1166 = scmp.lt.s32.totalorder %s39, 1
      %s1167 = scalar_select %p1166, %s39, 1
      %s1168 = smul.addr %s1167, 2
      %s1169 = scalar_lea.vmem %s19, %s1168
      %p1170 = scmp.lt.s32.totalorder %s39, 1
      %s1171 = scalar_select %p1170, %s39, 1
      %s1172 = smul.addr %s1171, 4
      %s1173 = smul.addr %s1172, 8
      %s1174 = scalar_lea.vmem %s20, %s1173
      %p1175 = scmp.lt.s32.totalorder %s39, 1
      %s1176 = scalar_select %p1175, %s39, 1
      %s1177 = scalar_lea.vmem %s21, %s1176
      %p1178 = scmp.lt.s32.totalorder %s39, 1
      %s1179 = scalar_select %p1178, %s39, 1
      %s1180 = smul.addr %s1179, 2
      %s1181 = scalar_lea.vmem %s22, %s1180
      %p1182 = scmp.lt.s32.totalorder %s39, 1
      %s1183 = scalar_select %p1182, %s39, 1
      %s1184 = smul.addr %s1183, 4
      %s1185 = smul.addr %s1184, 8
      %s1186 = scalar_lea.vmem %s23, %s1185
      %p1187 = scmp.lt.s32.totalorder %s39, 1
      %s1188 = scalar_select %p1187, %s39, 1
      %s1189 = scalar_lea.vmem %s24, %s1188
      %p1190 = scmp.lt.s32.totalorder %s39, 1
      %s1191 = scalar_select %p1190, %s39, 1
      %s1192 = smul.addr %s1191, 16
      %s1193 = smul.addr %s1192, 8
      %s1194 = scalar_lea.vmem %s25, %s1193
      %p1195 = scmp.lt.s32.totalorder %s39, 1
      %s1196 = scalar_select %p1195, %s39, 1
      %s1197 = scalar_lea.vmem %s26, %s1196
      %p1198 = scmp.lt.s32.totalorder %s39, 1
      %s1199 = scalar_select %p1198, %s39, 1
      %s1200 = smul.addr %s1199, 2
      %s1201 = scalar_lea.vmem %s27, %s1200
      %p1202 = scmp.eq.s32.totalorder %s39, 0
      // Predicated region
      $region133: #{conformer_model.7} parent=131 // pred_check
        %p1203 = pneg %p1202
      $region134: #{conformer_model.7} parent=131 // pred_check_branch
        %1205 = sbr.rel (%p1203) target = $region136
      $region135: #{conformer_model.7} parent=131 // pred_region
        %v1206 = vld [vmem:[%s0] sm:$0xff]
        %v1207 = vld [vmem:[%s0 + $0x8] sm:$0x3f]
        %vm1208 = vcmask 261120
        %1209 = vst.msk [vmem:[#allocation2] sm:$0xff] %vm1208, %v1206
        %vm1210 = vcmask 259072
        %1211 = vst.msk [vmem:[#allocation2 + $0x8] sm:$0x3f] %vm1210, %v1207
      $region136: #{conformer_model.7} parent=131 // pred_fallthru
        _
      %v1212 = vld [vmem:[#allocation2] sm:$0xff]
      %v1213 = vld [vmem:[#allocation2 + $0x8] sm:$0x3f]
      %v1214 = vld [vmem:[%s1113] sm:$0x3]
      %v1215 = vld [vmem:[%s1118] sm:$0xff]
      %v1216 = vld [vmem:[%s1118 + $0x8] sm:$0xff]
      %v1217 = vld [vmem:[%s1118 + $0x10] sm:$0xff]
      %v1218 = vld [vmem:[%s1118 + $0x18] sm:$0xff]
      %v1219 = vld [vmem:[%s1121] sm:$0x1]
      %v1220 = vld [vmem:[%s1126] sm:$0xff]
      %v1221 = vld [vmem:[%s1126 + $0x8] sm:$0xff]
      %v1222 = vld [vmem:[%s1126 + $0x10] sm:$0xff]
      %v1223 = vld [vmem:[%s1126 + $0x18] sm:$0xff]
      %v1224 = vld [vmem:[%s1126 + $0x20] sm:$0xff]
      %v1225 = vld [vmem:[%s1126 + $0x28] sm:$0xff]
      %v1226 = vld [vmem:[%s1126 + $0x30] sm:$0xff]
      %v1227 = vld [vmem:[%s1126 + $0x38] sm:$0xff]
      %v1228 = vld [vmem:[%s1126 + $0x40] sm:$0xff]
      %v1229 = vld [vmem:[%s1126 + $0x48] sm:$0xff]
      %v1230 = vld [vmem:[%s1126 + $0x50] sm:$0xff]
      %v1231 = vld [vmem:[%s1126 + $0x58] sm:$0xff]
      %v1232 = vld [vmem:[%s1126 + $0x60] sm:$0xff]
      %v1233 = vld [vmem:[%s1126 + $0x68] sm:$0xff]
      %v1234 = vld [vmem:[%s1126 + $0x70] sm:$0xff]
      %v1235 = vld [vmem:[%s1126 + $0x78] sm:$0xff]
      %v1236 = vld [vmem:[%s1129] sm:$0x1]
      %vm1237 = vcmask 261120
      %v1238 = vsel %vm1237, %v1212, 0.0
      %1239 = vadd.xlane.f32.xlu0 %v1238
      %v1240 = vpop.xlane.xlu0 %1239
      %vm1241 = vcmask 259072
      %v1242 = vsel %vm1241, %v1213, 0.0
      %1243 = vadd.xlane.f32.xlu0 %v1242
      %v1244 = vpop.xlane.xlu0 %1243
      %v1245 = vrcp.pop 32.0
      %v1246 = vmul.f32 %v1240, %v1245
      %v1247 = vmul.f32 %v1244, %v1245
      %v1248 = vsub.f32 %v1212, %v1246
      %v1249 = vsub.f32 %v1213, %v1247
      %v1250 = vmul.f32 %v1248, %v1248
      %v1251 = vmul.f32 %v1249, %v1249
      %v1252 = vsel %vm1237, %v1250, 0.0
      %1253 = vadd.xlane.f32.xlu0 %v1252
      %v1254 = vpop.xlane.xlu0 %1253
      %v1255 = vsel %vm1241, %v1251, 0.0
      %1256 = vadd.xlane.f32.xlu0 %v1255
      %v1257 = vpop.xlane.xlu0 %1256
      %v1258 = vmul.f32 %v1254, %v1245
      %v1259 = vmul.f32 %v1257, %v1245
      %v1260 = vadd.f32 %v1258, 1e-05
      %v1261 = vadd.f32 %v1259, 1e-05
      %v1262 = vrsqrt.pop %v1260
      %v1263 = vrsqrt.pop %v1261
      %v1264 = vmul.f32 %v1248, %v1262
      %v1265 = vmul.f32 %v1249, %v1263
      %v1266 = vlaneseq
      %v1267 = vshrl.u32 %v1266, 7
      %v1268 = vsub.s32 0, %v1267
      %v1269 = vrot.slane %v1214, %v1268
      %v1270 = vmul.f32 %v1264, %v1269
      %v1271 = vmul.f32 %v1265, %v1269
      %v1272 = vlaneseq
      %v1273 = vshrl.u32 %v1272, 7
      %v1274 = vsub.s32 1, %v1273
      %v1275 = vrot.slane %v1214, %v1274
      %v1276 = vadd.f32 %v1270, %v1275
      %v1277 = vadd.f32 %v1271, %v1275
      %v1279 = vlaneseq
      %v1280 = vshrl.u32 %v1279, 7
      %v1281 = vsub.s32 0, %v1280
      %v1282 = vrot.slane %v1219, %v1281
      %v1285 = vsel %vm1237, %v1276, 0
      %v1288 = vsel %vm1237, %v1277, 0
      %1290 = vmatprep.subr.mxu0 0.0
      %1291 = vmatpush1.msra.mxu0 %v1215
      %1292 = vmatprep.subr.mxu0 0.0
      %1293 = vmatpush1.msra.mxu0 %v1216
      %1294 = vmatprep.subr.mxu0 0.0
      %1295 = vmatpush1.msra.mxu0 %v1217
      %1296 = vmatprep.subr.mxu0 0.0
      %1297 = vmatpush1.msra.mxu0 %v1218
      %1298 = vmatprep.subr.mxu0 0.0
      %1299 = vmatpush1.msra.mxu0 0.0
      %1300 = vmatprep.subr.mxu0 0.0
      %1301 = vmatpush1.msra.mxu0 0.0
      %1302 = vmatprep.subr.mxu0 0.0
      %1303 = vmatpush1.msra.mxu0 0.0
      %1304 = vmatprep.subr.mxu0 0.0
      %1305 = vmatpush1.msra.mxu0 0.0
      %1306 = vmatprep.subr.mxu0 0.0
      %1307 = vmatpush1.msra.mxu0 0.0
      %1308 = vmatprep.subr.mxu0 0.0
      %1309 = vmatpush1.msra.mxu0 0.0
      %1310 = vmatprep.subr.mxu0 0.0
      %1311 = vmatpush1.msra.mxu0 0.0
      %1312 = vmatprep.subr.mxu0 0.0
      %1313 = vmatpush1.msra.mxu0 0.0
      %1314 = vmatprep.subr.mxu0 0.0
      %1315 = vmatpush1.msra.mxu0 0.0
      %1316 = vmatprep.subr.mxu0 0.0
      %1317 = vmatpush1.msra.mxu0 0.0
      %1318 = vmatprep.subr.mxu0 0.0
      %1319 = vmatpush1.msra.mxu0 0.0
      %1320 = vmatprep.subr.mxu0 0.0
      %1321 = vmatpush1.msra.mxu0 0.0
      %1322 = vmatprep.subr.mxu0 0.0
      %1323 = vmatpush1.msra.mxu0 0.0
      %1324 = vmatprep.subr.mxu0 0.0
      %1325 = vmatpush1.msra.mxu0 0.0
      %1326 = vmatprep.subr.mxu0 0.0
      %1327 = vmatpush1.msra.mxu0 0.0
      %1328 = vmatprep.subr.mxu0 0.0
      %1329 = vmatpush1.msra.mxu0 0.0
      %1330 = vmatprep.subr.mxu0 0.0
      %1331 = vmatpush1.msra.mxu0 0.0
      %1332 = vmatprep.subr.mxu0 0.0
      %1333 = vmatpush1.msra.mxu0 0.0
      %1334 = vmatprep.subr.mxu0 0.0
      %1335 = vmatpush1.msra.mxu0 0.0
      %1336 = vmatprep.subr.mxu0 0.0
      %1337 = vmatpush1.msra.mxu0 0.0
      %1338 = vmatprep.subr.mxu0 0.0
      %1339 = vmatpush1.msra.mxu0 0.0
      %1340 = vmatprep.subr.mxu0 0.0
      %1341 = vmatpush1.msra.mxu0 0.0
      %1342 = vmatprep.subr.mxu0 0.0
      %1343 = vmatpush1.msra.mxu0 0.0
      %1344 = vmatprep.subr.mxu0 0.0
      %1345 = vmatpush1.msra.mxu0 0.0
      %1346 = vmatprep.subr.mxu0 0.0
      %1347 = vmatpush1.msra.mxu0 0.0
      %1348 = vmatprep.subr.mxu0 0.0
      %1349 = vmatpush1.msra.mxu0 0.0
      %1350 = vmatprep.subr.mxu0 0.0
      %1351 = vmatpush1.msra.mxu0 0.0
      %1352 = vmatprep.subr.mxu0 0.0
      %1353 = vmatpush1.msra.mxu0 0.0
      %1354 = vmatprep.mubr.f32.mxu0 0.0
      %1355 = vmatmul.mubr.f32.gmra.mrb[0].mxu0 %v1285
      %v1356 = vpop.f32.mrb[0].mxu0
      %v1357 = vadd.f32 %v1282, %v1356
      %v1358 = vpop.f32.mrb[0].mxu0
      %1359 = vmatprep.mubr.f32.mxu0 0.0
      %1360 = vmatmul.mubr.f32.gmra.mrb[0].mxu0 %v1288
      %v1361 = vpop.f32.mrb[0].mxu0
      %v1362 = vadd.f32 %v1282, %v1361
      %v1363 = vpop.f32.mrb[0].mxu0
      %1364 = vdwg.mxu0
      %v1365 = vxor.u32 %v1357, 2147483648
      %v1366 = vxor.u32 %v1362, 2147483648
      %v1367 = vmul.f32 %v1365, 1.442695
      %v1368 = vpow.pop %v1367
      %v1369 = vmul.f32 %v1366, 1.442695
      %v1370 = vpow.pop %v1369
      %v1371 = vadd.f32 %v1368, 1.0
      %v1372 = vadd.f32 %v1370, 1.0
      %v1373 = vrcp.pop %v1371
      %v1374 = vmul.f32 1.0, %v1373
      %v1375 = vrcp.pop %v1372
      %v1376 = vmul.f32 1.0, %v1375
      %v1377 = vmul.f32 %v1357, %v1374
      %v1378 = vmul.f32 %v1362, %v1376
      %v1380 = vlaneseq
      %v1381 = vshrl.u32 %v1380, 7
      %v1382 = vsub.s32 0, %v1381
      %v1383 = vrot.slane %v1236, %v1382
      %1385 = vmatprep.subr.mxu0 0.0
      %1386 = vmatpush1.msra.mxu0 %v1220
      %1387 = vmatprep.subr.mxu0 0.0
      %1388 = vmatpush1.msra.mxu0 %v1221
      %1389 = vmatprep.subr.mxu0 0.0
      %1390 = vmatpush1.msra.mxu0 %v1222
      %1391 = vmatprep.subr.mxu0 0.0
      %1392 = vmatpush1.msra.mxu0 %v1223
      %1393 = vmatprep.subr.mxu0 0.0
      %1394 = vmatpush1.msra.mxu0 %v1224
      %1395 = vmatprep.subr.mxu0 0.0
      %1396 = vmatpush1.msra.mxu0 %v1225
      %1397 = vmatprep.subr.mxu0 0.0
      %1398 = vmatpush1.msra.mxu0 %v1226
      %1399 = vmatprep.subr.mxu0 0.0
      %1400 = vmatpush1.msra.mxu0 %v1227
      %1401 = vmatprep.subr.mxu0 0.0
      %1402 = vmatpush1.msra.mxu0 %v1228
      %1403 = vmatprep.subr.mxu0 0.0
      %1404 = vmatpush1.msra.mxu0 %v1229
      %1405 = vmatprep.subr.mxu0 0.0
      %1406 = vmatpush1.msra.mxu0 %v1230
      %1407 = vmatprep.subr.mxu0 0.0
      %1408 = vmatpush1.msra.mxu0 %v1231
      %1409 = vmatprep.subr.mxu0 0.0
      %1410 = vmatpush1.msra.mxu0 %v1232
      %1411 = vmatprep.subr.mxu0 0.0
      %1412 = vmatpush1.msra.mxu0 %v1233
      %1413 = vmatprep.subr.mxu0 0.0
      %1414 = vmatpush1.msra.mxu0 %v1234
      %1415 = vmatprep.subr.mxu0 0.0
      %1416 = vmatpush1.msra.mxu0 %v1235
      %1417 = vmatprep.subr.mxu0 0.0
      %1418 = vmatpush1.msra.mxu0 0.0
      %1419 = vmatprep.subr.mxu0 0.0
      %1420 = vmatpush1.msra.mxu0 0.0
      %1421 = vmatprep.subr.mxu0 0.0
      %1422 = vmatpush1.msra.mxu0 0.0
      %1423 = vmatprep.subr.mxu0 0.0
      %1424 = vmatpush1.msra.mxu0 0.0
      %1425 = vmatprep.subr.mxu0 0.0
      %1426 = vmatpush1.msra.mxu0 0.0
      %1427 = vmatprep.subr.mxu0 0.0
      %1428 = vmatpush1.msra.mxu0 0.0
      %1429 = vmatprep.subr.mxu0 0.0
      %1430 = vmatpush1.msra.mxu0 0.0
      %1431 = vmatprep.subr.mxu0 0.0
      %1432 = vmatpush1.msra.mxu0 0.0
      %1433 = vmatprep.subr.mxu0 0.0
      %1434 = vmatpush1.msra.mxu0 0.0
      %1435 = vmatprep.subr.mxu0 0.0
      %1436 = vmatpush1.msra.mxu0 0.0
      %1437 = vmatprep.subr.mxu0 0.0
      %1438 = vmatpush1.msra.mxu0 0.0
      %1439 = vmatprep.subr.mxu0 0.0
      %1440 = vmatpush1.msra.mxu0 0.0
      %1441 = vmatprep.subr.mxu0 0.0
      %1442 = vmatpush1.msra.mxu0 0.0
      %1443 = vmatprep.subr.mxu0 0.0
      %1444 = vmatpush1.msra.mxu0 0.0
      %1445 = vmatprep.subr.mxu0 0.0
      %1446 = vmatpush1.msra.mxu0 0.0
      %1447 = vmatprep.subr.mxu0 0.0
      %1448 = vmatpush1.msra.mxu0 0.0
      %1449 = vmatprep.mubr.f32.mxu0 0.0
      %1450 = vmatmul.mubr.f32.gmra.mrb[0].mxu0 %v1377
      %v1451 = vpop.f32.mrb[0].mxu0
      %v1452 = vadd.f32 %v1383, %v1451
      %v1453 = vpop.f32.mrb[0].mxu0
      %1454 = vmatprep.mubr.f32.mxu0 0.0
      %1455 = vmatmul.mubr.f32.gmra.mrb[0].mxu0 %v1378
      %v1456 = vpop.f32.mrb[0].mxu0
      %v1457 = vadd.f32 %v1383, %v1456
      %v1458 = vpop.f32.mrb[0].mxu0
      %1459 = vdwg.mxu0
      %v1460 = vmul.f32 %v1452, 0.5
      %v1461 = vmul.f32 %v1457, 0.5
      %v1462 = vadd.f32 %v1212, %v1460
      %v1463 = vadd.f32 %v1213, %v1461
      %v1464 = vld [vmem:[%s1133] sm:$0x3]
      %v1465 = vsel %vm1237, %v1462, 0.0
      %1466 = vadd.xlane.f32.xlu0 %v1465
      %v1467 = vpop.xlane.xlu0 %1466
      %v1468 = vsel %vm1241, %v1463, 0.0
      %1469 = vadd.xlane.f32.xlu0 %v1468
      %v1470 = vpop.xlane.xlu0 %1469
      %v1471 = vmul.f32 %v1467, %v1245
      %v1472 = vmul.f32 %v1470, %v1245
      %v1473 = vsub.f32 %v1462, %v1471
      %v1474 = vsub.f32 %v1463, %v1472
      %v1475 = vmul.f32 %v1473, %v1473
      %v1476 = vmul.f32 %v1474, %v1474
      %v1477 = vsel %vm1237, %v1475, 0.0
      %1478 = vadd.xlane.f32.xlu0 %v1477
      %v1479 = vpop.xlane.xlu0 %1478
      %v1480 = vsel %vm1241, %v1476, 0.0
      %1481 = vadd.xlane.f32.xlu0 %v1480
      %v1482 = vpop.xlane.xlu0 %1481
      %v1483 = vmul.f32 %v1479, %v1245
      %v1484 = vmul.f32 %v1482, %v1245
      %v1485 = vadd.f32 %v1483, 1e-05
      %v1486 = vadd.f32 %v1484, 1e-05
      %v1487 = vrsqrt.pop %v1485
      %v1488 = vrsqrt.pop %v1486
      %v1489 = vmul.f32 %v1473, %v1487
      %v1490 = vmul.f32 %v1474, %v1488
      %v1491 = vlaneseq
      %v1492 = vshrl.u32 %v1491, 7
      %v1493 = vsub.s32 0, %v1492
      %v1494 = vrot.slane %v1464, %v1493
      %v1495 = vmul.f32 %v1489, %v1494
      %v1496 = vmul.f32 %v1490, %v1494
      %v1497 = vlaneseq
      %v1498 = vshrl.u32 %v1497, 7
      %v1499 = vsub.s32 1, %v1498
      %v1500 = vrot.slane %v1464, %v1499
      %v1501 = vadd.f32 %v1495, %v1500
      %v1502 = vadd.f32 %v1496, %v1500
      %v1503 = vld [vmem:[%s1138] sm:$0xff]
      %v1504 = vld [vmem:[%s1138 + $0x8] sm:$0xff]
      %v1505 = vld [vmem:[%s1138 + $0x10] sm:$0xff]
      %v1506 = vld [vmem:[%s1138 + $0x18] sm:$0xff]
      %v1507 = vld [vmem:[%s1141] sm:$0x1]
      %v1509 = vlaneseq
      %v1510 = vshrl.u32 %v1509, 7
      %v1511 = vsub.s32 0, %v1510
      %v1512 = vrot.slane %v1507, %v1511
      %v1515 = vsel %vm1237, %v1501, 0
      %v1518 = vsel %vm1237, %v1502, 0
      %1520 = vmatprep.subr.mxu0 0.0
      %1521 = vmatpush1.msra.mxu0 %v1503
      %1522 = vmatprep.subr.mxu0 0.0
      %1523 = vmatpush1.msra.mxu0 %v1504
      %1524 = vmatprep.subr.mxu0 0.0
      %1525 = vmatpush1.msra.mxu0 %v1505
      %1526 = vmatprep.subr.mxu0 0.0
      %1527 = vmatpush1.msra.mxu0 %v1506
      %1528 = vmatprep.subr.mxu0 0.0
      %1529 = vmatpush1.msra.mxu0 0.0
      %1530 = vmatprep.subr.mxu0 0.0
      %1531 = vmatpush1.msra.mxu0 0.0
      %1532 = vmatprep.subr.mxu0 0.0
      %1533 = vmatpush1.msra.mxu0 0.0
      %1534 = vmatprep.subr.mxu0 0.0
      %1535 = vmatpush1.msra.mxu0 0.0
      %1536 = vmatprep.subr.mxu0 0.0
      %1537 = vmatpush1.msra.mxu0 0.0
      %1538 = vmatprep.subr.mxu0 0.0
      %1539 = vmatpush1.msra.mxu0 0.0
      %1540 = vmatprep.subr.mxu0 0.0
      %1541 = vmatpush1.msra.mxu0 0.0
      %1542 = vmatprep.subr.mxu0 0.0
      %1543 = vmatpush1.msra.mxu0 0.0
      %1544 = vmatprep.subr.mxu0 0.0
      %1545 = vmatpush1.msra.mxu0 0.0
      %1546 = vmatprep.subr.mxu0 0.0
      %1547 = vmatpush1.msra.mxu0 0.0
      %1548 = vmatprep.subr.mxu0 0.0
      %1549 = vmatpush1.msra.mxu0 0.0
      %1550 = vmatprep.subr.mxu0 0.0
      %1551 = vmatpush1.msra.mxu0 0.0
      %1552 = vmatprep.subr.mxu0 0.0
      %1553 = vmatpush1.msra.mxu0 0.0
      %1554 = vmatprep.subr.mxu0 0.0
      %1555 = vmatpush1.msra.mxu0 0.0
      %1556 = vmatprep.subr.mxu0 0.0
      %1557 = vmatpush1.msra.mxu0 0.0
      %1558 = vmatprep.subr.mxu0 0.0
      %1559 = vmatpush1.msra.mxu0 0.0
      %1560 = vmatprep.subr.mxu0 0.0
      %1561 = vmatpush1.msra.mxu0 0.0
      %1562 = vmatprep.subr.mxu0 0.0
      %1563 = vmatpush1.msra.mxu0 0.0
      %1564 = vmatprep.subr.mxu0 0.0
      %1565 = vmatpush1.msra.mxu0 0.0
      %1566 = vmatprep.subr.mxu0 0.0
      %1567 = vmatpush1.msra.mxu0 0.0
      %1568 = vmatprep.subr.mxu0 0.0
      %1569 = vmatpush1.msra.mxu0 0.0
      %1570 = vmatprep.subr.mxu0 0.0
      %1571 = vmatpush1.msra.mxu0 0.0
      %1572 = vmatprep.subr.mxu0 0.0
      %1573 = vmatpush1.msra.mxu0 0.0
      %1574 = vmatprep.subr.mxu0 0.0
      %1575 = vmatpush1.msra.mxu0 0.0
      %1576 = vmatprep.subr.mxu0 0.0
      %1577 = vmatpush1.msra.mxu0 0.0
      %1578 = vmatprep.subr.mxu0 0.0
      %1579 = vmatpush1.msra.mxu0 0.0
      %1580 = vmatprep.subr.mxu0 0.0
      %1581 = vmatpush1.msra.mxu0 0.0
      %1582 = vmatprep.subr.mxu0 0.0
      %1583 = vmatpush1.msra.mxu0 0.0
      %1584 = vmatprep.mubr.f32.mxu0 0.0
      %1585 = vmatmul.mubr.f32.gmra.mrb[0].mxu0 %v1515
      %v1586 = vpop.f32.mrb[0].mxu0
      %v1587 = vadd.f32 %v1512, %v1586
      %v1588 = vpop.f32.mrb[0].mxu0
      %1589 = vmatprep.mubr.f32.mxu0 0.0
      %1590 = vmatmul.mubr.f32.gmra.mrb[0].mxu0 %v1518
      %v1591 = vpop.f32.mrb[0].mxu0
      %v1592 = vadd.f32 %v1512, %v1591
      %v1593 = vpop.f32.mrb[0].mxu0
      %1594 = vdwg.mxu0
      %v1595 = vld [vmem:[%s2] sm:$0xff]
      %v1596 = vld [vmem:[%s2 + $0x8] sm:$0xff]
      %v1597 = vld [vmem:[%s2 + $0x10] sm:$0xff]
      %v1598 = vld [vmem:[%s2 + $0x18] sm:$0xf]
      %v1599 = vld [vmem:[%s3] sm:$0xff]
      %v1600 = vld [vmem:[%s3 + $0x8] sm:$0xff]
      %v1601 = vld [vmem:[%s3 + $0x10] sm:$0xff]
      %v1602 = vld [vmem:[%s3 + $0x18] sm:$0xf]
      %v1604 = vrot.slane %v1587, 1
      %v1606 = vrot.slane %v1587, 2
      %v1608 = vrot.slane %v1587, 3
      %vm1610 = vcmask 1046528
      %v1611 = vsel %vm1610, %v1587, %v1604
      %vm1612 = vcmask 1045504
      %v1613 = vsel %vm1612, %v1604, %v1606
      %vm1614 = vcmask 1044480
      %v1615 = vsel %vm1614, %v1606, %v1608
      %1620 = vrot.lane.b32.xlu0 %v1595, 32
      %v1621 = vpop.permute.xlu0 %1620
      %1622 = vrot.lane.b32.xlu0 %v1596, 32
      %v1623 = vpop.permute.xlu0 %1622
      %1624 = vrot.lane.b32.xlu0 %v1597, 32
      %v1625 = vpop.permute.xlu0 %1624
      %1626 = vrot.lane.b32.xlu0 %v1598, 32
      %v1627 = vpop.permute.xlu0 %1626
      %v1632 = vmul.f32 %v1611, %v1621
      %v1633 = vmul.f32 %v1613, %v1623
      %v1634 = vmul.f32 %v1615, %v1625
      %v1635 = vmul.f32 %v1608, %v1627
      %1636 = vrot.lane.b32.xlu0 %v1595, 64
      %v1637 = vpop.permute.xlu0 %1636
      %1638 = vrot.lane.b32.xlu0 %v1596, 64
      %v1639 = vpop.permute.xlu0 %1638
      %1640 = vrot.lane.b32.xlu0 %v1597, 64
      %v1641 = vpop.permute.xlu0 %1640
      %1642 = vrot.lane.b32.xlu0 %v1598, 64
      %v1643 = vpop.permute.xlu0 %1642
      %v1648 = vmul.f32 %v1611, %v1637
      %v1649 = vmul.f32 %v1613, %v1639
      %v1650 = vmul.f32 %v1615, %v1641
      %v1651 = vmul.f32 %v1608, %v1643
      %1656 = vrot.lane.b32.xlu0 %v1632, 96
      %v1657 = vpop.permute.xlu0 %1656
      %1658 = vrot.lane.b32.xlu0 %v1633, 96
      %v1659 = vpop.permute.xlu0 %1658
      %1660 = vrot.lane.b32.xlu0 %v1634, 96
      %v1661 = vpop.permute.xlu0 %1660
      %1662 = vrot.lane.b32.xlu0 %v1635, 96
      %v1663 = vpop.permute.xlu0 %1662
      %v1664 = vsel %vm1237, %v1587, 0
      %v1666 = vsel %vm1237, %v1657, 0
      %v1668 = vsel %vm1237, %v1659, 0
      %v1670 = vsel %vm1237, %v1661, 0
      %v1672 = vsel %vm1237, %v1663, 0
      %1674 = vmatprep.subr.mxu0 0.0
      %1675 = vmatpush1.xpose.msra.mxu0 %v1666
      %1676 = vmatprep.subr.mxu0 0.0
      %1677 = vmatpush1.xpose.msra.mxu0 %v1668
      %1678 = vmatprep.subr.mxu0 0.0
      %1679 = vmatpush1.xpose.msra.mxu0 %v1670
      %1680 = vmatprep.subr.mxu0 0.0
      %1681 = vmatpush1.xpose.msra.mxu0 %v1672
      %1682 = vmatprep.subr.mxu0 0.0
      %1683 = vmatpush1.xpose.msra.mxu0 0.0
      %1684 = vmatprep.subr.mxu0 0.0
      %1685 = vmatpush1.xpose.msra.mxu0 0.0
      %1686 = vmatprep.subr.mxu0 0.0
      %1687 = vmatpush1.xpose.msra.mxu0 0.0
      %1688 = vmatprep.subr.mxu0 0.0
      %1689 = vmatpush1.xpose.msra.mxu0 0.0
      %1690 = vmatprep.subr.mxu0 0.0
      %1691 = vmatpush1.xpose.msra.mxu0 0.0
      %1692 = vmatprep.subr.mxu0 0.0
      %1693 = vmatpush1.xpose.msra.mxu0 0.0
      %1694 = vmatprep.subr.mxu0 0.0
      %1695 = vmatpush1.xpose.msra.mxu0 0.0
      %1696 = vmatprep.subr.mxu0 0.0
      %1697 = vmatpush1.xpose.msra.mxu0 0.0
      %1698 = vmatprep.subr.mxu0 0.0
      %1699 = vmatpush1.xpose.msra.mxu0 0.0
      %1700 = vmatprep.subr.mxu0 0.0
      %1701 = vmatpush1.xpose.msra.mxu0 0.0
      %1702 = vmatprep.subr.mxu0 0.0
      %1703 = vmatpush1.xpose.msra.mxu0 0.0
      %1704 = vmatprep.subr.mxu0 0.0
      %1705 = vmatpush1.xpose.msra.mxu0 0.0
      %1706 = vmatprep.subr.mxu0 0.0
      %1707 = vmatpush1.xpose.msra.mxu0 0.0
      %1708 = vmatprep.subr.mxu0 0.0
      %1709 = vmatpush1.xpose.msra.mxu0 0.0
      %1710 = vmatprep.subr.mxu0 0.0
      %1711 = vmatpush1.xpose.msra.mxu0 0.0
      %1712 = vmatprep.subr.mxu0 0.0
      %1713 = vmatpush1.xpose.msra.mxu0 0.0
      %1714 = vmatprep.subr.mxu0 0.0
      %1715 = vmatpush1.xpose.msra.mxu0 0.0
      %1716 = vmatprep.subr.mxu0 0.0
      %1717 = vmatpush1.xpose.msra.mxu0 0.0
      %1718 = vmatprep.subr.mxu0 0.0
      %1719 = vmatpush1.xpose.msra.mxu0 0.0
      %1720 = vmatprep.subr.mxu0 0.0
      %1721 = vmatpush1.xpose.msra.mxu0 0.0
      %1722 = vmatprep.subr.mxu0 0.0
      %1723 = vmatpush1.xpose.msra.mxu0 0.0
      %1724 = vmatprep.subr.mxu0 0.0
      %1725 = vmatpush1.xpose.msra.mxu0 0.0
      %1726 = vmatprep.subr.mxu0 0.0
      %1727 = vmatpush1.xpose.msra.mxu0 0.0
      %1728 = vmatprep.subr.mxu0 0.0
      %1729 = vmatpush1.xpose.msra.mxu0 0.0
      %1730 = vmatprep.subr.mxu0 0.0
      %1731 = vmatpush1.xpose.msra.mxu0 0.0
      %1732 = vmatprep.subr.mxu0 0.0
      %1733 = vmatpush1.xpose.msra.mxu0 0.0
      %1734 = vmatprep.subr.mxu0 0.0
      %1735 = vmatpush1.xpose.msra.mxu0 0.0
      %1736 = vmatprep.subr.mxu0 0.0
      %1737 = vmatpush1.xpose.msra.mxu0 0.0
      %1738 = vmatprep.mubr.f32.mxu0 0.0
      %1739 = vmatmul.mubr.f32.gmra.mrb[0].mxu0 %v1664
      %v1740 = vpop.f32.mrb[0].mxu0
      %v1741 = vadd.f32 0.0, %v1740
      %v1742 = vpop.f32.mrb[0].mxu0
      %1743 = vdwg.mxu0
      %v1744 = vmul.f32 %v1741, 0.35355338
      %v1745 = vld [vmem:[%s1] sm:$0x1]
      %vm1746 = vcmp.gt.f32.partialorder %v1745, 0.0
      %v1747 = vsel %vm1746, 1, 0
      %v1748 = vlaneseq
      %v1749 = vshrl.u32 %v1748, 7
      %v1750 = vsub.s32 0, %v1749
      %v1751 = vrot.slane %v1747, %v1750
      %vm1752 = vcmp.eq.s32.totalorder %v1751, 1
      %v1753 = vsel %vm1752, %v1744, -1e+30
      %vm1754 = vcmask 227328
      %v1755 = vsel %vm1754, %v1753, -inf
      %1756 = vmax.xlane.f32.xlu0 %v1755
      %v1757 = vpop.xlane.xlu0 %1756
      %v1758 = vsub.f32 %v1753, %v1757
      %v1759 = vmul.f32 %v1758, 1.442695
      %v1760 = vpow.pop %v1759
      %vm1761 = vcmask 228352
      %v1763 = vsel %vm1761, %v1760, 0
      %vm1765 = vcmask 1043456
      %v1767 = vsel %vm1765, %v1602, 0
      %1769 = vmatprep.subr.mxu0 0.0
      %1770 = vmatpush1.msra.mxu0 %v1599
      %1771 = vmatprep.subr.mxu0 0.0
      %1772 = vmatpush1.msra.mxu0 %v1600
      %1773 = vmatprep.subr.mxu0 0.0
      %1774 = vmatpush1.msra.mxu0 %v1601
      %1775 = vmatprep.subr.mxu0 0.0
      %1776 = vmatpush1.msra.mxu0 %v1767
      %1777 = vmatprep.subr.mxu0 0.0
      %1778 = vmatpush1.msra.mxu0 0.0
      %1779 = vmatprep.subr.mxu0 0.0
      %1780 = vmatpush1.msra.mxu0 0.0
      %1781 = vmatprep.subr.mxu0 0.0
      %1782 = vmatpush1.msra.mxu0 0.0
      %1783 = vmatprep.subr.mxu0 0.0
      %1784 = vmatpush1.msra.mxu0 0.0
      %1785 = vmatprep.subr.mxu0 0.0
      %1786 = vmatpush1.msra.mxu0 0.0
      %1787 = vmatprep.subr.mxu0 0.0
      %1788 = vmatpush1.msra.mxu0 0.0
      %1789 = vmatprep.subr.mxu0 0.0
      %1790 = vmatpush1.msra.mxu0 0.0
      %1791 = vmatprep.subr.mxu0 0.0
      %1792 = vmatpush1.msra.mxu0 0.0
      %1793 = vmatprep.subr.mxu0 0.0
      %1794 = vmatpush1.msra.mxu0 0.0
      %1795 = vmatprep.subr.mxu0 0.0
      %1796 = vmatpush1.msra.mxu0 0.0
      %1797 = vmatprep.subr.mxu0 0.0
      %1798 = vmatpush1.msra.mxu0 0.0
      %1799 = vmatprep.subr.mxu0 0.0
      %1800 = vmatpush1.msra.mxu0 0.0
      %1801 = vmatprep.subr.mxu0 0.0
      %1802 = vmatpush1.msra.mxu0 0.0
      %1803 = vmatprep.subr.mxu0 0.0
      %1804 = vmatpush1.msra.mxu0 0.0
      %1805 = vmatprep.subr.mxu0 0.0
      %1806 = vmatpush1.msra.mxu0 0.0
      %1807 = vmatprep.subr.mxu0 0.0
      %1808 = vmatpush1.msra.mxu0 0.0
      %1809 = vmatprep.subr.mxu0 0.0
      %1810 = vmatpush1.msra.mxu0 0.0
      %1811 = vmatprep.subr.mxu0 0.0
      %1812 = vmatpush1.msra.mxu0 0.0
      %1813 = vmatprep.subr.mxu0 0.0
      %1814 = vmatpush1.msra.mxu0 0.0
      %1815 = vmatprep.subr.mxu0 0.0
      %1816 = vmatpush1.msra.mxu0 0.0
      %1817 = vmatprep.subr.mxu0 0.0
      %1818 = vmatpush1.msra.mxu0 0.0
      %1819 = vmatprep.subr.mxu0 0.0
      %1820 = vmatpush1.msra.mxu0 0.0
      %1821 = vmatprep.subr.mxu0 0.0
      %1822 = vmatpush1.msra.mxu0 0.0
      %1823 = vmatprep.subr.mxu0 0.0
      %1824 = vmatpush1.msra.mxu0 0.0
      %1825 = vmatprep.subr.mxu0 0.0
      %1826 = vmatpush1.msra.mxu0 0.0
      %1827 = vmatprep.subr.mxu0 0.0
      %1828 = vmatpush1.msra.mxu0 0.0
      %1829 = vmatprep.subr.mxu0 0.0
      %1830 = vmatpush1.msra.mxu0 0.0
      %1831 = vmatprep.subr.mxu0 0.0
      %1832 = vmatpush1.msra.mxu0 0.0
      %1833 = vmatprep.mubr.f32.mxu0 0.0
      %1834 = vmatmul.mubr.f32.gmra.mrb[0].mxu0 %v1763
      %v1835 = vpop.f32.mrb[0].mxu0
      %v1836 = vadd.f32 0.0, %v1835
      %v1837 = vpop.f32.mrb[0].mxu0
      %1838 = vdwg.mxu0
      %v1839 = vrcp.pop %v1836
      %v1840 = vmul.f32 %v1760, %v1839
      %1845 = vrot.lane.b32.xlu0 %v1648, 64
      %v1846 = vpop.permute.xlu0 %1845
      %1847 = vrot.lane.b32.xlu0 %v1649, 64
      %v1848 = vpop.permute.xlu0 %1847
      %1849 = vrot.lane.b32.xlu0 %v1650, 64
      %v1850 = vpop.permute.xlu0 %1849
      %1851 = vrot.lane.b32.xlu0 %v1651, 64
      %v1852 = vpop.permute.xlu0 %1851
      %v1857 = vsel %vm1761, %v1840, 0
      %v1859 = vsel %vm1765, %v1852, 0
      %1861 = vmatprep.subr.mxu0 0.0
      %1862 = vmatpush1.msra.mxu0 %v1846
      %1863 = vmatprep.subr.mxu0 0.0
      %1864 = vmatpush1.msra.mxu0 %v1848
      %1865 = vmatprep.subr.mxu0 0.0
      %1866 = vmatpush1.msra.mxu0 %v1850
      %1867 = vmatprep.subr.mxu0 0.0
      %1868 = vmatpush1.msra.mxu0 %v1859
      %1869 = vmatprep.subr.mxu0 0.0
      %1870 = vmatpush1.msra.mxu0 0.0
      %1871 = vmatprep.subr.mxu0 0.0
      %1872 = vmatpush1.msra.mxu0 0.0
      %1873 = vmatprep.subr.mxu0 0.0
      %1874 = vmatpush1.msra.mxu0 0.0
      %1875 = vmatprep.subr.mxu0 0.0
      %1876 = vmatpush1.msra.mxu0 0.0
      %1877 = vmatprep.subr.mxu0 0.0
      %1878 = vmatpush1.msra.mxu0 0.0
      %1879 = vmatprep.subr.mxu0 0.0
      %1880 = vmatpush1.msra.mxu0 0.0
      %1881 = vmatprep.subr.mxu0 0.0
      %1882 = vmatpush1.msra.mxu0 0.0
      %1883 = vmatprep.subr.mxu0 0.0
      %1884 = vmatpush1.msra.mxu0 0.0
      %1885 = vmatprep.subr.mxu0 0.0
      %1886 = vmatpush1.msra.mxu0 0.0
      %1887 = vmatprep.subr.mxu0 0.0
      %1888 = vmatpush1.msra.mxu0 0.0
      %1889 = vmatprep.subr.mxu0 0.0
      %1890 = vmatpush1.msra.mxu0 0.0
      %1891 = vmatprep.subr.mxu0 0.0
      %1892 = vmatpush1.msra.mxu0 0.0
      %1893 = vmatprep.subr.mxu0 0.0
      %1894 = vmatpush1.msra.mxu0 0.0
      %1895 = vmatprep.subr.mxu0 0.0
      %1896 = vmatpush1.msra.mxu0 0.0
      %1897 = vmatprep.subr.mxu0 0.0
      %1898 = vmatpush1.msra.mxu0 0.0
      %1899 = vmatprep.subr.mxu0 0.0
      %1900 = vmatpush1.msra.mxu0 0.0
      %1901 = vmatprep.subr.mxu0 0.0
      %1902 = vmatpush1.msra.mxu0 0.0
      %1903 = vmatprep.subr.mxu0 0.0
      %1904 = vmatpush1.msra.mxu0 0.0
      %1905 = vmatprep.subr.mxu0 0.0
      %1906 = vmatpush1.msra.mxu0 0.0
      %1907 = vmatprep.subr.mxu0 0.0
      %1908 = vmatpush1.msra.mxu0 0.0
      %1909 = vmatprep.subr.mxu0 0.0
      %1910 = vmatpush1.msra.mxu0 0.0
      %1911 = vmatprep.subr.mxu0 0.0
      %1912 = vmatpush1.msra.mxu0 0.0
      %1913 = vmatprep.subr.mxu0 0.0
      %1914 = vmatpush1.msra.mxu0 0.0
      %1915 = vmatprep.subr.mxu0 0.0
      %1916 = vmatpush1.msra.mxu0 0.0
      %1917 = vmatprep.subr.mxu0 0.0
      %1918 = vmatpush1.msra.mxu0 0.0
      %1919 = vmatprep.subr.mxu0 0.0
      %1920 = vmatpush1.msra.mxu0 0.0
      %1921 = vmatprep.subr.mxu0 0.0
      %1922 = vmatpush1.msra.mxu0 0.0
      %1923 = vmatprep.subr.mxu0 0.0
      %1924 = vmatpush1.msra.mxu0 0.0
      %1925 = vmatprep.mubr.f32.mxu0 0.0
      %1926 = vmatmul.mubr.f32.gmra.mrb[0].mxu0 %v1857
      %v1927 = vpop.f32.mrb[0].mxu0
      %v1928 = vadd.f32 0.0, %v1927
      %v1929 = vpop.f32.mrb[0].mxu0
      %1930 = vdwg.mxu0
      %vm1932 = vcmask 1040384
      %v1933 = vrot.slane %v1587, 7
      %v1934 = vrot.slane %v1592, 7
      %v1935 = vsel %vm1932, %v1933, %v1934
      %v1937 = vrot.slane %v1592, 1
      %v1938 = vsel %vm1610, %v1604, %v1937
      %v1941 = vrot.slane %v1592, 2
      %v1942 = vsel %vm1612, %v1606, %v1941
      %v1945 = vsel %vm1610, %v1935, %v1587
      %v1946 = vsel %vm1612, %v1592, %v1938
      %v1947 = vsel %vm1614, %v1937, %v1942
      %v1948 = vmul.f32 %v1945, %v1621
      %v1949 = vmul.f32 %v1946, %v1623
      %v1950 = vmul.f32 %v1947, %v1625
      %v1951 = vmul.f32 %v1941, %v1627
      %v1952 = vmul.f32 %v1945, %v1637
      %v1953 = vmul.f32 %v1946, %v1639
      %v1954 = vmul.f32 %v1947, %v1641
      %v1955 = vmul.f32 %v1941, %v1643
      %1960 = vrot.lane.b32.xlu0 %v1948, 96
      %v1961 = vpop.permute.xlu0 %1960
      %1962 = vrot.lane.b32.xlu0 %v1949, 96
      %v1963 = vpop.permute.xlu0 %1962
      %1964 = vrot.lane.b32.xlu0 %v1950, 96
      %v1965 = vpop.permute.xlu0 %1964
      %1966 = vrot.lane.b32.xlu0 %v1951, 96
      %v1967 = vpop.permute.xlu0 %1966
      %v1968 = vsel %vm1237, %v1935, 0
      %v1970 = vsel %vm1237, %v1961, 0
      %v1972 = vsel %vm1237, %v1963, 0
      %v1974 = vsel %vm1237, %v1965, 0
      %v1976 = vsel %vm1237, %v1967, 0
      %1978 = vmatprep.subr.mxu0 0.0
      %1979 = vmatpush1.xpose.msra.mxu0 %v1970
      %1980 = vmatprep.subr.mxu0 0.0
      %1981 = vmatpush1.xpose.msra.mxu0 %v1972
      %1982 = vmatprep.subr.mxu0 0.0
      %1983 = vmatpush1.xpose.msra.mxu0 %v1974
      %1984 = vmatprep.subr.mxu0 0.0
      %1985 = vmatpush1.xpose.msra.mxu0 %v1976
      %1986 = vmatprep.subr.mxu0 0.0
      %1987 = vmatpush1.xpose.msra.mxu0 0.0
      %1988 = vmatprep.subr.mxu0 0.0
      %1989 = vmatpush1.xpose.msra.mxu0 0.0
      %1990 = vmatprep.subr.mxu0 0.0
      %1991 = vmatpush1.xpose.msra.mxu0 0.0
      %1992 = vmatprep.subr.mxu0 0.0
      %1993 = vmatpush1.xpose.msra.mxu0 0.0
      %1994 = vmatprep.subr.mxu0 0.0
      %1995 = vmatpush1.xpose.msra.mxu0 0.0
      %1996 = vmatprep.subr.mxu0 0.0
      %1997 = vmatpush1.xpose.msra.mxu0 0.0
      %1998 = vmatprep.subr.mxu0 0.0
      %1999 = vmatpush1.xpose.msra.mxu0 0.0
      %2000 = vmatprep.subr.mxu0 0.0
      %2001 = vmatpush1.xpose.msra.mxu0 0.0
      %2002 = vmatprep.subr.mxu0 0.0
      %2003 = vmatpush1.xpose.msra.mxu0 0.0
      %2004 = vmatprep.subr.mxu0 0.0
      %2005 = vmatpush1.xpose.msra.mxu0 0.0
      %2006 = vmatprep.subr.mxu0 0.0
      %2007 = vmatpush1.xpose.msra.mxu0 0.0
      %2008 = vmatprep.subr.mxu0 0.0
      %2009 = vmatpush1.xpose.msra.mxu0 0.0
      %2010 = vmatprep.subr.mxu0 0.0
      %2011 = vmatpush1.xpose.msra.mxu0 0.0
      %2012 = vmatprep.subr.mxu0 0.0
      %2013 = vmatpush1.xpose.msra.mxu0 0.0
      %2014 = vmatprep.subr.mxu0 0.0
      %2015 = vmatpush1.xpose.msra.mxu0 0.0
      %2016 = vmatprep.subr.mxu0 0.0
      %2017 = vmatpush1.xpose.msra.mxu0 0.0
      %2018 = vmatprep.subr.mxu0 0.0
      %2019 = vmatpush1.xpose.msra.mxu0 0.0
      %2020 = vmatprep.subr.mxu0 0.0
      %2021 = vmatpush1.xpose.msra.mxu0 0.0
      %2022 = vmatprep.subr.mxu0 0.0
      %2023 = vmatpush1.xpose.msra.mxu0 0.0
      %2024 = vmatprep.subr.mxu0 0.0
      %2025 = vmatpush1.xpose.msra.mxu0 0.0
      %2026 = vmatprep.subr.mxu0 0.0
      %2027 = vmatpush1.xpose.msra.mxu0 0.0
      %2028 = vmatprep.subr.mxu0 0.0
      %2029 = vmatpush1.xpose.msra.mxu0 0.0
      %2030 = vmatprep.subr.mxu0 0.0
      %2031 = vmatpush1.xpose.msra.mxu0 0.0
      %2032 = vmatprep.subr.mxu0 0.0
      %2033 = vmatpush1.xpose.msra.mxu0 0.0
      %2034 = vmatprep.subr.mxu0 0.0
      %2035 = vmatpush1.xpose.msra.mxu0 0.0
      %2036 = vmatprep.subr.mxu0 0.0
      %2037 = vmatpush1.xpose.msra.mxu0 0.0
      %2038 = vmatprep.subr.mxu0 0.0
      %2039 = vmatpush1.xpose.msra.mxu0 0.0
      %2040 = vmatprep.subr.mxu0 0.0
      %2041 = vmatpush1.xpose.msra.mxu0 0.0
      %2042 = vmatprep.mubr.f32.mxu0 0.0
      %2043 = vmatmul.mubr.f32.gmra.mrb[0].mxu0 %v1968
      %v2044 = vpop.f32.mrb[0].mxu0
      %v2045 = vadd.f32 0.0, %v2044
      %v2046 = vpop.f32.mrb[0].mxu0
      %2047 = vdwg.mxu0
      %v2048 = vmul.f32 %v2045, 0.35355338
      %s2049 = scalar_lea.vmem %s1, 1
      %v2050 = vld [vmem:[%s2049] sm:$0x1]
      %vm2051 = vcmp.gt.f32.partialorder %v2050, 0.0
      %v2052 = vsel %vm2051, 1, 0
      %v2053 = vlaneseq
      %v2054 = vshrl.u32 %v2053, 7
      %v2055 = vsub.s32 0, %v2054
      %v2056 = vrot.slane %v2052, %v2055
      %vm2057 = vcmp.eq.s32.totalorder %v2056, 1
      %v2058 = vsel %vm2057, %v2048, -1e+30
      %v2059 = vsel %vm1754, %v2058, -inf
      %2060 = vmax.xlane.f32.xlu0 %v2059
      %v2061 = vpop.xlane.xlu0 %2060
      %v2062 = vsub.f32 %v2058, %v2061
      %v2063 = vmul.f32 %v2062, 1.442695
      %v2064 = vpow.pop %v2063
      %v2066 = vsel %vm1761, %v2064, 0
      %2068 = vmatprep.subr.mxu0 0.0
      %2069 = vmatpush1.msra.mxu0 %v1599
      %2070 = vmatprep.subr.mxu0 0.0
      %2071 = vmatpush1.msra.mxu0 %v1600
      %2072 = vmatprep.subr.mxu0 0.0
      %2073 = vmatpush1.msra.mxu0 %v1601
      %2074 = vmatprep.subr.mxu0 0.0
      %2075 = vmatpush1.msra.mxu0 %v1767
      %2076 = vmatprep.subr.mxu0 0.0
      %2077 = vmatpush1.msra.mxu0 0.0
      %2078 = vmatprep.subr.mxu0 0.0
      %2079 = vmatpush1.msra.mxu0 0.0
      %2080 = vmatprep.subr.mxu0 0.0
      %2081 = vmatpush1.msra.mxu0 0.0
      %2082 = vmatprep.subr.mxu0 0.0
      %2083 = vmatpush1.msra.mxu0 0.0
      %2084 = vmatprep.subr.mxu0 0.0
      %2085 = vmatpush1.msra.mxu0 0.0
      %2086 = vmatprep.subr.mxu0 0.0
      %2087 = vmatpush1.msra.mxu0 0.0
      %2088 = vmatprep.subr.mxu0 0.0
      %2089 = vmatpush1.msra.mxu0 0.0
      %2090 = vmatprep.subr.mxu0 0.0
      %2091 = vmatpush1.msra.mxu0 0.0
      %2092 = vmatprep.subr.mxu0 0.0
      %2093 = vmatpush1.msra.mxu0 0.0
      %2094 = vmatprep.subr.mxu0 0.0
      %2095 = vmatpush1.msra.mxu0 0.0
      %2096 = vmatprep.subr.mxu0 0.0
      %2097 = vmatpush1.msra.mxu0 0.0
      %2098 = vmatprep.subr.mxu0 0.0
      %2099 = vmatpush1.msra.mxu0 0.0
      %2100 = vmatprep.subr.mxu0 0.0
      %2101 = vmatpush1.msra.mxu0 0.0
      %2102 = vmatprep.subr.mxu0 0.0
      %2103 = vmatpush1.msra.mxu0 0.0
      %2104 = vmatprep.subr.mxu0 0.0
      %2105 = vmatpush1.msra.mxu0 0.0
      %2106 = vmatprep.subr.mxu0 0.0
      %2107 = vmatpush1.msra.mxu0 0.0
      %2108 = vmatprep.subr.mxu0 0.0
      %2109 = vmatpush1.msra.mxu0 0.0
      %2110 = vmatprep.subr.mxu0 0.0
      %2111 = vmatpush1.msra.mxu0 0.0
      %2112 = vmatprep.subr.mxu0 0.0
      %2113 = vmatpush1.msra.mxu0 0.0
      %2114 = vmatprep.subr.mxu0 0.0
      %2115 = vmatpush1.msra.mxu0 0.0
      %2116 = vmatprep.subr.mxu0 0.0
      %2117 = vmatpush1.msra.mxu0 0.0
      %2118 = vmatprep.subr.mxu0 0.0
      %2119 = vmatpush1.msra.mxu0 0.0
      %2120 = vmatprep.subr.mxu0 0.0
      %2121 = vmatpush1.msra.mxu0 0.0
      %2122 = vmatprep.subr.mxu0 0.0
      %2123 = vmatpush1.msra.mxu0 0.0
      %2124 = vmatprep.subr.mxu0 0.0
      %2125 = vmatpush1.msra.mxu0 0.0
      %2126 = vmatprep.subr.mxu0 0.0
      %2127 = vmatpush1.msra.mxu0 0.0
      %2128 = vmatprep.subr.mxu0 0.0
      %2129 = vmatpush1.msra.mxu0 0.0
      %2130 = vmatprep.subr.mxu0 0.0
      %2131 = vmatpush1.msra.mxu0 0.0
      %2132 = vmatprep.mubr.f32.mxu0 0.0
      %2133 = vmatmul.mubr.f32.gmra.mrb[0].mxu0 %v2066
      %v2134 = vpop.f32.mrb[0].mxu0
      %v2135 = vadd.f32 0.0, %v2134
      %v2136 = vpop.f32.mrb[0].mxu0
      %2137 = vdwg.mxu0
      %v2138 = vrcp.pop %v2135
      %v2139 = vmul.f32 %v2064, %v2138
      %2144 = vrot.lane.b32.xlu0 %v1952, 64
      %v2145 = vpop.permute.xlu0 %2144
      %2146 = vrot.lane.b32.xlu0 %v1953, 64
      %v2147 = vpop.permute.xlu0 %2146
      %2148 = vrot.lane.b32.xlu0 %v1954, 64
      %v2149 = vpop.permute.xlu0 %2148
      %2150 = vrot.lane.b32.xlu0 %v1955, 64
      %v2151 = vpop.permute.xlu0 %2150
      %v2156 = vsel %vm1761, %v2139, 0
      %v2158 = vsel %vm1765, %v2151, 0
      %2160 = vmatprep.subr.mxu0 0.0
      %2161 = vmatpush1.msra.mxu0 %v2145
      %2162 = vmatprep.subr.mxu0 0.0
      %2163 = vmatpush1.msra.mxu0 %v2147
      %2164 = vmatprep.subr.mxu0 0.0
      %2165 = vmatpush1.msra.mxu0 %v2149
      %2166 = vmatprep.subr.mxu0 0.0
      %2167 = vmatpush1.msra.mxu0 %v2158
      %2168 = vmatprep.subr.mxu0 0.0
      %2169 = vmatpush1.msra.mxu0 0.0
      %2170 = vmatprep.subr.mxu0 0.0
      %2171 = vmatpush1.msra.mxu0 0.0
      %2172 = vmatprep.subr.mxu0 0.0
      %2173 = vmatpush1.msra.mxu0 0.0
      %2174 = vmatprep.subr.mxu0 0.0
      %2175 = vmatpush1.msra.mxu0 0.0
      %2176 = vmatprep.subr.mxu0 0.0
      %2177 = vmatpush1.msra.mxu0 0.0
      %2178 = vmatprep.subr.mxu0 0.0
      %2179 = vmatpush1.msra.mxu0 0.0
      %2180 = vmatprep.subr.mxu0 0.0
      %2181 = vmatpush1.msra.mxu0 0.0
      %2182 = vmatprep.subr.mxu0 0.0
      %2183 = vmatpush1.msra.mxu0 0.0
      %2184 = vmatprep.subr.mxu0 0.0
      %2185 = vmatpush1.msra.mxu0 0.0
      %2186 = vmatprep.subr.mxu0 0.0
      %2187 = vmatpush1.msra.mxu0 0.0
      %2188 = vmatprep.subr.mxu0 0.0
      %2189 = vmatpush1.msra.mxu0 0.0
      %2190 = vmatprep.subr.mxu0 0.0
      %2191 = vmatpush1.msra.mxu0 0.0
      %2192 = vmatprep.subr.mxu0 0.0
      %2193 = vmatpush1.msra.mxu0 0.0
      %2194 = vmatprep.subr.mxu0 0.0
      %2195 = vmatpush1.msra.mxu0 0.0
      %2196 = vmatprep.subr.mxu0 0.0
      %2197 = vmatpush1.msra.mxu0 0.0
      %2198 = vmatprep.subr.mxu0 0.0
      %2199 = vmatpush1.msra.mxu0 0.0
      %2200 = vmatprep.subr.mxu0 0.0
      %2201 = vmatpush1.msra.mxu0 0.0
      %2202 = vmatprep.subr.mxu0 0.0
      %2203 = vmatpush1.msra.mxu0 0.0
      %2204 = vmatprep.subr.mxu0 0.0
      %2205 = vmatpush1.msra.mxu0 0.0
      %2206 = vmatprep.subr.mxu0 0.0
      %2207 = vmatpush1.msra.mxu0 0.0
      %2208 = vmatprep.subr.mxu0 0.0
      %2209 = vmatpush1.msra.mxu0 0.0
      %2210 = vmatprep.subr.mxu0 0.0
      %2211 = vmatpush1.msra.mxu0 0.0
      %2212 = vmatprep.subr.mxu0 0.0
      %2213 = vmatpush1.msra.mxu0 0.0
      %2214 = vmatprep.subr.mxu0 0.0
      %2215 = vmatpush1.msra.mxu0 0.0
      %2216 = vmatprep.subr.mxu0 0.0
      %2217 = vmatpush1.msra.mxu0 0.0
      %2218 = vmatprep.subr.mxu0 0.0
      %2219 = vmatpush1.msra.mxu0 0.0
      %2220 = vmatprep.subr.mxu0 0.0
      %2221 = vmatpush1.msra.mxu0 0.0
      %2222 = vmatprep.subr.mxu0 0.0
      %2223 = vmatpush1.msra.mxu0 0.0
      %2224 = vmatprep.mubr.f32.mxu0 0.0
      %2225 = vmatmul.mubr.f32.gmra.mrb[0].mxu0 %v2156
      %v2226 = vpop.f32.mrb[0].mxu0
      %v2227 = vadd.f32 0.0, %v2226
      %v2228 = vpop.f32.mrb[0].mxu0
      %2229 = vdwg.mxu0
      %v2231 = vrot.slane %v2227, 1
      %v2233 = vsel %vm1610, %v1928, %v2231
      %v2234 = vld [vmem:[%s1146] sm:$0xff]
      %v2235 = vld [vmem:[%s1146 + $0x8] sm:$0xff]
      %v2236 = vld [vmem:[%s1146 + $0x10] sm:$0xff]
      %v2237 = vld [vmem:[%s1146 + $0x18] sm:$0xff]
      %v2239 = vsel %vm1237, %v2233, 0
      %v2241 = vsel %vm1237, %v2231, 0
      %2243 = vmatprep.subr.mxu0 0.0
      %2244 = vmatpush1.msra.mxu0 %v2234
      %2245 = vmatprep.subr.mxu0 0.0
      %2246 = vmatpush1.msra.mxu0 %v2235
      %2247 = vmatprep.subr.mxu0 0.0
      %2248 = vmatpush1.msra.mxu0 %v2236
      %2249 = vmatprep.subr.mxu0 0.0
      %2250 = vmatpush1.msra.mxu0 %v2237
      %2251 = vmatprep.subr.mxu0 0.0
      %2252 = vmatpush1.msra.mxu0 0.0
      %2253 = vmatprep.subr.mxu0 0.0
      %2254 = vmatpush1.msra.mxu0 0.0
      %2255 = vmatprep.subr.mxu0 0.0
      %2256 = vmatpush1.msra.mxu0 0.0
      %2257 = vmatprep.subr.mxu0 0.0
      %2258 = vmatpush1.msra.mxu0 0.0
      %2259 = vmatprep.subr.mxu0 0.0
      %2260 = vmatpush1.msra.mxu0 0.0
      %2261 = vmatprep.subr.mxu0 0.0
      %2262 = vmatpush1.msra.mxu0 0.0
      %2263 = vmatprep.subr.mxu0 0.0
      %2264 = vmatpush1.msra.mxu0 0.0
      %2265 = vmatprep.subr.mxu0 0.0
      %2266 = vmatpush1.msra.mxu0 0.0
      %2267 = vmatprep.subr.mxu0 0.0
      %2268 = vmatpush1.msra.mxu0 0.0
      %2269 = vmatprep.subr.mxu0 0.0
      %2270 = vmatpush1.msra.mxu0 0.0
      %2271 = vmatprep.subr.mxu0 0.0
      %2272 = vmatpush1.msra.mxu0 0.0
      %2273 = vmatprep.subr.mxu0 0.0
      %2274 = vmatpush1.msra.mxu0 0.0
      %2275 = vmatprep.subr.mxu0 0.0
      %2276 = vmatpush1.msra.mxu0 0.0
      %2277 = vmatprep.subr.mxu0 0.0
      %2278 = vmatpush1.msra.mxu0 0.0
      %2279 = vmatprep.subr.mxu0 0.0
      %2280 = vmatpush1.msra.mxu0 0.0
      %2281 = vmatprep.subr.mxu0 0.0
      %2282 = vmatpush1.msra.mxu0 0.0
      %2283 = vmatprep.subr.mxu0 0.0
      %2284 = vmatpush1.msra.mxu0 0.0
      %2285 = vmatprep.subr.mxu0 0.0
      %2286 = vmatpush1.msra.mxu0 0.0
      %2287 = vmatprep.subr.mxu0 0.0
      %2288 = vmatpush1.msra.mxu0 0.0
      %2289 = vmatprep.subr.mxu0 0.0
      %2290 = vmatpush1.msra.mxu0 0.0
      %2291 = vmatprep.subr.mxu0 0.0
      %2292 = vmatpush1.msra.mxu0 0.0
      %2293 = vmatprep.subr.mxu0 0.0
      %2294 = vmatpush1.msra.mxu0 0.0
      %2295 = vmatprep.subr.mxu0 0.0
      %2296 = vmatpush1.msra.mxu0 0.0
      %2297 = vmatprep.subr.mxu0 0.0
      %2298 = vmatpush1.msra.mxu0 0.0
      %2299 = vmatprep.subr.mxu0 0.0
      %2300 = vmatpush1.msra.mxu0 0.0
      %2301 = vmatprep.subr.mxu0 0.0
      %2302 = vmatpush1.msra.mxu0 0.0
      %2303 = vmatprep.subr.mxu0 0.0
      %2304 = vmatpush1.msra.mxu0 0.0
      %2305 = vmatprep.subr.mxu0 0.0
      %2306 = vmatpush1.msra.mxu0 0.0
      %2307 = vmatprep.mubr.f32.mxu0 0.0
      %2308 = vmatmul.mubr.f32.gmra.mrb[0].mxu0 %v2239
      %v2309 = vpop.f32.mrb[0].mxu0
      %v2310 = vadd.f32 0.0, %v2309
      %v2311 = vpop.f32.mrb[0].mxu0
      %2312 = vmatprep.mubr.f32.mxu0 0.0
      %2313 = vmatmul.mubr.f32.gmra.mrb[0].mxu0 %v2241
      %v2314 = vpop.f32.mrb[0].mxu0
      %v2315 = vadd.f32 0.0, %v2314
      %v2316 = vpop.f32.mrb[0].mxu0
      %2317 = vdwg.mxu0
      %v2318 = vadd.f32 %v1462, %v2310
      %v2319 = vadd.f32 %v1463, %v2315
      %v2320 = vld [vmem:[%s1149] sm:$0x1]
      %v2322 = vlaneseq
      %v2323 = vshrl.u32 %v2322, 7
      %v2324 = vsub.s32 0, %v2323
      %v2325 = vrot.slane %v2320, %v2324
      %v2327 = vadd.f32 %v2318, %v2325
      %v2328 = vadd.f32 %v2319, %v2325
      %v2329 = vld [vmem:[%s1153] sm:$0x3]
      %v2330 = vsel %vm1237, %v2327, 0.0
      %2331 = vadd.xlane.f32.xlu0 %v2330
      %v2332 = vpop.xlane.xlu0 %2331
      %v2333 = vsel %vm1241, %v2328, 0.0
      %2334 = vadd.xlane.f32.xlu0 %v2333
      %v2335 = vpop.xlane.xlu0 %2334
      %v2336 = vmul.f32 %v2332, %v1245
      %v2337 = vmul.f32 %v2335, %v1245
      %v2338 = vsub.f32 %v2327, %v2336
      %v2339 = vsub.f32 %v2328, %v2337
      %v2340 = vmul.f32 %v2338, %v2338
      %v2341 = vmul.f32 %v2339, %v2339
      %v2342 = vsel %vm1237, %v2340, 0.0
      %2343 = vadd.xlane.f32.xlu0 %v2342
      %v2344 = vpop.xlane.xlu0 %2343
      %v2345 = vsel %vm1241, %v2341, 0.0
      %2346 = vadd.xlane.f32.xlu0 %v2345
      %v2347 = vpop.xlane.xlu0 %2346
      %v2348 = vmul.f32 %v2344, %v1245
      %v2349 = vmul.f32 %v2347, %v1245
      %v2350 = vadd.f32 %v2348, 1e-05
      %v2351 = vadd.f32 %v2349, 1e-05
      %v2352 = vrsqrt.pop %v2350
      %v2353 = vrsqrt.pop %v2351
      %v2354 = vmul.f32 %v2338, %v2352
      %v2355 = vmul.f32 %v2339, %v2353
      %v2356 = vlaneseq
      %v2357 = vshrl.u32 %v2356, 7
      %v2358 = vsub.s32 0, %v2357
      %v2359 = vrot.slane %v2329, %v2358
      %v2360 = vmul.f32 %v2354, %v2359
      %v2361 = vmul.f32 %v2355, %v2359
      %v2362 = vlaneseq
      %v2363 = vshrl.u32 %v2362, 7
      %v2364 = vsub.s32 1, %v2363
      %v2365 = vrot.slane %v2329, %v2364
      %v2366 = vadd.f32 %v2360, %v2365
      %v2367 = vadd.f32 %v2361, %v2365
      %v2368 = vld [vmem:[%s1158] sm:$0xff]
      %v2369 = vld [vmem:[%s1158 + $0x8] sm:$0xff]
      %v2370 = vld [vmem:[%s1158 + $0x10] sm:$0xff]
      %v2371 = vld [vmem:[%s1158 + $0x18] sm:$0xff]
      %v2372 = vld [vmem:[%s1161] sm:$0x1]
      %v2374 = vlaneseq
      %v2375 = vshrl.u32 %v2374, 7
      %v2376 = vsub.s32 0, %v2375
      %v2377 = vrot.slane %v2372, %v2376
      %v2380 = vsel %vm1237, %v2366, 0
      %v2383 = vsel %vm1237, %v2367, 0
      %2385 = vmatprep.subr.mxu0 0.0
      %2386 = vmatpush1.msra.mxu0 %v2368
      %2387 = vmatprep.subr.mxu0 0.0
      %2388 = vmatpush1.msra.mxu0 %v2369
      %2389 = vmatprep.subr.mxu0 0.0
      %2390 = vmatpush1.msra.mxu0 %v2370
      %2391 = vmatprep.subr.mxu0 0.0
      %2392 = vmatpush1.msra.mxu0 %v2371
      %2393 = vmatprep.subr.mxu0 0.0
      %2394 = vmatpush1.msra.mxu0 0.0
      %2395 = vmatprep.subr.mxu0 0.0
      %2396 = vmatpush1.msra.mxu0 0.0
      %2397 = vmatprep.subr.mxu0 0.0
      %2398 = vmatpush1.msra.mxu0 0.0
      %2399 = vmatprep.subr.mxu0 0.0
      %2400 = vmatpush1.msra.mxu0 0.0
      %2401 = vmatprep.subr.mxu0 0.0
      %2402 = vmatpush1.msra.mxu0 0.0
      %2403 = vmatprep.subr.mxu0 0.0
      %2404 = vmatpush1.msra.mxu0 0.0
      %2405 = vmatprep.subr.mxu0 0.0
      %2406 = vmatpush1.msra.mxu0 0.0
      %2407 = vmatprep.subr.mxu0 0.0
      %2408 = vmatpush1.msra.mxu0 0.0
      %2409 = vmatprep.subr.mxu0 0.0
      %2410 = vmatpush1.msra.mxu0 0.0
      %2411 = vmatprep.subr.mxu0 0.0
      %2412 = vmatpush1.msra.mxu0 0.0
      %2413 = vmatprep.subr.mxu0 0.0
      %2414 = vmatpush1.msra.mxu0 0.0
      %2415 = vmatprep.subr.mxu0 0.0
      %2416 = vmatpush1.msra.mxu0 0.0
      %2417 = vmatprep.subr.mxu0 0.0
      %2418 = vmatpush1.msra.mxu0 0.0
      %2419 = vmatprep.subr.mxu0 0.0
      %2420 = vmatpush1.msra.mxu0 0.0
      %2421 = vmatprep.subr.mxu0 0.0
      %2422 = vmatpush1.msra.mxu0 0.0
      %2423 = vmatprep.subr.mxu0 0.0
      %2424 = vmatpush1.msra.mxu0 0.0
      %2425 = vmatprep.subr.mxu0 0.0
      %2426 = vmatpush1.msra.mxu0 0.0
      %2427 = vmatprep.subr.mxu0 0.0
      %2428 = vmatpush1.msra.mxu0 0.0
      %2429 = vmatprep.subr.mxu0 0.0
      %2430 = vmatpush1.msra.mxu0 0.0
      %2431 = vmatprep.subr.mxu0 0.0
      %2432 = vmatpush1.msra.mxu0 0.0
      %2433 = vmatprep.subr.mxu0 0.0
      %2434 = vmatpush1.msra.mxu0 0.0
      %2435 = vmatprep.subr.mxu0 0.0
      %2436 = vmatpush1.msra.mxu0 0.0
      %2437 = vmatprep.subr.mxu0 0.0
      %2438 = vmatpush1.msra.mxu0 0.0
      %2439 = vmatprep.subr.mxu0 0.0
      %2440 = vmatpush1.msra.mxu0 0.0
      %2441 = vmatprep.subr.mxu0 0.0
      %2442 = vmatpush1.msra.mxu0 0.0
      %2443 = vmatprep.subr.mxu0 0.0
      %2444 = vmatpush1.msra.mxu0 0.0
      %2445 = vmatprep.subr.mxu0 0.0
      %2446 = vmatpush1.msra.mxu0 0.0
      %2447 = vmatprep.subr.mxu0 0.0
      %2448 = vmatpush1.msra.mxu0 0.0
      %2449 = vmatprep.mubr.f32.mxu0 0.0
      %2450 = vmatmul.mubr.f32.gmra.mrb[0].mxu0 %v2380
      %v2451 = vpop.f32.mrb[0].mxu0
      %v2452 = vadd.f32 %v2377, %v2451
      %v2453 = vpop.f32.mrb[0].mxu0
      %2454 = vmatprep.mubr.f32.mxu0 0.0
      %2455 = vmatmul.mubr.f32.gmra.mrb[0].mxu0 %v2383
      %v2456 = vpop.f32.mrb[0].mxu0
      %v2457 = vadd.f32 %v2377, %v2456
      %v2458 = vpop.f32.mrb[0].mxu0
      %2459 = vdwg.mxu0
      %v2460 = vxor.u32 %v2452, 2147483648
      %v2461 = vxor.u32 %v2457, 2147483648
      %v2462 = vmul.f32 %v2460, 1.442695
      %v2463 = vpow.pop %v2462
      %v2464 = vmul.f32 %v2461, 1.442695
      %v2465 = vpow.pop %v2464
      %v2466 = vadd.f32 %v2463, 1.0
      %v2467 = vadd.f32 %v2465, 1.0
      %v2468 = vrcp.pop %v2466
      %v2469 = vmul.f32 1.0, %v2468
      %v2470 = vrcp.pop %v2467
      %v2471 = vmul.f32 1.0, %v2470
      %2474 = vrot.lane.b32.xlu0 %v2469, 96
      %v2475 = vpop.permute.xlu0 %2474
      %2476 = vrot.lane.b32.xlu0 %v2471, 96
      %v2477 = vpop.permute.xlu0 %2476
      %v2480 = vmul.f32 %v2452, %v2475
      %v2481 = vmul.f32 %v2457, %v2477
      %v2482 = vld [vmem:[%s1165] sm:$0x7]
      %v2483 = vld [vmem:[%s4] sm:$0xff]
      %v2484 = vld [vmem:[%s4 + $0x8] sm:$0x3f]
      %v2485 = vld [vmem:[%s4 + $0x20] sm:$0xff]
      %v2486 = vld [vmem:[%s4 + $0x28] sm:$0x3f]
      %v2489 = vrot.slane %v2480, 7
      %v2490 = vrot.slane %v2481, 7
      %v2491 = vsel %vm1932, %v2489, %v2490
      %v2494 = vsel %vm1932, 0.0, %v2489
      %v2495 = vlaneseq
      %v2496 = vshrl.u32 %v2495, 7
      %v2497 = vsub.s32 0, %v2496
      %v2498 = vrot.slane %v2482, %v2497
      %v2499 = vmul.f32 %v2494, %v2498
      %v2500 = vmul.f32 %v2491, %v2498
      %2502 = vset.pattern.permute.xlu0 0
      %2503 = vperm.xlu0 %2502, %v2483
      %v2504 = vpop.permute.xlu0 %2503
      %2507 = vset.pattern.permute.xlu0 0
      %2508 = vperm.xlu0 %2507, %v2484
      %v2509 = vpop.permute.xlu0 %2508
      %v2511 = vmul.f32 %v2499, %v2504
      %v2512 = vmul.f32 %v2500, %v2509
      %v2513 = vadd.f32 %v2511, 0.0
      %v2514 = vadd.f32 %v2512, 0.0
      %v2515 = vlaneseq
      %v2516 = vshrl.u32 %v2515, 7
      %v2517 = vsub.s32 1, %v2516
      %v2518 = vrot.slane %v2482, %v2517
      %v2519 = vmul.f32 %v2480, %v2518
      %v2520 = vmul.f32 %v2481, %v2518
      %v2521 = vadd.f32 %v2513, %v2519
      %v2522 = vadd.f32 %v2514, %v2520
      %v2523 = vrot.slane %v2480, 1
      %v2524 = vrot.slane %v2481, 1
      %v2525 = vsel %vm1610, %v2523, %v2524
      %v2528 = vsel %vm1614, %v2524, 0.0
      %v2529 = vlaneseq
      %v2530 = vshrl.u32 %v2529, 7
      %v2531 = vsub.s32 2, %v2530
      %v2532 = vrot.slane %v2482, %v2531
      %v2533 = vmul.f32 %v2525, %v2532
      %v2534 = vmul.f32 %v2528, %v2532
      %2536 = vset.pattern.permute.xlu0 0
      %2537 = vperm.xlu0 %2536, %v2485
      %v2538 = vpop.permute.xlu0 %2537
      %2541 = vset.pattern.permute.xlu0 0
      %2542 = vperm.xlu0 %2541, %v2486
      %v2543 = vpop.permute.xlu0 %2542
      %v2545 = vmul.f32 %v2533, %v2538
      %v2546 = vmul.f32 %v2534, %v2543
      %v2547 = vadd.f32 %v2521, %v2545
      %v2548 = vadd.f32 %v2522, %v2546
      %v2549 = vld [vmem:[%s1169] sm:$0x3]
      %v2550 = vlaneseq
      %v2551 = vshrl.u32 %v2550, 7
      %v2552 = vsub.s32 0, %v2551
      %v2553 = vrot.slane %v2549, %v2552
      %v2554 = vmul.f32 %v2547, %v2553
      %v2555 = vmul.f32 %v2548, %v2553
      %v2556 = vlaneseq
      %v2557 = vshrl.u32 %v2556, 7
      %v2558 = vsub.s32 1, %v2557
      %v2559 = vrot.slane %v2549, %v2558
      %v2560 = vadd.f32 %v2554, %v2559
      %v2561 = vadd.f32 %v2555, %v2559
      %v2562 = vxor.u32 %v2560, 2147483648
      %v2563 = vxor.u32 %v2561, 2147483648
      %v2564 = vmul.f32 %v2562, 1.442695
      %v2565 = vpow.pop %v2564
      %v2566 = vmul.f32 %v2563, 1.442695
      %v2567 = vpow.pop %v2566
      %v2568 = vadd.f32 %v2565, 1.0
      %v2569 = vadd.f32 %v2567, 1.0
      %v2570 = vrcp.pop %v2568
      %v2571 = vmul.f32 1.0, %v2570
      %v2572 = vrcp.pop %v2569
      %v2573 = vmul.f32 1.0, %v2572
      %v2574 = vmul.f32 %v2560, %v2571
      %v2575 = vmul.f32 %v2561, %v2573
      %v2576 = vld [vmem:[%s1174] sm:$0xff]
      %v2577 = vld [vmem:[%s1174 + $0x8] sm:$0xff]
      %v2578 = vld [vmem:[%s1174 + $0x10] sm:$0xff]
      %v2579 = vld [vmem:[%s1174 + $0x18] sm:$0xff]
      %v2581 = vsel %vm1237, %v2574, 0
      %v2584 = vsel %vm1237, %v2575, 0
      %2586 = vmatprep.subr.mxu0 0.0
      %2587 = vmatpush1.msra.mxu0 %v2576
      %2588 = vmatprep.subr.mxu0 0.0
      %2589 = vmatpush1.msra.mxu0 %v2577
      %2590 = vmatprep.subr.mxu0 0.0
      %2591 = vmatpush1.msra.mxu0 %v2578
      %2592 = vmatprep.subr.mxu0 0.0
      %2593 = vmatpush1.msra.mxu0 %v2579
      %2594 = vmatprep.subr.mxu0 0.0
      %2595 = vmatpush1.msra.mxu0 0.0
      %2596 = vmatprep.subr.mxu0 0.0
      %2597 = vmatpush1.msra.mxu0 0.0
      %2598 = vmatprep.subr.mxu0 0.0
      %2599 = vmatpush1.msra.mxu0 0.0
      %2600 = vmatprep.subr.mxu0 0.0
      %2601 = vmatpush1.msra.mxu0 0.0
      %2602 = vmatprep.subr.mxu0 0.0
      %2603 = vmatpush1.msra.mxu0 0.0
      %2604 = vmatprep.subr.mxu0 0.0
      %2605 = vmatpush1.msra.mxu0 0.0
      %2606 = vmatprep.subr.mxu0 0.0
      %2607 = vmatpush1.msra.mxu0 0.0
      %2608 = vmatprep.subr.mxu0 0.0
      %2609 = vmatpush1.msra.mxu0 0.0
      %2610 = vmatprep.subr.mxu0 0.0
      %2611 = vmatpush1.msra.mxu0 0.0
      %2612 = vmatprep.subr.mxu0 0.0
      %2613 = vmatpush1.msra.mxu0 0.0
      %2614 = vmatprep.subr.mxu0 0.0
      %2615 = vmatpush1.msra.mxu0 0.0
      %2616 = vmatprep.subr.mxu0 0.0
      %2617 = vmatpush1.msra.mxu0 0.0
      %2618 = vmatprep.subr.mxu0 0.0
      %2619 = vmatpush1.msra.mxu0 0.0
      %2620 = vmatprep.subr.mxu0 0.0
      %2621 = vmatpush1.msra.mxu0 0.0
      %2622 = vmatprep.subr.mxu0 0.0
      %2623 = vmatpush1.msra.mxu0 0.0
      %2624 = vmatprep.subr.mxu0 0.0
      %2625 = vmatpush1.msra.mxu0 0.0
      %2626 = vmatprep.subr.mxu0 0.0
      %2627 = vmatpush1.msra.mxu0 0.0
      %2628 = vmatprep.subr.mxu0 0.0
      %2629 = vmatpush1.msra.mxu0 0.0
      %2630 = vmatprep.subr.mxu0 0.0
      %2631 = vmatpush1.msra.mxu0 0.0
      %2632 = vmatprep.subr.mxu0 0.0
      %2633 = vmatpush1.msra.mxu0 0.0
      %2634 = vmatprep.subr.mxu0 0.0
      %2635 = vmatpush1.msra.mxu0 0.0
      %2636 = vmatprep.subr.mxu0 0.0
      %2637 = vmatpush1.msra.mxu0 0.0
      %2638 = vmatprep.subr.mxu0 0.0
      %2639 = vmatpush1.msra.mxu0 0.0
      %2640 = vmatprep.subr.mxu0 0.0
      %2641 = vmatpush1.msra.mxu0 0.0
      %2642 = vmatprep.subr.mxu0 0.0
      %2643 = vmatpush1.msra.mxu0 0.0
      %2644 = vmatprep.subr.mxu0 0.0
      %2645 = vmatpush1.msra.mxu0 0.0
      %2646 = vmatprep.subr.mxu0 0.0
      %2647 = vmatpush1.msra.mxu0 0.0
      %2648 = vmatprep.subr.mxu0 0.0
      %2649 = vmatpush1.msra.mxu0 0.0
      %2650 = vmatprep.mubr.f32.mxu0 0.0
      %2651 = vmatmul.mubr.f32.gmra.mrb[0].mxu0 %v2581
      %v2652 = vpop.f32.mrb[0].mxu0
      %v2653 = vadd.f32 0.0, %v2652
      %v2654 = vpop.f32.mrb[0].mxu0
      %2655 = vmatprep.mubr.f32.mxu0 0.0
      %2656 = vmatmul.mubr.f32.gmra.mrb[0].mxu0 %v2584
      %v2657 = vpop.f32.mrb[0].mxu0
      %v2658 = vadd.f32 0.0, %v2657
      %v2659 = vpop.f32.mrb[0].mxu0
      %2660 = vdwg.mxu0
      %v2661 = vadd.f32 %v2327, %v2653
      %v2662 = vadd.f32 %v2328, %v2658
      %v2663 = vld [vmem:[%s1177] sm:$0x1]
      %v2665 = vlaneseq
      %v2666 = vshrl.u32 %v2665, 7
      %v2667 = vsub.s32 0, %v2666
      %v2668 = vrot.slane %v2663, %v2667
      %v2670 = vadd.f32 %v2661, %v2668
      %v2671 = vadd.f32 %v2662, %v2668
      %v2672 = vld [vmem:[%s1181] sm:$0x3]
      %v2673 = vld [vmem:[%s1186] sm:$0xff]
      %v2674 = vld [vmem:[%s1186 + $0x8] sm:$0xff]
      %v2675 = vld [vmem:[%s1186 + $0x10] sm:$0xff]
      %v2676 = vld [vmem:[%s1186 + $0x18] sm:$0xff]
      %v2677 = vld [vmem:[%s1189] sm:$0x1]
      %v2678 = vld [vmem:[%s1194] sm:$0xff]
      %v2679 = vld [vmem:[%s1194 + $0x8] sm:$0xff]
      %v2680 = vld [vmem:[%s1194 + $0x10] sm:$0xff]
      %v2681 = vld [vmem:[%s1194 + $0x18] sm:$0xff]
      %v2682 = vld [vmem:[%s1194 + $0x20] sm:$0xff]
      %v2683 = vld [vmem:[%s1194 + $0x28] sm:$0xff]
      %v2684 = vld [vmem:[%s1194 + $0x30] sm:$0xff]
      %v2685 = vld [vmem:[%s1194 + $0x38] sm:$0xff]
      %v2686 = vld [vmem:[%s1194 + $0x40] sm:$0xff]
      %v2687 = vld [vmem:[%s1194 + $0x48] sm:$0xff]
      %v2688 = vld [vmem:[%s1194 + $0x50] sm:$0xff]
      %v2689 = vld [vmem:[%s1194 + $0x58] sm:$0xff]
      %v2690 = vld [vmem:[%s1194 + $0x60] sm:$0xff]
      %v2691 = vld [vmem:[%s1194 + $0x68] sm:$0xff]
      %v2692 = vld [vmem:[%s1194 + $0x70] sm:$0xff]
      %v2693 = vld [vmem:[%s1194 + $0x78] sm:$0xff]
      %v2694 = vld [vmem:[%s1197] sm:$0x1]
      %v2695 = vsel %vm1237, %v2670, 0.0
      %2696 = vadd.xlane.f32.xlu0 %v2695
      %v2697 = vpop.xlane.xlu0 %2696
      %v2698 = vsel %vm1241, %v2671, 0.0
      %2699 = vadd.xlane.f32.xlu0 %v2698
      %v2700 = vpop.xlane.xlu0 %2699
      %v2701 = vmul.f32 %v2697, %v1245
      %v2702 = vmul.f32 %v2700, %v1245
      %v2703 = vsub.f32 %v2670, %v2701
      %v2704 = vsub.f32 %v2671, %v2702
      %v2705 = vmul.f32 %v2703, %v2703
      %v2706 = vmul.f32 %v2704, %v2704
      %v2707 = vsel %vm1237, %v2705, 0.0
      %2708 = vadd.xlane.f32.xlu0 %v2707
      %v2709 = vpop.xlane.xlu0 %2708
      %v2710 = vsel %vm1241, %v2706, 0.0
      %2711 = vadd.xlane.f32.xlu0 %v2710
      %v2712 = vpop.xlane.xlu0 %2711
      %v2713 = vmul.f32 %v2709, %v1245
      %v2714 = vmul.f32 %v2712, %v1245
      %v2715 = vadd.f32 %v2713, 1e-05
      %v2716 = vadd.f32 %v2714, 1e-05
      %v2717 = vrsqrt.pop %v2715
      %v2718 = vrsqrt.pop %v2716
      %v2719 = vmul.f32 %v2703, %v2717
      %v2720 = vmul.f32 %v2704, %v2718
      %v2721 = vlaneseq
      %v2722 = vshrl.u32 %v2721, 7
      %v2723 = vsub.s32 0, %v2722
      %v2724 = vrot.slane %v2672, %v2723
      %v2725 = vmul.f32 %v2719, %v2724
      %v2726 = vmul.f32 %v2720, %v2724
      %v2727 = vlaneseq
      %v2728 = vshrl.u32 %v2727, 7
      %v2729 = vsub.s32 1, %v2728
      %v2730 = vrot.slane %v2672, %v2729
      %v2731 = vadd.f32 %v2725, %v2730
      %v2732 = vadd.f32 %v2726, %v2730
      %v2734 = vlaneseq
      %v2735 = vshrl.u32 %v2734, 7
      %v2736 = vsub.s32 0, %v2735
      %v2737 = vrot.slane %v2677, %v2736
      %v2740 = vsel %vm1237, %v2731, 0
      %v2743 = vsel %vm1237, %v2732, 0
      %2745 = vmatprep.subr.mxu0 0.0
      %2746 = vmatpush1.msra.mxu0 %v2673
      %2747 = vmatprep.subr.mxu0 0.0
      %2748 = vmatpush1.msra.mxu0 %v2674
      %2749 = vmatprep.subr.mxu0 0.0
      %2750 = vmatpush1.msra.mxu0 %v2675
      %2751 = vmatprep.subr.mxu0 0.0
      %2752 = vmatpush1.msra.mxu0 %v2676
      %2753 = vmatprep.subr.mxu0 0.0
      %2754 = vmatpush1.msra.mxu0 0.0
      %2755 = vmatprep.subr.mxu0 0.0
      %2756 = vmatpush1.msra.mxu0 0.0
      %2757 = vmatprep.subr.mxu0 0.0
      %2758 = vmatpush1.msra.mxu0 0.0
      %2759 = vmatprep.subr.mxu0 0.0
      %2760 = vmatpush1.msra.mxu0 0.0
      %2761 = vmatprep.subr.mxu0 0.0
      %2762 = vmatpush1.msra.mxu0 0.0
      %2763 = vmatprep.subr.mxu0 0.0
      %2764 = vmatpush1.msra.mxu0 0.0
      %2765 = vmatprep.subr.mxu0 0.0
      %2766 = vmatpush1.msra.mxu0 0.0
      %2767 = vmatprep.subr.mxu0 0.0
      %2768 = vmatpush1.msra.mxu0 0.0
      %2769 = vmatprep.subr.mxu0 0.0
      %2770 = vmatpush1.msra.mxu0 0.0
      %2771 = vmatprep.subr.mxu0 0.0
      %2772 = vmatpush1.msra.mxu0 0.0
      %2773 = vmatprep.subr.mxu0 0.0
      %2774 = vmatpush1.msra.mxu0 0.0
      %2775 = vmatprep.subr.mxu0 0.0
      %2776 = vmatpush1.msra.mxu0 0.0
      %2777 = vmatprep.subr.mxu0 0.0
      %2778 = vmatpush1.msra.mxu0 0.0
      %2779 = vmatprep.subr.mxu0 0.0
      %2780 = vmatpush1.msra.mxu0 0.0
      %2781 = vmatprep.subr.mxu0 0.0
      %2782 = vmatpush1.msra.mxu0 0.0
      %2783 = vmatprep.subr.mxu0 0.0
      %2784 = vmatpush1.msra.mxu0 0.0
      %2785 = vmatprep.subr.mxu0 0.0
      %2786 = vmatpush1.msra.mxu0 0.0
      %2787 = vmatprep.subr.mxu0 0.0
      %2788 = vmatpush1.msra.mxu0 0.0
      %2789 = vmatprep.subr.mxu0 0.0
      %2790 = vmatpush1.msra.mxu0 0.0
      %2791 = vmatprep.subr.mxu0 0.0
      %2792 = vmatpush1.msra.mxu0 0.0
      %2793 = vmatprep.subr.mxu0 0.0
      %2794 = vmatpush1.msra.mxu0 0.0
      %2795 = vmatprep.subr.mxu0 0.0
      %2796 = vmatpush1.msra.mxu0 0.0
      %2797 = vmatprep.subr.mxu0 0.0
      %2798 = vmatpush1.msra.mxu0 0.0
      %2799 = vmatprep.subr.mxu0 0.0
      %2800 = vmatpush1.msra.mxu0 0.0
      %2801 = vmatprep.subr.mxu0 0.0
      %2802 = vmatpush1.msra.mxu0 0.0
      %2803 = vmatprep.subr.mxu0 0.0
      %2804 = vmatpush1.msra.mxu0 0.0
      %2805 = vmatprep.subr.mxu0 0.0
      %2806 = vmatpush1.msra.mxu0 0.0
      %2807 = vmatprep.subr.mxu0 0.0
      %2808 = vmatpush1.msra.mxu0 0.0
      %2809 = vmatprep.mubr.f32.mxu0 0.0
      %2810 = vmatmul.mubr.f32.gmra.mrb[0].mxu0 %v2740
      %v2811 = vpop.f32.mrb[0].mxu0
      %v2812 = vadd.f32 %v2737, %v2811
      %v2813 = vpop.f32.mrb[0].mxu0
      %2814 = vmatprep.mubr.f32.mxu0 0.0
      %2815 = vmatmul.mubr.f32.gmra.mrb[0].mxu0 %v2743
      %v2816 = vpop.f32.mrb[0].mxu0
      %v2817 = vadd.f32 %v2737, %v2816
      %v2818 = vpop.f32.mrb[0].mxu0
      %2819 = vdwg.mxu0
      %v2820 = vxor.u32 %v2812, 2147483648
      %v2821 = vxor.u32 %v2817, 2147483648
      %v2822 = vmul.f32 %v2820, 1.442695
      %v2823 = vpow.pop %v2822
      %v2824 = vmul.f32 %v2821, 1.442695
      %v2825 = vpow.pop %v2824
      %v2826 = vadd.f32 %v2823, 1.0
      %v2827 = vadd.f32 %v2825, 1.0
      %v2828 = vrcp.pop %v2826
      %v2829 = vmul.f32 1.0, %v2828
      %v2830 = vrcp.pop %v2827
      %v2831 = vmul.f32 1.0, %v2830
      %v2832 = vmul.f32 %v2812, %v2829
      %v2833 = vmul.f32 %v2817, %v2831
      %v2835 = vlaneseq
      %v2836 = vshrl.u32 %v2835, 7
      %v2837 = vsub.s32 0, %v2836
      %v2838 = vrot.slane %v2694, %v2837
      %2840 = vmatprep.subr.mxu0 0.0
      %2841 = vmatpush1.msra.mxu0 %v2678
      %2842 = vmatprep.subr.mxu0 0.0
      %2843 = vmatpush1.msra.mxu0 %v2679
      %2844 = vmatprep.subr.mxu0 0.0
      %2845 = vmatpush1.msra.mxu0 %v2680
      %2846 = vmatprep.subr.mxu0 0.0
      %2847 = vmatpush1.msra.mxu0 %v2681
      %2848 = vmatprep.subr.mxu0 0.0
      %2849 = vmatpush1.msra.mxu0 %v2682
      %2850 = vmatprep.subr.mxu0 0.0
      %2851 = vmatpush1.msra.mxu0 %v2683
      %2852 = vmatprep.subr.mxu0 0.0
      %2853 = vmatpush1.msra.mxu0 %v2684
      %2854 = vmatprep.subr.mxu0 0.0
      %2855 = vmatpush1.msra.mxu0 %v2685
      %2856 = vmatprep.subr.mxu0 0.0
      %2857 = vmatpush1.msra.mxu0 %v2686
      %2858 = vmatprep.subr.mxu0 0.0
      %2859 = vmatpush1.msra.mxu0 %v2687
      %2860 = vmatprep.subr.mxu0 0.0
      %2861 = vmatpush1.msra.mxu0 %v2688
      %2862 = vmatprep.subr.mxu0 0.0
      %2863 = vmatpush1.msra.mxu0 %v2689
      %2864 = vmatprep.subr.mxu0 0.0
      %2865 = vmatpush1.msra.mxu0 %v2690
      %2866 = vmatprep.subr.mxu0 0.0
      %2867 = vmatpush1.msra.mxu0 %v2691
      %2868 = vmatprep.subr.mxu0 0.0
      %2869 = vmatpush1.msra.mxu0 %v2692
      %2870 = vmatprep.subr.mxu0 0.0
      %2871 = vmatpush1.msra.mxu0 %v2693
      %2872 = vmatprep.subr.mxu0 0.0
      %2873 = vmatpush1.msra.mxu0 0.0
      %2874 = vmatprep.subr.mxu0 0.0
      %2875 = vmatpush1.msra.mxu0 0.0
      %2876 = vmatprep.subr.mxu0 0.0
      %2877 = vmatpush1.msra.mxu0 0.0
      %2878 = vmatprep.subr.mxu0 0.0
      %2879 = vmatpush1.msra.mxu0 0.0
      %2880 = vmatprep.subr.mxu0 0.0
      %2881 = vmatpush1.msra.mxu0 0.0
      %2882 = vmatprep.subr.mxu0 0.0
      %2883 = vmatpush1.msra.mxu0 0.0
      %2884 = vmatprep.subr.mxu0 0.0
      %2885 = vmatpush1.msra.mxu0 0.0
      %2886 = vmatprep.subr.mxu0 0.0
      %2887 = vmatpush1.msra.mxu0 0.0
      %2888 = vmatprep.subr.mxu0 0.0
      %2889 = vmatpush1.msra.mxu0 0.0
      %2890 = vmatprep.subr.mxu0 0.0
      %2891 = vmatpush1.msra.mxu0 0.0
      %2892 = vmatprep.subr.mxu0 0.0
      %2893 = vmatpush1.msra.mxu0 0.0
      %2894 = vmatprep.subr.mxu0 0.0
      %2895 = vmatpush1.msra.mxu0 0.0
      %2896 = vmatprep.subr.mxu0 0.0
      %2897 = vmatpush1.msra.mxu0 0.0
      %2898 = vmatprep.subr.mxu0 0.0
      %2899 = vmatpush1.msra.mxu0 0.0
      %2900 = vmatprep.subr.mxu0 0.0
      %2901 = vmatpush1.msra.mxu0 0.0
      %2902 = vmatprep.subr.mxu0 0.0
      %2903 = vmatpush1.msra.mxu0 0.0
      %2904 = vmatprep.mubr.f32.mxu0 0.0
      %2905 = vmatmul.mubr.f32.gmra.mrb[0].mxu0 %v2832
      %v2906 = vpop.f32.mrb[0].mxu0
      %v2907 = vadd.f32 %v2838, %v2906
      %v2908 = vpop.f32.mrb[0].mxu0
      %2909 = vmatprep.mubr.f32.mxu0 0.0
      %2910 = vmatmul.mubr.f32.gmra.mrb[0].mxu0 %v2833
      %v2911 = vpop.f32.mrb[0].mxu0
      %v2912 = vadd.f32 %v2838, %v2911
      %v2913 = vpop.f32.mrb[0].mxu0
      %2914 = vdwg.mxu0
      %v2915 = vmul.f32 %v2907, 0.5
      %v2916 = vmul.f32 %v2912, 0.5
      %v2917 = vadd.f32 %v2670, %v2915
      %v2918 = vadd.f32 %v2671, %v2916
      %v2919 = vld [vmem:[%s1201] sm:$0x3]
      %v2920 = vsel %vm1237, %v2917, 0.0
      %2921 = vadd.xlane.f32.xlu0 %v2920
      %v2922 = vpop.xlane.xlu0 %2921
      %v2923 = vsel %vm1241, %v2918, 0.0
      %2924 = vadd.xlane.f32.xlu0 %v2923
      %v2925 = vpop.xlane.xlu0 %2924
      %v2926 = vmul.f32 %v2922, %v1245
      %v2927 = vmul.f32 %v2925, %v1245
      %v2928 = vsub.f32 %v2917, %v2926
      %v2929 = vsub.f32 %v2918, %v2927
      %v2930 = vmul.f32 %v2928, %v2928
      %v2931 = vmul.f32 %v2929, %v2929
      %v2932 = vsel %vm1237, %v2930, 0.0
      %2933 = vadd.xlane.f32.xlu0 %v2932
      %v2934 = vpop.xlane.xlu0 %2933
      %v2935 = vsel %vm1241, %v2931, 0.0
      %2936 = vadd.xlane.f32.xlu0 %v2935
      %v2937 = vpop.xlane.xlu0 %2936
      %v2938 = vmul.f32 %v2934, %v1245
      %v2939 = vmul.f32 %v2937, %v1245
      %v2940 = vadd.f32 %v2938, 1e-05
      %v2941 = vadd.f32 %v2939, 1e-05
      %v2942 = vrsqrt.pop %v2940
      %v2943 = vrsqrt.pop %v2941
      %v2944 = vmul.f32 %v2928, %v2942
      %v2945 = vmul.f32 %v2929, %v2943
      %v2946 = vlaneseq
      %v2947 = vshrl.u32 %v2946, 7
      %v2948 = vsub.s32 0, %v2947
      %v2949 = vrot.slane %v2919, %v2948
      %v2950 = vmul.f32 %v2944, %v2949
      %v2951 = vmul.f32 %v2945, %v2949
      %v2952 = vlaneseq
      %v2953 = vshrl.u32 %v2952, 7
      %v2954 = vsub.s32 1, %v2953
      %v2955 = vrot.slane %v2919, %v2954
      %v2956 = vadd.f32 %v2950, %v2955
      %v2957 = vadd.f32 %v2951, %v2955
      %2958 = vst.msk [vmem:[#allocation2] sm:$0xff] %vm1237, %v2956
      %2959 = vst.msk [vmem:[#allocation2 + $0x8] sm:$0x3f] %vm1241, %v2957
      %p2960 = scmp.eq.s32.totalorder %s39, 1
      // Predicated region
      $region137: #{conformer_model.7} parent=131 // pred_check
        %p2961 = pneg %p2960
      $region138: #{conformer_model.7} parent=131 // pred_check_branch
        %2963 = sbr.rel (%p2961) target = $region140
      $region139: #{conformer_model.7} parent=131 // pred_region
        %2964 = vst.msk [vmem:[%s28] sm:$0xff] %vm1237, %v2956
        %2965 = vst.msk [vmem:[%s28 + $0x8] sm:$0x3f] %vm1241, %v2957
      $region140: #{conformer_model.7} parent=131 // pred_fallthru
        _
      // Predicated region
      $region141: #{conformer_model.7} parent=131 // pred_check
        %p2966 = pneg %p755
      $region142: #{conformer_model.7} parent=131 // pred_check_branch
        %2968 = sbr.rel (%p2966) target = $region144
      $region143: #{conformer_model.7} parent=131 // pred_region
        _
      $region144: #{conformer_model.7} parent=131 // pred_fallthru
        _
      // Predicated region
      $region145: #{conformer_model.7} parent=131 // pred_check
        %p2969 = pneg %p755
      $region146: #{conformer_model.7} parent=131 // pred_check_branch
        %2971 = sbr.rel (%p2969) target = $region148
      $region147: #{conformer_model.7} parent=131 // pred_region
        _
      $region148: #{conformer_model.7} parent=131 // pred_fallthru
        _
    $region132: #{conformer_model.7} parent=5 // pred_fallthru
      _
    %p2972 = scmp.le.s32.totalorder 2, %s34
    // Predicated region
    $region149: #{conformer_model.7} parent=5 // pred_check
      %p2973 = pneg %p2972
    $region150: #{conformer_model.7} parent=5 // pred_check_branch
      %2975 = sbr.rel (%p2973) target = $region152
    $region151: #{conformer_model.7} parent=5 // pred_region
      %s2976 = ssub.s32 %s34, 2
    $region152: #{conformer_model.7} parent=5 // pred_fallthru
      _
  $region6: #{conformer_model.7} parent=0 // loop_footer
    %s38 = sadd.s32 1, %s34
  $region7: #{conformer_model.7} parent=0 // loop_footer_branch
    %33 = sbr.rel target = $region3
  $region8: #{conformer_model.7} parent=0 // loop_exit
    _

</llo_original>
